<compile_context>
chip_gen: v7x
topology: tpu7x:2x2x1
jax: 0.10.0
libtpu: 0.0.40
codegen_flags: <defaults>
</compile_context>

<pallas_src>
import functools

import jax
import jax.numpy as jnp
from jax.experimental import pallas as pl
from jax.experimental.pallas import tpu as pltpu


def _soft_sphere_kernel(
    pos_i_ref,   # [TM, 3]  row-block positions
    pos_jT_ref,  # [3, TN]  column-block positions (transposed)
    rhs_ref,     # [TN, 4]  column-block [pos_j | 1]  (MXU reduction operand)
    forces_ref,  # [TM, 3]  forces for this row block (written at last column step)
    rowe_ref,    # [TM, 1]  per-row pair-energy sums (written at last column step)
    acc_g,       # [TM, 4]  scratch: running sum_j [g*pos_j | g]
    acc_e,       # [TM, 1]  scratch: running sum_j e_pair
    *, TM, TN, cut2, alpha, alpha_is_int,
    inv_sigma, eps_over_alpha, neg_eps_over_sigma,
):
    i = pl.program_id(0)
    j = pl.program_id(1)

    @pl.when(j == 0)
    def _init():
        acc_g[...] = jnp.zeros_like(acc_g)
        acc_e[...] = jnp.zeros_like(acc_e)

    pos_i = pos_i_ref[...]            # [TM, 3]
    pos_jT = pos_jT_ref[...]          # [3, TN]

    # Pairwise displacement components (explicit differences; numerically safe).
    dx = pos_i[:, 0:1] - pos_jT[0:1, :]   # [TM, TN]
    dy = pos_i[:, 1:2] - pos_jT[1:2, :]
    dz = pos_i[:, 2:3] - pos_jT[2:3, :]
    r2 = dx * dx + dy * dy + dz * dz

    # Diagonal exclusion only: padded atoms sit far away (> cutoff) so no
    # (row < n_atoms) / (col < n_atoms) tests are needed.
    ri = jax.lax.broadcasted_iota(jnp.int32, (TM, TN), 0)
    ci = jax.lax.broadcasted_iota(jnp.int32, (TM, TN), 1)
    offdiag = (ri - ci) != (j * TN - i * TM)

    mask = offdiag & (r2 < cut2)

    r2_safe = jnp.where(mask, r2, 1.0)
    inv_d = jax.lax.rsqrt(r2_safe)        # EUP (only transcendental on the fast path)
    dist = r2_safe * inv_d                # == sqrt(r2) on masked pairs

    if alpha_is_int:
        # alpha is a small integer >= 2 (module default 2.0): repeated multiply,
        # masked base -> 0 makes e_pair and g vanish without extra selects.
        base = jnp.where(mask, 1.0 - dist * inv_sigma, 0.0)
        pow_am1 = base
        for _ in range(int(alpha) - 2):
            pow_am1 = pow_am1 * base      # base ** (alpha - 1)
        pow_a = pow_am1 * base            # base ** alpha
        e_pair = eps_over_alpha * pow_a
        g = neg_eps_over_sigma * pow_am1 * inv_d
    else:
        # General alpha: guarded log/exp (safe_mask-style).
        base = jnp.where(mask, 1.0 - dist * inv_sigma, 1.0)
        log_base = jnp.log(base)
        pow_am1 = jnp.exp((alpha - 1.0) * log_base)
        pow_a = pow_am1 * base
        e_pair = jnp.where(mask, eps_over_alpha * pow_a, 0.0)
        g = jnp.where(mask, neg_eps_over_sigma * pow_am1 * inv_d, 0.0)

    # j-reduction on the MXU: [TM, TN] @ [TN, 4] -> [TM, 4]
    acc_g[...] += jnp.dot(g, rhs_ref[...], preferred_element_type=jnp.float32)
    # Energy row sums on the (idle) XLU.
    acc_e[...] += jnp.sum(e_pair, axis=-1, keepdims=True)

    @pl.when(j == pl.num_programs(1) - 1)
    def _finalize():
        sum_gp = acc_g[:, 0:3]            # sum_j g * pos_j
        sum_g = acc_g[:, 3:4]             # sum_j g
        forces_ref[...] = -2.0 * (pos_i * sum_g - sum_gp)
        rowe_ref[...] = acc_e[...]


def soft_sphere_forward(positions, *, sigma=1.0, epsilon=1.0, alpha=2.0, cutoff=None):
    """JAX/Pallas equivalent of UnbatchedSoftSphereModel.forward
    (cell=None / no PBC, compute_forces=True)."""
    positions = positions.astype(jnp.float32)
    n_atoms = positions.shape[0]
    sigma = float(sigma)
    epsilon = float(epsilon)
    alpha = float(alpha)
    cutoff = float(cutoff) if cutoff is not None else sigma   # module: cutoff or sigma
    cut = min(cutoff, sigma)
    cut2 = cut * cut
    alpha_is_int = (alpha == round(alpha)) and alpha >= 2.0

    TM = 128
    TN = 1024                       # column tiles are always full size
    Np = ((n_atoms + TN - 1) // TN) * TN
    n_pad = Np - n_atoms

    # Pad atoms at distinct, far-apart coordinates (> cut from everything real and
    # from each other) so they never pass the (r2 < cut2) mask and contribute 0.
    pad_x = jnp.max(positions[:, 0]) + 2.0 * cut * (
        1.0 + jnp.arange(n_pad, dtype=jnp.float32))
    pad_pos = jnp.stack(
        [pad_x, jnp.zeros((n_pad,), jnp.float32), jnp.zeros((n_pad,), jnp.float32)],
        axis=1)
    pos_pad = jnp.concatenate([positions, pad_pos], axis=0)      # [Np, 3]
    pos_T = pos_pad.T                                            # [3, Np]
    rhs4 = jnp.concatenate([pos_pad, jnp.ones((Np, 1), jnp.float32)], axis=1)  # [Np, 4]

    grid = (Np // TM, Np // TN)     # rows "parallel" (>= 8 blocks), cols "arbitrary"

    kernel = functools.partial(
        _soft_sphere_kernel,
        TM=TM, TN=TN, cut2=cut2, alpha=alpha, alpha_is_int=alpha_is_int,
        inv_sigma=1.0 / sigma,
        eps_over_alpha=epsilon / alpha,
        neg_eps_over_sigma=-epsilon / sigma,
    )

    n_pairs = Np * Np
    cost = pl.CostEstimate(
        flops=int(25 * n_pairs + 8 * n_pairs),   # elementwise + [TM,TN]@[TN,4] MXU work
        transcendentals=int((1 if alpha_is_int else 3) * n_pairs),
        bytes_accessed=int(28 * Np * (grid[0] + 1) + 16 * Np),
    )

    forces, row_e = pl.pallas_call(
        kernel,
        out_shape=(
            jax.ShapeDtypeStruct((Np, 3), jnp.float32),   # forces
            jax.ShapeDtypeStruct((Np, 1), jnp.float32),   # per-row pair-energy sums
        ),
        grid=grid,
        in_specs=[
            pl.BlockSpec((TM, 3), lambda i, j: (i, 0)),   # row-block positions
            pl.BlockSpec((3, TN), lambda i, j: (0, j)),   # column-block positions^T
            pl.BlockSpec((TN, 4), lambda i, j: (j, 0)),   # column-block [pos_j | 1]
        ],
        out_specs=(
            pl.BlockSpec((TM, 3), lambda i, j: (i, 0)),
            pl.BlockSpec((TM, 1), lambda i, j: (i, 0)),
        ),
        scratch_shapes=[
            pltpu.VMEM((TM, 4), jnp.float32),
            pltpu.VMEM((TM, 1), jnp.float32),
        ],
        compiler_params=pltpu.CompilerParams(
            dimension_semantics=("parallel", "arbitrary"),
            vmem_limit_bytes=32 * 1024 * 1024,
        ),
        cost_estimate=cost,
    )(pos_pad, pos_T, rhs4)

    energy = 0.5 * jnp.sum(row_e)           # padded rows contribute exactly 0
    return {"energy": energy, "forces": forces[:n_atoms]}


def _reference_forward(positions, sigma, epsilon, alpha, cutoff):
    """Plain-JAX reference of the same forward semantics (for verification)."""
    D = positions[:, None, :] - positions[None, :, :]
    dist = jnp.sqrt(jnp.sum(D * D, axis=-1))
    eye = jnp.eye(positions.shape[0], dtype=bool)
    mask = (~eye) & (dist < cutoff) & (dist < sigma)
    d_s = jnp.where(mask, dist, 1.0)
    base = jnp.where(mask, 1.0 - dist / sigma, 1.0)
    e_pair = jnp.where(mask, (epsilon / alpha) * base ** alpha, 0.0)
    energy = 0.5 * jnp.sum(e_pair)
    g = jnp.where(mask, (-epsilon / sigma) * base ** (alpha - 1.0) / d_s, 0.0)
    forces = -2.0 * jnp.sum(g[:, :, None] * D, axis=1)
    return energy, forces


if __name__ == "__main__":
    key = jax.random.PRNGKey(0)
    n_atoms = 200
    positions = jax.random.uniform(key, (n_atoms, 3), jnp.float32, 0.0, 6.0)

    configs = [
        dict(sigma=1.0, epsilon=1.0, alpha=2.0, cutoff=None),   # module defaults
        dict(sigma=1.2, epsilon=0.8, alpha=3.0, cutoff=1.5),    # non-default params
        dict(sigma=1.1, epsilon=0.5, alpha=2.5, cutoff=None),   # non-integer alpha path
    ]
    for cfg in configs:
        out = soft_sphere_forward(positions, **cfg)
        energy = jax.block_until_ready(out["energy"])
        forces = jax.block_until_ready(out["forces"])

        cut = cfg["cutoff"] if cfg["cutoff"] is not None else cfg["sigma"]
        ref_energy, ref_forces = _reference_forward(
            positions, cfg["sigma"], cfg["epsilon"], cfg["alpha"], cut)

        ok = bool(jnp.allclose(energy, ref_energy, rtol=1e-4, atol=1e-5)) and bool(
            jnp.allclose(forces, ref_forces, rtol=1e-4, atol=1e-4))
        if not ok:
            raise AssertionError(f"Pallas kernel does not match reference for {cfg}")

    print("KERNEL_OK")
</pallas_src>

<mosaic_0001>
module attributes {stable_mosaic.version = 11 : i64} {
  func.func @_soft_sphere_kernel(%arg0: i32, %arg1: i32, %arg2: memref<128x3xf32, #tpu.memory_space<vmem>>, %arg3: memref<3x1024xf32, #tpu.memory_space<vmem>>, %arg4: memref<1024x4xf32, #tpu.memory_space<vmem>>, %arg5: memref<128x3xf32, #tpu.memory_space<vmem>>, %arg6: memref<128x1xf32, #tpu.memory_space<vmem>>, %arg7: memref<128x4xf32, #tpu.memory_space<vmem>>, %arg8: memref<128x1xf32, #tpu.memory_space<vmem>>) attributes {dimension_semantics = [#tpu.dimension_semantics<parallel>, #tpu.dimension_semantics<arbitrary>], iteration_bounds = array<i64: 8, 1>, scalar_prefetch = 0 : i64, scratch_operands = 2 : i64, tpu.core_type = #tpu.core_type<tc>, window_params = [{transform_indices = @transform_0, window_bounds = array<i64: 128, 3>}, {transform_indices = @transform_1, window_bounds = array<i64: 3, 1024>}, {transform_indices = @transform_2, window_bounds = array<i64: 1024, 4>}, {transform_indices = @transform_3, window_bounds = array<i64: 128, 3>}, {transform_indices = @transform_4, window_bounds = array<i64: 128, 1>}]} {
    %c0_i32 = arith.constant 0 : i32
    %0 = arith.cmpi eq, %arg1, %c0_i32 : i32
    %1 = arith.extui %0 : i1 to i32
    %c0_i32_0 = arith.constant 0 : i32
    %2 = arith.cmpi ne, %1, %c0_i32_0 : i32
    scf.if %2 {
      %cst_24 = arith.constant 0.000000e+00 : f32
      %65 = vector.broadcast %cst_24 : f32 to vector<128x4xf32>
      %c0_25 = arith.constant 0 : index
      %c0_26 = arith.constant 0 : index
      %66 = vector.load %arg7[%c0_25, %c0_26] : memref<128x4xf32, #tpu.memory_space<vmem>>, vector<128x4xf32>
      tpu.vector_store %arg7[%c0_25, %c0_26], %65 {strides = array<i32>} : memref<128x4xf32, #tpu.memory_space<vmem>>, vector<128x4xf32>,
      %cst_27 = arith.constant 0.000000e+00 : f32
      %67 = vector.broadcast %cst_27 : f32 to vector<128x1xf32>
      %c0_28 = arith.constant 0 : index
      %c0_29 = arith.constant 0 : index
      %68 = vector.load %arg8[%c0_28, %c0_29] : memref<128x1xf32, #tpu.memory_space<vmem>>, vector<128x1xf32>
      tpu.vector_store %arg8[%c0_28, %c0_29], %67 {strides = array<i32>} : memref<128x1xf32, #tpu.memory_space<vmem>>, vector<128x1xf32>,
    } else {
    }
    %c0 = arith.constant 0 : index
    %c0_1 = arith.constant 0 : index
    %3 = vector.load %arg2[%c0, %c0_1] : memref<128x3xf32, #tpu.memory_space<vmem>>, vector<128x3xf32>
    %c0_2 = arith.constant 0 : index
    %c0_3 = arith.constant 0 : index
    %4 = vector.load %arg3[%c0_2, %c0_3] : memref<3x1024xf32, #tpu.memory_space<vmem>>, vector<3x1024xf32>
    %5 = vector.extract_strided_slice %3 {offsets = [0, 0], sizes = [128, 1], strides = [1, 1]} : vector<128x3xf32> to vector<128x1xf32>
    %6 = vector.extract_strided_slice %4 {offsets = [0, 0], sizes = [1, 1024], strides = [1, 1]} : vector<3x1024xf32> to vector<1x1024xf32>
    %7 = vector.broadcast %5 : vector<128x1xf32> to vector<128x1024xf32>
    %8 = vector.broadcast %6 : vector<1x1024xf32> to vector<128x1024xf32>
    %9 = arith.subf %7, %8 : vector<128x1024xf32>
    %10 = vector.extract_strided_slice %3 {offsets = [0, 1], sizes = [128, 1], strides = [1, 1]} : vector<128x3xf32> to vector<128x1xf32>
    %11 = vector.extract_strided_slice %4 {offsets = [1, 0], sizes = [1, 1024], strides = [1, 1]} : vector<3x1024xf32> to vector<1x1024xf32>
    %12 = vector.broadcast %10 : vector<128x1xf32> to vector<128x1024xf32>
    %13 = vector.broadcast %11 : vector<1x1024xf32> to vector<128x1024xf32>
    %14 = arith.subf %12, %13 : vector<128x1024xf32>
    %15 = vector.extract_strided_slice %3 {offsets = [0, 2], sizes = [128, 1], strides = [1, 1]} : vector<128x3xf32> to vector<128x1xf32>
    %16 = vector.extract_strided_slice %4 {offsets = [2, 0], sizes = [1, 1024], strides = [1, 1]} : vector<3x1024xf32> to vector<1x1024xf32>
    %17 = vector.broadcast %15 : vector<128x1xf32> to vector<128x1024xf32>
    %18 = vector.broadcast %16 : vector<1x1024xf32> to vector<128x1024xf32>
    %19 = arith.subf %17, %18 : vector<128x1024xf32>
    %20 = arith.mulf %9, %9 : vector<128x1024xf32>
    %21 = arith.mulf %14, %14 : vector<128x1024xf32>
    %22 = arith.addf %20, %21 : vector<128x1024xf32>
    %23 = arith.mulf %19, %19 : vector<128x1024xf32>
    %24 = arith.addf %22, %23 : vector<128x1024xf32>
    %25 = tpu.iota {dimensions = array<i32: 0>} : vector<128x1024xi32>
    %26 = tpu.iota {dimensions = array<i32: 1>} : vector<128x1024xi32>
    %27 = arith.subi %25, %26 : vector<128x1024xi32>
    %c1024_i32 = arith.constant 1024 : i32
    %28 = arith.muli %arg1, %c1024_i32 : i32
    %c128_i32 = arith.constant 128 : i32
    %29 = arith.muli %arg0, %c128_i32 : i32
    %30 = arith.subi %28, %29 : i32
    %31 = vector.broadcast %30 : i32 to vector<128x1024xi32>
    %32 = arith.cmpi ne, %27, %31 : vector<128x1024xi32>
    %cst = arith.constant 1.000000e+00 : f32
    %33 = vector.broadcast %cst : f32 to vector<128x1024xf32>
    %34 = arith.cmpf olt, %24, %33 : vector<128x1024xf32>
    %35 = arith.andi %32, %34 : vector<128x1024xi1>
    %cst_4 = arith.constant 1.000000e+00 : f32
    %36 = vector.broadcast %cst_4 : f32 to vector<128x1024xf32>
    %37 = arith.select %35, %24, %36 : vector<128x1024xi1>, vector<128x1024xf32>
    %38 = math.rsqrt %37 : vector<128x1024xf32>
    %39 = arith.mulf %37, %38 : vector<128x1024xf32>
    %cst_5 = arith.constant 1.000000e+00 : f32
    %40 = vector.broadcast %cst_5 : f32 to vector<128x1024xf32>
    %41 = arith.mulf %39, %40 : vector<128x1024xf32>
    %cst_6 = arith.constant 1.000000e+00 : f32
    %42 = vector.broadcast %cst_6 : f32 to vector<128x1024xf32>
    %43 = arith.subf %42, %41 : vector<128x1024xf32>
    %cst_7 = arith.constant 0.000000e+00 : f32
    %44 = vector.broadcast %cst_7 : f32 to vector<128x1024xf32>
    %45 = arith.select %35, %43, %44 : vector<128x1024xi1>, vector<128x1024xf32>
    %46 = arith.mulf %45, %45 : vector<128x1024xf32>
    %cst_8 = arith.constant 5.000000e-01 : f32
    %47 = vector.broadcast %cst_8 : f32 to vector<128x1024xf32>
    %48 = arith.mulf %47, %46 : vector<128x1024xf32>
    %cst_9 = arith.constant -1.000000e+00 : f32
    %49 = vector.broadcast %cst_9 : f32 to vector<128x1024xf32>
    %50 = arith.mulf %49, %45 : vector<128x1024xf32>
    %51 = arith.mulf %50, %38 : vector<128x1024xf32>
    %c0_10 = arith.constant 0 : index
    %c0_11 = arith.constant 0 : index
    %52 = vector.load %arg7[%c0_10, %c0_11] : memref<128x4xf32, #tpu.memory_space<vmem>>, vector<128x4xf32>
    %c0_12 = arith.constant 0 : index
    %c0_13 = arith.constant 0 : index
    %53 = vector.load %arg4[%c0_12, %c0_13] : memref<1024x4xf32, #tpu.memory_space<vmem>>, vector<1024x4xf32>
    %cst_14 = arith.constant dense<0.000000e+00> : vector<128x4xf32>
    %54 = tpu.matmul %51, %53, %cst_14 {dimension_numbers = #tpu.dot_dimension_numbers<[1], [0], [0], [1], [0, 0, 1, 1], [], []>} : vector<128x1024xf32>, vector<1024x4xf32>, vector<128x4xf32> -> vector<128x4xf32>
    %55 = arith.addf %52, %54 : vector<128x4xf32>
    %c0_15 = arith.constant 0 : index
    %c0_16 = arith.constant 0 : index
    %56 = vector.load %arg7[%c0_15, %c0_16] : memref<128x4xf32, #tpu.memory_space<vmem>>, vector<128x4xf32>
    tpu.vector_store %arg7[%c0_15, %c0_16], %55 {strides = array<i32>} : memref<128x4xf32, #tpu.memory_space<vmem>>, vector<128x4xf32>,
    %c0_17 = arith.constant 0 : index
    %c0_18 = arith.constant 0 : index
    %57 = vector.load %arg8[%c0_17, %c0_18] : memref<128x1xf32, #tpu.memory_space<vmem>>, vector<128x1xf32>
    %cst_19 = arith.constant dense<0.000000e+00> : vector<128xf32>
    %58 = vector.multi_reduction <add>, %48, %cst_19 [1] : vector<128x1024xf32> to vector<128xf32>
    %59 = vector.shape_cast %58 : vector<128xf32> to vector<128x1xf32>
    %60 = arith.addf %57, %59 : vector<128x1xf32>
    %c0_20 = arith.constant 0 : index
    %c0_21 = arith.constant 0 : index
    %61 = vector.load %arg8[%c0_20, %c0_21] : memref<128x1xf32, #tpu.memory_space<vmem>>, vector<128x1xf32>
    tpu.vector_store %arg8[%c0_20, %c0_21], %60 {strides = array<i32>} : memref<128x1xf32, #tpu.memory_space<vmem>>, vector<128x1xf32>,
    %c0_i32_22 = arith.constant 0 : i32
    %62 = arith.cmpi eq, %arg1, %c0_i32_22 : i32
    %63 = arith.extui %62 : i1 to i32
    %c0_i32_23 = arith.constant 0 : i32
    %64 = arith.cmpi ne, %63, %c0_i32_23 : i32
    scf.if %64 {
      %c0_24 = arith.constant 0 : index
      %c0_25 = arith.constant 0 : index
      %65 = vector.load %arg7[%c0_24, %c0_25] : memref<128x4xf32, #tpu.memory_space<vmem>>, vector<128x3xf32>
      %c0_26 = arith.constant 0 : index
      %c3 = arith.constant 3 : index
      %66 = vector.load %arg7[%c0_26, %c3] : memref<128x4xf32, #tpu.memory_space<vmem>>, vector<128x1xf32>
      %67 = vector.broadcast %66 : vector<128x1xf32> to vector<128x3xf32>
      %68 = arith.mulf %3, %67 : vector<128x3xf32>
      %69 = arith.subf %68, %65 : vector<128x3xf32>
      %cst_27 = arith.constant -2.000000e+00 : f32
      %70 = vector.broadcast %cst_27 : f32 to vector<128x3xf32>
      %71 = arith.mulf %70, %69 : vector<128x3xf32>
      %c0_28 = arith.constant 0 : index
      %c0_29 = arith.constant 0 : index
      %72 = vector.load %arg5[%c0_28, %c0_29] : memref<128x3xf32, #tpu.memory_space<vmem>>, vector<128x3xf32>
      tpu.vector_store %arg5[%c0_28, %c0_29], %71 {strides = array<i32>} : memref<128x3xf32, #tpu.memory_space<vmem>>, vector<128x3xf32>,
      %c0_30 = arith.constant 0 : index
      %c0_31 = arith.constant 0 : index
      %73 = vector.load %arg8[%c0_30, %c0_31] : memref<128x1xf32, #tpu.memory_space<vmem>>, vector<128x1xf32>
      %c0_32 = arith.constant 0 : index
      %c0_33 = arith.constant 0 : index
      %74 = vector.load %arg6[%c0_32, %c0_33] : memref<128x1xf32, #tpu.memory_space<vmem>>, vector<128x1xf32>
      tpu.vector_store %arg6[%c0_32, %c0_33], %73 {strides = array<i32>} : memref<128x1xf32, #tpu.memory_space<vmem>>, vector<128x1xf32>,
    } else {
    }
    return
  }
  func.func @transform_0(%arg0: i32, %arg1: i32) -> (i32, i32) {
    %c0_i32 = arith.constant 0 : i32
    %c0_i32_0 = arith.constant 0 : i32
    return %arg0, %c0_i32 : i32, i32
  }
  func.func @transform_1(%arg0: i32, %arg1: i32) -> (i32, i32) {
    %c0_i32 = arith.constant 0 : i32
    %c0_i32_0 = arith.constant 0 : i32
    return %c0_i32, %arg1 : i32, i32
  }
  func.func @transform_2(%arg0: i32, %arg1: i32) -> (i32, i32) {
    %c0_i32 = arith.constant 0 : i32
    %c0_i32_0 = arith.constant 0 : i32
    return %arg1, %c0_i32 : i32, i32
  }
  func.func @transform_3(%arg0: i32, %arg1: i32) -> (i32, i32) {
    %c0_i32 = arith.constant 0 : i32
    %c0_i32_0 = arith.constant 0 : i32
    return %arg0, %c0_i32 : i32, i32
  }
  func.func @transform_4(%arg0: i32, %arg1: i32) -> (i32, i32) {
    %c0_i32 = arith.constant 0 : i32
    %c0_i32_0 = arith.constant 0 : i32
    return %arg0, %c0_i32 : i32, i32
  }
}

</mosaic_0001>

<llo_original>
// kernel: tpu_custom_call.1
$region0: #{tpu_custom_call.1}
  #allocation0 [shape = 'u32[]', space=smem, size = 0x4, offset = 0x4, fixed_abs, tag = 'smem constant byte address 0x4 - core index']
  #allocation1 [shape = 'u32[144,128]{1,0:T(1,128)}', space=vmem, size = 0x12000, scoped, tag = 'internal scratch']
  #allocation2 [shape = 'f32[128,4]{1,0:T(8,128)}', space=vmem, size = 0x10000, scoped, tag = 'scratch operand']
  #allocation3 [shape = 'f32[128,1]{1,0:T(8,128)}', space=vmem, size = 0x10000, scoped, tag = 'scratch operand']
  %s0 = inlined_call_operand.vmem [shape: f32[1024,3], index: 0, kind: input, shape index: {}]
  %s1 = inlined_call_operand.vmem [shape: f32[3,1024], index: 1, kind: input, shape index: {}]
  %s2 = inlined_call_operand.vmem [shape: f32[1024,4], index: 2, kind: input, shape index: {}]
  %s3 = inlined_call_operand.vmem [shape: f32[1024,3], index: 3, kind: output, shape index: {0}]
  %s4 = inlined_call_operand.vmem [shape: f32[1024,1], index: 4, kind: output, shape index: {1}]
  %5 = xla_tuple %s3, %s4
  %s6 = sld [smem:[#allocation0]]
  $region61: #{tpu_custom_call.1} parent=0
    _
  %s8 = ssub.s32 1, %s6
  %s9 = scalar_select 0, %s8, %s6
  loop: start=0, step=1, limit=10
  $region2: #{tpu_custom_call.1} parent=0 // loop_pre_header
    _
  $region3: #{tpu_custom_call.1} parent=0 // loop_header
    %s11 = sphi 0, %s15
    %p12 = scmp.ge.s32.totalorder %s11, 10
    %s18 = sphi 0, %s30
    %s19 = sphi 0, %s26
    %s20 = sphi 0, %s18
    %s21 = sphi 0, %s19
    %s22 = sphi 0, %s20
    %s23 = sphi 0, %s21
    %s33 = sphi 0, %s35
    %s36 = sphi 0, %s33
    %s37 = sphi 0, %s36
    %s53 = sphi 0, %s37
    %s59 = sphi 0, %s61
    %s62 = sphi 0, %s59
    %s63 = sphi 0, %s62
    %s79 = sphi 0, %s63
    %s85 = sphi 0, %s87
    %s88 = sphi 0, %s85
    %s89 = sphi 0, %s88
    %s105 = sphi 0, %s89
    %s111 = sphi 0, %s113
    %s114 = sphi 0, %s111
    %s115 = sphi 0, %s114
    %s131 = sphi 0, %s115
    %s137 = sphi 0, %s139
    %s140 = sphi 0, %s137
    %s141 = sphi 0, %s140
    %s157 = sphi 0, %s141
  $region4: #{tpu_custom_call.1} parent=0 // loop_header_branch
    %14 = sbr.rel (%p12) target = $region8
  $region5: #{tpu_custom_call.1} parent=0 // loop_body
    %s16 = ssub.s32 %s11, 1
    %s17 = ssub.s32 %s11, 2
    %s24 = sadd.s32 1, %s19
    %p25 = scmp.ge.s32.totalorder %s24, 1
    %s26 = scalar_select %p25, 0, %s24
    %s27 = sadd.s32 1, %s18
    %s28 = scalar_select %p25, %s27, %s18
    %p29 = scmp.ge.s32.totalorder %s28, 8
    %s30 = scalar_select %p29, 0, %s28
    %s31 = ssub.s32 %s18, %s30
    %p32 = scmp.eq.s32.totalorder %s31, 0
    %s34 = sadd.s32 %s33, 1
    %s35 = scalar_select %p32, %s33, %s34
    %p38 = pneg %p32
    %p39 = scmp.eq.s32.totalorder %s11, 7
    %p40 = por %p38, %p39
    %p41 = scmp.ne.s32.totalorder %s33, %s36
    %p42 = scmp.eq.s32.totalorder %s11, 0
    %p43 = por %p41, %p42
    %p44 = scmp.ne.s32.totalorder %s33, %s36
    %p45 = scmp.eq.s32.totalorder %s16, 7
    %p46 = por %p44, %p45
    %p47 = scmp.ne.s32.totalorder %s36, %s37
    %p48 = scmp.eq.s32.totalorder %s16, 0
    %p49 = por %p47, %p48
    %p50 = scmp.ne.s32.totalorder %s36, %s37
    %p51 = scmp.eq.s32.totalorder %s17, 7
    %p52 = por %p50, %p51
    %p54 = scmp.ne.s32.totalorder %s37, %s53
    %p55 = scmp.eq.s32.totalorder %s17, 0
    %p56 = por %p54, %p55
    %s57 = ssub.s32 %s19, %s26
    %p58 = scmp.eq.s32.totalorder %s57, 0
    %s60 = sadd.s32 %s59, 1
    %s61 = scalar_select %p58, %s59, %s60
    %p64 = pneg %p58
    %p65 = scmp.eq.s32.totalorder %s11, 7
    %p66 = por %p64, %p65
    %p67 = scmp.ne.s32.totalorder %s59, %s62
    %p68 = scmp.eq.s32.totalorder %s11, 0
    %p69 = por %p67, %p68
    %p70 = scmp.ne.s32.totalorder %s59, %s62
    %p71 = scmp.eq.s32.totalorder %s16, 7
    %p72 = por %p70, %p71
    %p73 = scmp.ne.s32.totalorder %s62, %s63
    %p74 = scmp.eq.s32.totalorder %s16, 0
    %p75 = por %p73, %p74
    %p76 = scmp.ne.s32.totalorder %s62, %s63
    %p77 = scmp.eq.s32.totalorder %s17, 7
    %p78 = por %p76, %p77
    %p80 = scmp.ne.s32.totalorder %s63, %s79
    %p81 = scmp.eq.s32.totalorder %s17, 0
    %p82 = por %p80, %p81
    %s83 = ssub.s32 %s19, %s26
    %p84 = scmp.eq.s32.totalorder %s83, 0
    %s86 = sadd.s32 %s85, 1
    %s87 = scalar_select %p84, %s85, %s86
    %p90 = pneg %p84
    %p91 = scmp.eq.s32.totalorder %s11, 7
    %p92 = por %p90, %p91
    %p93 = scmp.ne.s32.totalorder %s85, %s88
    %p94 = scmp.eq.s32.totalorder %s11, 0
    %p95 = por %p93, %p94
    %p96 = scmp.ne.s32.totalorder %s85, %s88
    %p97 = scmp.eq.s32.totalorder %s16, 7
    %p98 = por %p96, %p97
    %p99 = scmp.ne.s32.totalorder %s88, %s89
    %p100 = scmp.eq.s32.totalorder %s16, 0
    %p101 = por %p99, %p100
    %p102 = scmp.ne.s32.totalorder %s88, %s89
    %p103 = scmp.eq.s32.totalorder %s17, 7
    %p104 = por %p102, %p103
    %p106 = scmp.ne.s32.totalorder %s89, %s105
    %p107 = scmp.eq.s32.totalorder %s17, 0
    %p108 = por %p106, %p107
    %s109 = ssub.s32 %s18, %s30
    %p110 = scmp.eq.s32.totalorder %s109, 0
    %s112 = sadd.s32 %s111, 1
    %s113 = scalar_select %p110, %s111, %s112
    %p116 = pneg %p110
    %p117 = scmp.eq.s32.totalorder %s11, 7
    %p118 = por %p116, %p117
    %p119 = scmp.ne.s32.totalorder %s111, %s114
    %p120 = scmp.eq.s32.totalorder %s11, 0
    %p121 = por %p119, %p120
    %p122 = scmp.ne.s32.totalorder %s111, %s114
    %p123 = scmp.eq.s32.totalorder %s16, 7
    %p124 = por %p122, %p123
    %p125 = scmp.ne.s32.totalorder %s114, %s115
    %p126 = scmp.eq.s32.totalorder %s16, 0
    %p127 = por %p125, %p126
    %p128 = scmp.ne.s32.totalorder %s114, %s115
    %p129 = scmp.eq.s32.totalorder %s17, 7
    %p130 = por %p128, %p129
    %p132 = scmp.ne.s32.totalorder %s115, %s131
    %p133 = scmp.eq.s32.totalorder %s17, 0
    %p134 = por %p132, %p133
    %s135 = ssub.s32 %s18, %s30
    %p136 = scmp.eq.s32.totalorder %s135, 0
    %s138 = sadd.s32 %s137, 1
    %s139 = scalar_select %p136, %s137, %s138
    %p142 = pneg %p136
    %p143 = scmp.eq.s32.totalorder %s11, 7
    %p144 = por %p142, %p143
    %p145 = scmp.ne.s32.totalorder %s137, %s140
    %p146 = scmp.eq.s32.totalorder %s11, 0
    %p147 = por %p145, %p146
    %p148 = scmp.ne.s32.totalorder %s137, %s140
    %p149 = scmp.eq.s32.totalorder %s16, 7
    %p150 = por %p148, %p149
    %p151 = scmp.ne.s32.totalorder %s140, %s141
    %p152 = scmp.eq.s32.totalorder %s16, 0
    %p153 = por %p151, %p152
    %p154 = scmp.ne.s32.totalorder %s140, %s141
    %p155 = scmp.eq.s32.totalorder %s17, 7
    %p156 = por %p154, %p155
    %p158 = scmp.ne.s32.totalorder %s141, %s157
    %p159 = scmp.eq.s32.totalorder %s17, 0
    %p160 = por %p158, %p159
    %p161 = scmp.le.s32.totalorder 1, %s11
    %p162 = scmp.lt.s32.totalorder %s11, 9
    %p163 = pnand %p161, %p162
    %p164 = pneg %p163
    // Predicated region
    $region9: #{tpu_custom_call.1} parent=5 // pred_check
      _
    $region10: #{tpu_custom_call.1} parent=5 // pred_check_branch
      %166 = sbr.rel (%p163) target = $region12
    $region11: #{tpu_custom_call.1} parent=5 // pred_region
      %s167 = ssub.s32 %s11, 1
      // Predicated region
      $region13: #{tpu_custom_call.1} parent=11 // pred_check
        %p168 = pneg %p75
      $region14: #{tpu_custom_call.1} parent=11 // pred_check_branch
        %170 = sbr.rel (%p168) target = $region16
      $region15: #{tpu_custom_call.1} parent=11 // pred_region
        %s171 = smul.u32 8, %s21
        %p172 = scmp.lt.s32.totalorder %s171, 7
        %s173 = scalar_select %p172, %s171, 7
        %s174 = smul.addr %s173, 4
        %s175 = scalar_lea.vmem %s1, %s174
        %s176 = smul.u32 8, %s21
      $region16: #{tpu_custom_call.1} parent=11 // pred_fallthru
        _
      // Predicated region
      $region17: #{tpu_custom_call.1} parent=11 // pred_check
        %p177 = pneg %p101
      $region18: #{tpu_custom_call.1} parent=11 // pred_check_branch
        %179 = sbr.rel (%p177) target = $region20
      $region19: #{tpu_custom_call.1} parent=11 // pred_region
        %s180 = smul.u32 128, %s21
        %p181 = scmp.lt.s32.totalorder %s180, 127
        %s182 = scalar_select %p181, %s180, 127
        %s183 = smul.addr %s182, 8
        %s184 = scalar_lea.vmem %s2, %s183
        %s185 = smul.u32 128, %s21
      $region20: #{tpu_custom_call.1} parent=11 // pred_fallthru
        _
    $region12: #{tpu_custom_call.1} parent=5 // pred_fallthru
      _
    %p186 = scmp.lt.s32.totalorder %s11, 8
    // Predicated region
    $region21: #{tpu_custom_call.1} parent=5 // pred_check
      %p187 = pneg %p186
    $region22: #{tpu_custom_call.1} parent=5 // pred_check_branch
      %189 = sbr.rel (%p187) target = $region24
    $region23: #{tpu_custom_call.1} parent=5 // pred_region
      // Predicated region
      $region25: #{tpu_custom_call.1} parent=23 // pred_check
        %p190 = pneg %p43
      $region26: #{tpu_custom_call.1} parent=23 // pred_check_branch
        %192 = sbr.rel (%p190) target = $region28
      $region27: #{tpu_custom_call.1} parent=23 // pred_region
        %s193 = smul.u32 16, %s18
        %p194 = scmp.lt.s32.totalorder %s193, 127
        %s195 = scalar_select %p194, %s193, 127
        %s196 = smul.addr %s195, 8
        %s197 = scalar_lea.vmem %s0, %s196
        %s198 = smul.u32 16, %s18
      $region28: #{tpu_custom_call.1} parent=23 // pred_fallthru
        _
    $region24: #{tpu_custom_call.1} parent=5 // pred_fallthru
      _
    %p199 = scmp.le.s32.totalorder 1, %s11
    %p200 = scmp.lt.s32.totalorder %s11, 9
    %p201 = pnand %p199, %p200
    %p202 = pneg %p201
    // Predicated region
    $region29: #{tpu_custom_call.1} parent=5 // pred_check
      _
    $region30: #{tpu_custom_call.1} parent=5 // pred_check_branch
      %204 = sbr.rel (%p201) target = $region32
    $region31: #{tpu_custom_call.1} parent=5 // pred_region
      %s205 = ssub.s32 %s11, 1
      %s206 = smul.u32 16, %s20
      %p207 = scmp.lt.s32.totalorder %s206, 127
      %s208 = scalar_select %p207, %s206, 127
      %s209 = smul.addr %s208, 8
      %s210 = scalar_lea.vmem %s0, %s209
      %p211 = pneg %p49
      %p212 = pneg %p46
      %s213 = smul.u32 8, %s21
      %p214 = scmp.lt.s32.totalorder %s213, 7
      %s215 = scalar_select %p214, %s213, 7
      %s216 = smul.addr %s215, 4
      %s217 = scalar_lea.vmem %s1, %s216
      %p218 = pneg %p75
      %p219 = pneg %p72
      %s220 = smul.u32 128, %s21
      %p221 = scmp.lt.s32.totalorder %s220, 127
      %s222 = scalar_select %p221, %s220, 127
      %s223 = smul.addr %s222, 8
      %s224 = scalar_lea.vmem %s2, %s223
      %p225 = pneg %p101
      %p226 = pneg %p98
      %p227 = pneg %p127
      %p228 = pneg %p124
      %s229 = smul.u32 16, %s20
      %p230 = scmp.lt.s32.totalorder %s229, 127
      %s231 = scalar_select %p230, %s229, 127
      %s232 = smul.addr %s231, 8
      %s233 = scalar_lea.vmem %s3, %s232
      %p234 = pneg %p153
      %p235 = pneg %p150
      %s236 = smul.u32 16, %s20
      %p237 = scmp.lt.s32.totalorder %s236, 127
      %s238 = scalar_select %p237, %s236, 127
      %s239 = smul.addr %s238, 8
      %s240 = scalar_lea.vmem %s4, %s239
      %s241 = smul.u32 16, %s20
      %p242 = scmp.lt.s32.totalorder %s241, 127
      %s243 = scalar_select %p242, %s241, 127
      %s244 = smul.addr %s243, 8
      %s245 = scalar_lea.vmem %s0, %s244
      %s246 = smul.u32 16, %s20
      %s247 = smul.u32 8, %s21
      %p248 = scmp.lt.s32.totalorder %s247, 7
      %s249 = scalar_select %p248, %s247, 7
      %s250 = smul.addr %s249, 4
      %s251 = scalar_lea.vmem %s1, %s250
      %s252 = smul.u32 8, %s21
      %s253 = smul.u32 128, %s21
      %p254 = scmp.lt.s32.totalorder %s253, 127
      %s255 = scalar_select %p254, %s253, 127
      %s256 = smul.addr %s255, 8
      %s257 = scalar_lea.vmem %s2, %s256
      %s258 = smul.u32 128, %s21
      %s259 = smul.u32 16, %s20
      %p260 = scmp.lt.s32.totalorder %s259, 127
      %s261 = scalar_select %p260, %s259, 127
      %s262 = smul.addr %s261, 8
      %s263 = scalar_lea.vmem %s3, %s262
      %s264 = smul.u32 16, %s20
      %s265 = smul.u32 16, %s20
      %p266 = scmp.lt.s32.totalorder %s265, 127
      %s267 = scalar_select %p266, %s265, 127
      %s268 = smul.addr %s267, 8
      %s269 = scalar_lea.vmem %s4, %s268
      %s270 = smul.u32 16, %s20
      %p271 = scmp.eq.s32.totalorder %s21, 0
      // Predicated region
      $region33: #{tpu_custom_call.1} parent=31 // pred_check
        %p272 = pneg %p271
      $region34: #{tpu_custom_call.1} parent=31 // pred_check_branch
        %274 = sbr.rel (%p272) target = $region36
      $region35: #{tpu_custom_call.1} parent=31 // pred_region
        %vm275 = vcmask 31744
        %276 = vst.msk [vmem:[#allocation2] sm:$0xff] %vm275, 0.0
        %277 = vst.msk [vmem:[#allocation2 + $0x8] sm:$0xff] %vm275, 0.0
        %278 = vst.msk [vmem:[#allocation2 + $0x10] sm:$0xff] %vm275, 0.0
        %279 = vst.msk [vmem:[#allocation2 + $0x18] sm:$0xff] %vm275, 0.0
        %280 = vst.msk [vmem:[#allocation2 + $0x20] sm:$0xff] %vm275, 0.0
        %281 = vst.msk [vmem:[#allocation2 + $0x28] sm:$0xff] %vm275, 0.0
        %282 = vst.msk [vmem:[#allocation2 + $0x30] sm:$0xff] %vm275, 0.0
        %283 = vst.msk [vmem:[#allocation2 + $0x38] sm:$0xff] %vm275, 0.0
        %284 = vst.msk [vmem:[#allocation2 + $0x40] sm:$0xff] %vm275, 0.0
        %285 = vst.msk [vmem:[#allocation2 + $0x48] sm:$0xff] %vm275, 0.0
        %286 = vst.msk [vmem:[#allocation2 + $0x50] sm:$0xff] %vm275, 0.0
        %287 = vst.msk [vmem:[#allocation2 + $0x58] sm:$0xff] %vm275, 0.0
        %288 = vst.msk [vmem:[#allocation2 + $0x60] sm:$0xff] %vm275, 0.0
        %289 = vst.msk [vmem:[#allocation2 + $0x68] sm:$0xff] %vm275, 0.0
        %290 = vst.msk [vmem:[#allocation2 + $0x70] sm:$0xff] %vm275, 0.0
        %291 = vst.msk [vmem:[#allocation2 + $0x78] sm:$0xff] %vm275, 0.0
        %vm292 = vcmask 7168
        %293 = vst.msk [vmem:[#allocation3] sm:$0xff] %vm292, 0.0
        %294 = vst.msk [vmem:[#allocation3 + $0x8] sm:$0xff] %vm292, 0.0
        %295 = vst.msk [vmem:[#allocation3 + $0x10] sm:$0xff] %vm292, 0.0
        %296 = vst.msk [vmem:[#allocation3 + $0x18] sm:$0xff] %vm292, 0.0
        %297 = vst.msk [vmem:[#allocation3 + $0x20] sm:$0xff] %vm292, 0.0
        %298 = vst.msk [vmem:[#allocation3 + $0x28] sm:$0xff] %vm292, 0.0
        %299 = vst.msk [vmem:[#allocation3 + $0x30] sm:$0xff] %vm292, 0.0
        %300 = vst.msk [vmem:[#allocation3 + $0x38] sm:$0xff] %vm292, 0.0
        %301 = vst.msk [vmem:[#allocation3 + $0x40] sm:$0xff] %vm292, 0.0
        %302 = vst.msk [vmem:[#allocation3 + $0x48] sm:$0xff] %vm292, 0.0
        %303 = vst.msk [vmem:[#allocation3 + $0x50] sm:$0xff] %vm292, 0.0
        %304 = vst.msk [vmem:[#allocation3 + $0x58] sm:$0xff] %vm292, 0.0
        %305 = vst.msk [vmem:[#allocation3 + $0x60] sm:$0xff] %vm292, 0.0
        %306 = vst.msk [vmem:[#allocation3 + $0x68] sm:$0xff] %vm292, 0.0
        %307 = vst.msk [vmem:[#allocation3 + $0x70] sm:$0xff] %vm292, 0.0
        %308 = vst.msk [vmem:[#allocation3 + $0x78] sm:$0xff] %vm292, 0.0
      $region36: #{tpu_custom_call.1} parent=31 // pred_fallthru
        _
      %v309 = vld [vmem:[%s245] sm:$0xff]
      %v310 = vld [vmem:[%s245 + $0x8] sm:$0xff]
      %v311 = vld [vmem:[%s245 + $0x10] sm:$0xff]
      %v312 = vld [vmem:[%s245 + $0x18] sm:$0xff]
      %v313 = vld [vmem:[%s245 + $0x20] sm:$0xff]
      %v314 = vld [vmem:[%s245 + $0x28] sm:$0xff]
      %v315 = vld [vmem:[%s245 + $0x30] sm:$0xff]
      %v316 = vld [vmem:[%s245 + $0x38] sm:$0xff]
      %v317 = vld [vmem:[%s245 + $0x40] sm:$0xff]
      %v318 = vld [vmem:[%s245 + $0x48] sm:$0xff]
      %v319 = vld [vmem:[%s245 + $0x50] sm:$0xff]
      %v320 = vld [vmem:[%s245 + $0x58] sm:$0xff]
      %v321 = vld [vmem:[%s245 + $0x60] sm:$0xff]
      %v322 = vld [vmem:[%s245 + $0x68] sm:$0xff]
      %v323 = vld [vmem:[%s245 + $0x70] sm:$0xff]
      %v324 = vld [vmem:[%s245 + $0x78] sm:$0xff]
      %v325 = vld [vmem:[%s251] sm:$0x77]
      %v326 = vld [vmem:[%s251 + $0x8] sm:$0x77]
      %v327 = vld [vmem:[%s251 + $0x10] sm:$0x77]
      %v328 = vld [vmem:[%s251 + $0x18] sm:$0x77]
      %330 = vset.pattern.permute.xlu0 0
      %331 = vperm.xlu0 %330, %v309
      %v332 = vpop.permute.xlu0 %331
      %335 = vset.pattern.permute.xlu0 0
      %336 = vperm.xlu0 %335, %v310
      %v337 = vpop.permute.xlu0 %336
      %340 = vset.pattern.permute.xlu0 0
      %341 = vperm.xlu0 %340, %v311
      %v342 = vpop.permute.xlu0 %341
      %345 = vset.pattern.permute.xlu0 0
      %346 = vperm.xlu0 %345, %v312
      %v347 = vpop.permute.xlu0 %346
      %350 = vset.pattern.permute.xlu0 0
      %351 = vperm.xlu0 %350, %v313
      %v352 = vpop.permute.xlu0 %351
      %355 = vset.pattern.permute.xlu0 0
      %356 = vperm.xlu0 %355, %v314
      %v357 = vpop.permute.xlu0 %356
      %360 = vset.pattern.permute.xlu0 0
      %361 = vperm.xlu0 %360, %v315
      %v362 = vpop.permute.xlu0 %361
      %365 = vset.pattern.permute.xlu0 0
      %366 = vperm.xlu0 %365, %v316
      %v367 = vpop.permute.xlu0 %366
      %370 = vset.pattern.permute.xlu0 0
      %371 = vperm.xlu0 %370, %v317
      %v372 = vpop.permute.xlu0 %371
      %375 = vset.pattern.permute.xlu0 0
      %376 = vperm.xlu0 %375, %v318
      %v377 = vpop.permute.xlu0 %376
      %380 = vset.pattern.permute.xlu0 0
      %381 = vperm.xlu0 %380, %v319
      %v382 = vpop.permute.xlu0 %381
      %385 = vset.pattern.permute.xlu0 0
      %386 = vperm.xlu0 %385, %v320
      %v387 = vpop.permute.xlu0 %386
      %390 = vset.pattern.permute.xlu0 0
      %391 = vperm.xlu0 %390, %v321
      %v392 = vpop.permute.xlu0 %391
      %395 = vset.pattern.permute.xlu0 0
      %396 = vperm.xlu0 %395, %v322
      %v397 = vpop.permute.xlu0 %396
      %400 = vset.pattern.permute.xlu0 0
      %401 = vperm.xlu0 %400, %v323
      %v402 = vpop.permute.xlu0 %401
      %405 = vset.pattern.permute.xlu0 0
      %406 = vperm.xlu0 %405, %v324
      %v407 = vpop.permute.xlu0 %406
      %v413 = vlaneseq
      %v414 = vshrl.u32 %v413, 7
      %v415 = vsub.s32 0, %v414
      %v416 = vrot.slane %v325, %v415
      %v417 = vlaneseq
      %v418 = vshrl.u32 %v417, 7
      %v419 = vsub.s32 4, %v418
      %v420 = vrot.slane %v325, %v419
      %v421 = vlaneseq
      %v422 = vshrl.u32 %v421, 7
      %v423 = vsub.s32 0, %v422
      %v424 = vrot.slane %v326, %v423
      %v425 = vlaneseq
      %v426 = vshrl.u32 %v425, 7
      %v427 = vsub.s32 4, %v426
      %v428 = vrot.slane %v326, %v427
      %v429 = vlaneseq
      %v430 = vshrl.u32 %v429, 7
      %v431 = vsub.s32 0, %v430
      %v432 = vrot.slane %v327, %v431
      %v433 = vlaneseq
      %v434 = vshrl.u32 %v433, 7
      %v435 = vsub.s32 4, %v434
      %v436 = vrot.slane %v327, %v435
      %v437 = vlaneseq
      %v438 = vshrl.u32 %v437, 7
      %v439 = vsub.s32 0, %v438
      %v440 = vrot.slane %v328, %v439
      %v441 = vlaneseq
      %v442 = vshrl.u32 %v441, 7
      %v443 = vsub.s32 4, %v442
      %v444 = vrot.slane %v328, %v443
      %v453 = vlaneseq
      %v454 = vshrl.u32 %v453, 7
      %v455 = vsub.s32 0, %v454
      %v456 = vrot.slane %v416, %v455
      %v457 = vlaneseq
      %v458 = vshrl.u32 %v457, 7
      %v459 = vsub.s32 0, %v458
      %v460 = vrot.slane %v420, %v459
      %v461 = vlaneseq
      %v462 = vshrl.u32 %v461, 7
      %v463 = vsub.s32 0, %v462
      %v464 = vrot.slane %v424, %v463
      %v465 = vlaneseq
      %v466 = vshrl.u32 %v465, 7
      %v467 = vsub.s32 0, %v466
      %v468 = vrot.slane %v428, %v467
      %v469 = vlaneseq
      %v470 = vshrl.u32 %v469, 7
      %v471 = vsub.s32 0, %v470
      %v472 = vrot.slane %v432, %v471
      %v473 = vlaneseq
      %v474 = vshrl.u32 %v473, 7
      %v475 = vsub.s32 0, %v474
      %v476 = vrot.slane %v436, %v475
      %v477 = vlaneseq
      %v478 = vshrl.u32 %v477, 7
      %v479 = vsub.s32 0, %v478
      %v480 = vrot.slane %v440, %v479
      %v481 = vlaneseq
      %v482 = vshrl.u32 %v481, 7
      %v483 = vsub.s32 0, %v482
      %v484 = vrot.slane %v444, %v483
      %v485 = vsub.f32 %v332, %v456
      %v486 = vsub.f32 %v332, %v460
      %v487 = vsub.f32 %v332, %v464
      %v488 = vsub.f32 %v332, %v468
      %v489 = vsub.f32 %v332, %v472
      %v490 = vsub.f32 %v332, %v476
      %v491 = vsub.f32 %v332, %v480
      %v492 = vsub.f32 %v332, %v484
      %v493 = vsub.f32 %v337, %v456
      %v494 = vsub.f32 %v337, %v460
      %v495 = vsub.f32 %v337, %v464
      %v496 = vsub.f32 %v337, %v468
      %v497 = vsub.f32 %v337, %v472
      %v498 = vsub.f32 %v337, %v476
      %v499 = vsub.f32 %v337, %v480
      %v500 = vsub.f32 %v337, %v484
      %v501 = vsub.f32 %v342, %v456
      %v502 = vsub.f32 %v342, %v460
      %v503 = vsub.f32 %v342, %v464
      %v504 = vsub.f32 %v342, %v468
      %v505 = vsub.f32 %v342, %v472
      %v506 = vsub.f32 %v342, %v476
      %v507 = vsub.f32 %v342, %v480
      %v508 = vsub.f32 %v342, %v484
      %v509 = vsub.f32 %v347, %v456
      %v510 = vsub.f32 %v347, %v460
      %v511 = vsub.f32 %v347, %v464
      %v512 = vsub.f32 %v347, %v468
      %v513 = vsub.f32 %v347, %v472
      %v514 = vsub.f32 %v347, %v476
      %v515 = vsub.f32 %v347, %v480
      %v516 = vsub.f32 %v347, %v484
      %v517 = vsub.f32 %v352, %v456
      %v518 = vsub.f32 %v352, %v460
      %v519 = vsub.f32 %v352, %v464
      %v520 = vsub.f32 %v352, %v468
      %v521 = vsub.f32 %v352, %v472
      %v522 = vsub.f32 %v352, %v476
      %v523 = vsub.f32 %v352, %v480
      %v524 = vsub.f32 %v352, %v484
      %v525 = vsub.f32 %v357, %v456
      %v526 = vsub.f32 %v357, %v460
      %v527 = vsub.f32 %v357, %v464
      %v528 = vsub.f32 %v357, %v468
      %v529 = vsub.f32 %v357, %v472
      %v530 = vsub.f32 %v357, %v476
      %v531 = vsub.f32 %v357, %v480
      %v532 = vsub.f32 %v357, %v484
      %v533 = vsub.f32 %v362, %v456
      %v534 = vsub.f32 %v362, %v460
      %v535 = vsub.f32 %v362, %v464
      %v536 = vsub.f32 %v362, %v468
      %v537 = vsub.f32 %v362, %v472
      %v538 = vsub.f32 %v362, %v476
      %v539 = vsub.f32 %v362, %v480
      %v540 = vsub.f32 %v362, %v484
      %v541 = vsub.f32 %v367, %v456
      %v542 = vsub.f32 %v367, %v460
      %v543 = vsub.f32 %v367, %v464
      %v544 = vsub.f32 %v367, %v468
      %v545 = vsub.f32 %v367, %v472
      %v546 = vsub.f32 %v367, %v476
      %v547 = vsub.f32 %v367, %v480
      %v548 = vsub.f32 %v367, %v484
      %v549 = vsub.f32 %v372, %v456
      %v550 = vsub.f32 %v372, %v460
      %v551 = vsub.f32 %v372, %v464
      %v552 = vsub.f32 %v372, %v468
      %v553 = vsub.f32 %v372, %v472
      %v554 = vsub.f32 %v372, %v476
      %v555 = vsub.f32 %v372, %v480
      %v556 = vsub.f32 %v372, %v484
      %v557 = vsub.f32 %v377, %v456
      %v558 = vsub.f32 %v377, %v460
      %v559 = vsub.f32 %v377, %v464
      %v560 = vsub.f32 %v377, %v468
      %v561 = vsub.f32 %v377, %v472
      %v562 = vsub.f32 %v377, %v476
      %v563 = vsub.f32 %v377, %v480
      %v564 = vsub.f32 %v377, %v484
      %v565 = vsub.f32 %v382, %v456
      %v566 = vsub.f32 %v382, %v460
      %v567 = vsub.f32 %v382, %v464
      %v568 = vsub.f32 %v382, %v468
      %v569 = vsub.f32 %v382, %v472
      %v570 = vsub.f32 %v382, %v476
      %v571 = vsub.f32 %v382, %v480
      %v572 = vsub.f32 %v382, %v484
      %v573 = vsub.f32 %v387, %v456
      %v574 = vsub.f32 %v387, %v460
      %v575 = vsub.f32 %v387, %v464
      %v576 = vsub.f32 %v387, %v468
      %v577 = vsub.f32 %v387, %v472
      %v578 = vsub.f32 %v387, %v476
      %v579 = vsub.f32 %v387, %v480
      %v580 = vsub.f32 %v387, %v484
      %v581 = vsub.f32 %v392, %v456
      %v582 = vsub.f32 %v392, %v460
      %v583 = vsub.f32 %v392, %v464
      %v584 = vsub.f32 %v392, %v468
      %v585 = vsub.f32 %v392, %v472
      %v586 = vsub.f32 %v392, %v476
      %v587 = vsub.f32 %v392, %v480
      %v588 = vsub.f32 %v392, %v484
      %v589 = vsub.f32 %v397, %v456
      %v590 = vsub.f32 %v397, %v460
      %v591 = vsub.f32 %v397, %v464
      %v592 = vsub.f32 %v397, %v468
      %v593 = vsub.f32 %v397, %v472
      %v594 = vsub.f32 %v397, %v476
      %v595 = vsub.f32 %v397, %v480
      %v596 = vsub.f32 %v397, %v484
      %v597 = vsub.f32 %v402, %v456
      %v598 = vsub.f32 %v402, %v460
      %v599 = vsub.f32 %v402, %v464
      %v600 = vsub.f32 %v402, %v468
      %v601 = vsub.f32 %v402, %v472
      %v602 = vsub.f32 %v402, %v476
      %v603 = vsub.f32 %v402, %v480
      %v604 = vsub.f32 %v402, %v484
      %v605 = vsub.f32 %v407, %v456
      %v606 = vsub.f32 %v407, %v460
      %v607 = vsub.f32 %v407, %v464
      %v608 = vsub.f32 %v407, %v468
      %v609 = vsub.f32 %v407, %v472
      %v610 = vsub.f32 %v407, %v476
      %v611 = vsub.f32 %v407, %v480
      %v612 = vsub.f32 %v407, %v484
      %613 = vset.pattern.permute.xlu0 1
      %614 = vperm.xlu0 %613, %v309
      %v615 = vpop.permute.xlu0 %614
      %617 = vset.pattern.permute.xlu0 1
      %618 = vperm.xlu0 %617, %v310
      %v619 = vpop.permute.xlu0 %618
      %621 = vset.pattern.permute.xlu0 1
      %622 = vperm.xlu0 %621, %v311
      %v623 = vpop.permute.xlu0 %622
      %625 = vset.pattern.permute.xlu0 1
      %626 = vperm.xlu0 %625, %v312
      %v627 = vpop.permute.xlu0 %626
      %629 = vset.pattern.permute.xlu0 1
      %630 = vperm.xlu0 %629, %v313
      %v631 = vpop.permute.xlu0 %630
      %633 = vset.pattern.permute.xlu0 1
      %634 = vperm.xlu0 %633, %v314
      %v635 = vpop.permute.xlu0 %634
      %637 = vset.pattern.permute.xlu0 1
      %638 = vperm.xlu0 %637, %v315
      %v639 = vpop.permute.xlu0 %638
      %641 = vset.pattern.permute.xlu0 1
      %642 = vperm.xlu0 %641, %v316
      %v643 = vpop.permute.xlu0 %642
      %645 = vset.pattern.permute.xlu0 1
      %646 = vperm.xlu0 %645, %v317
      %v647 = vpop.permute.xlu0 %646
      %649 = vset.pattern.permute.xlu0 1
      %650 = vperm.xlu0 %649, %v318
      %v651 = vpop.permute.xlu0 %650
      %653 = vset.pattern.permute.xlu0 1
      %654 = vperm.xlu0 %653, %v319
      %v655 = vpop.permute.xlu0 %654
      %657 = vset.pattern.permute.xlu0 1
      %658 = vperm.xlu0 %657, %v320
      %v659 = vpop.permute.xlu0 %658
      %661 = vset.pattern.permute.xlu0 1
      %662 = vperm.xlu0 %661, %v321
      %v663 = vpop.permute.xlu0 %662
      %665 = vset.pattern.permute.xlu0 1
      %666 = vperm.xlu0 %665, %v322
      %v667 = vpop.permute.xlu0 %666
      %669 = vset.pattern.permute.xlu0 1
      %670 = vperm.xlu0 %669, %v323
      %v671 = vpop.permute.xlu0 %670
      %673 = vset.pattern.permute.xlu0 1
      %674 = vperm.xlu0 %673, %v324
      %v675 = vpop.permute.xlu0 %674
      %v677 = vlaneseq
      %v678 = vshrl.u32 %v677, 7
      %v679 = vsub.s32 1, %v678
      %v680 = vrot.slane %v325, %v679
      %v681 = vlaneseq
      %v682 = vshrl.u32 %v681, 7
      %v683 = vsub.s32 5, %v682
      %v684 = vrot.slane %v325, %v683
      %v685 = vlaneseq
      %v686 = vshrl.u32 %v685, 7
      %v687 = vsub.s32 1, %v686
      %v688 = vrot.slane %v326, %v687
      %v689 = vlaneseq
      %v690 = vshrl.u32 %v689, 7
      %v691 = vsub.s32 5, %v690
      %v692 = vrot.slane %v326, %v691
      %v693 = vlaneseq
      %v694 = vshrl.u32 %v693, 7
      %v695 = vsub.s32 1, %v694
      %v696 = vrot.slane %v327, %v695
      %v697 = vlaneseq
      %v698 = vshrl.u32 %v697, 7
      %v699 = vsub.s32 5, %v698
      %v700 = vrot.slane %v327, %v699
      %v701 = vlaneseq
      %v702 = vshrl.u32 %v701, 7
      %v703 = vsub.s32 1, %v702
      %v704 = vrot.slane %v328, %v703
      %v705 = vlaneseq
      %v706 = vshrl.u32 %v705, 7
      %v707 = vsub.s32 5, %v706
      %v708 = vrot.slane %v328, %v707
      %v717 = vlaneseq
      %v718 = vshrl.u32 %v717, 7
      %v719 = vsub.s32 1, %v718
      %v720 = vrot.slane %v680, %v719
      %v721 = vlaneseq
      %v722 = vshrl.u32 %v721, 7
      %v723 = vsub.s32 1, %v722
      %v724 = vrot.slane %v684, %v723
      %v725 = vlaneseq
      %v726 = vshrl.u32 %v725, 7
      %v727 = vsub.s32 1, %v726
      %v728 = vrot.slane %v688, %v727
      %v729 = vlaneseq
      %v730 = vshrl.u32 %v729, 7
      %v731 = vsub.s32 1, %v730
      %v732 = vrot.slane %v692, %v731
      %v733 = vlaneseq
      %v734 = vshrl.u32 %v733, 7
      %v735 = vsub.s32 1, %v734
      %v736 = vrot.slane %v696, %v735
      %v737 = vlaneseq
      %v738 = vshrl.u32 %v737, 7
      %v739 = vsub.s32 1, %v738
      %v740 = vrot.slane %v700, %v739
      %v741 = vlaneseq
      %v742 = vshrl.u32 %v741, 7
      %v743 = vsub.s32 1, %v742
      %v744 = vrot.slane %v704, %v743
      %v745 = vlaneseq
      %v746 = vshrl.u32 %v745, 7
      %v747 = vsub.s32 1, %v746
      %v748 = vrot.slane %v708, %v747
      %v749 = vsub.f32 %v615, %v720
      %v750 = vsub.f32 %v615, %v724
      %v751 = vsub.f32 %v615, %v728
      %v752 = vsub.f32 %v615, %v732
      %v753 = vsub.f32 %v615, %v736
      %v754 = vsub.f32 %v615, %v740
      %v755 = vsub.f32 %v615, %v744
      %v756 = vsub.f32 %v615, %v748
      %v757 = vsub.f32 %v619, %v720
      %v758 = vsub.f32 %v619, %v724
      %v759 = vsub.f32 %v619, %v728
      %v760 = vsub.f32 %v619, %v732
      %v761 = vsub.f32 %v619, %v736
      %v762 = vsub.f32 %v619, %v740
      %v763 = vsub.f32 %v619, %v744
      %v764 = vsub.f32 %v619, %v748
      %v765 = vsub.f32 %v623, %v720
      %v766 = vsub.f32 %v623, %v724
      %v767 = vsub.f32 %v623, %v728
      %v768 = vsub.f32 %v623, %v732
      %v769 = vsub.f32 %v623, %v736
      %v770 = vsub.f32 %v623, %v740
      %v771 = vsub.f32 %v623, %v744
      %v772 = vsub.f32 %v623, %v748
      %v773 = vsub.f32 %v627, %v720
      %v774 = vsub.f32 %v627, %v724
      %v775 = vsub.f32 %v627, %v728
      %v776 = vsub.f32 %v627, %v732
      %v777 = vsub.f32 %v627, %v736
      %v778 = vsub.f32 %v627, %v740
      %v779 = vsub.f32 %v627, %v744
      %v780 = vsub.f32 %v627, %v748
      %v781 = vsub.f32 %v631, %v720
      %v782 = vsub.f32 %v631, %v724
      %v783 = vsub.f32 %v631, %v728
      %v784 = vsub.f32 %v631, %v732
      %v785 = vsub.f32 %v631, %v736
      %v786 = vsub.f32 %v631, %v740
      %v787 = vsub.f32 %v631, %v744
      %v788 = vsub.f32 %v631, %v748
      %v789 = vsub.f32 %v635, %v720
      %v790 = vsub.f32 %v635, %v724
      %v791 = vsub.f32 %v635, %v728
      %v792 = vsub.f32 %v635, %v732
      %v793 = vsub.f32 %v635, %v736
      %v794 = vsub.f32 %v635, %v740
      %v795 = vsub.f32 %v635, %v744
      %v796 = vsub.f32 %v635, %v748
      %v797 = vsub.f32 %v639, %v720
      %v798 = vsub.f32 %v639, %v724
      %v799 = vsub.f32 %v639, %v728
      %v800 = vsub.f32 %v639, %v732
      %v801 = vsub.f32 %v639, %v736
      %v802 = vsub.f32 %v639, %v740
      %v803 = vsub.f32 %v639, %v744
      %v804 = vsub.f32 %v639, %v748
      %v805 = vsub.f32 %v643, %v720
      %v806 = vsub.f32 %v643, %v724
      %v807 = vsub.f32 %v643, %v728
      %v808 = vsub.f32 %v643, %v732
      %v809 = vsub.f32 %v643, %v736
      %v810 = vsub.f32 %v643, %v740
      %v811 = vsub.f32 %v643, %v744
      %v812 = vsub.f32 %v643, %v748
      %v813 = vsub.f32 %v647, %v720
      %v814 = vsub.f32 %v647, %v724
      %v815 = vsub.f32 %v647, %v728
      %v816 = vsub.f32 %v647, %v732
      %v817 = vsub.f32 %v647, %v736
      %v818 = vsub.f32 %v647, %v740
      %v819 = vsub.f32 %v647, %v744
      %v820 = vsub.f32 %v647, %v748
      %v821 = vsub.f32 %v651, %v720
      %v822 = vsub.f32 %v651, %v724
      %v823 = vsub.f32 %v651, %v728
      %v824 = vsub.f32 %v651, %v732
      %v825 = vsub.f32 %v651, %v736
      %v826 = vsub.f32 %v651, %v740
      %v827 = vsub.f32 %v651, %v744
      %v828 = vsub.f32 %v651, %v748
      %v829 = vsub.f32 %v655, %v720
      %v830 = vsub.f32 %v655, %v724
      %v831 = vsub.f32 %v655, %v728
      %v832 = vsub.f32 %v655, %v732
      %v833 = vsub.f32 %v655, %v736
      %v834 = vsub.f32 %v655, %v740
      %v835 = vsub.f32 %v655, %v744
      %v836 = vsub.f32 %v655, %v748
      %v837 = vsub.f32 %v659, %v720
      %v838 = vsub.f32 %v659, %v724
      %v839 = vsub.f32 %v659, %v728
      %v840 = vsub.f32 %v659, %v732
      %v841 = vsub.f32 %v659, %v736
      %v842 = vsub.f32 %v659, %v740
      %v843 = vsub.f32 %v659, %v744
      %v844 = vsub.f32 %v659, %v748
      %v845 = vsub.f32 %v663, %v720
      %v846 = vsub.f32 %v663, %v724
      %v847 = vsub.f32 %v663, %v728
      %v848 = vsub.f32 %v663, %v732
      %v849 = vsub.f32 %v663, %v736
      %v850 = vsub.f32 %v663, %v740
      %v851 = vsub.f32 %v663, %v744
      %v852 = vsub.f32 %v663, %v748
      %v853 = vsub.f32 %v667, %v720
      %v854 = vsub.f32 %v667, %v724
      %v855 = vsub.f32 %v667, %v728
      %v856 = vsub.f32 %v667, %v732
      %v857 = vsub.f32 %v667, %v736
      %v858 = vsub.f32 %v667, %v740
      %v859 = vsub.f32 %v667, %v744
      %v860 = vsub.f32 %v667, %v748
      %v861 = vsub.f32 %v671, %v720
      %v862 = vsub.f32 %v671, %v724
      %v863 = vsub.f32 %v671, %v728
      %v864 = vsub.f32 %v671, %v732
      %v865 = vsub.f32 %v671, %v736
      %v866 = vsub.f32 %v671, %v740
      %v867 = vsub.f32 %v671, %v744
      %v868 = vsub.f32 %v671, %v748
      %v869 = vsub.f32 %v675, %v720
      %v870 = vsub.f32 %v675, %v724
      %v871 = vsub.f32 %v675, %v728
      %v872 = vsub.f32 %v675, %v732
      %v873 = vsub.f32 %v675, %v736
      %v874 = vsub.f32 %v675, %v740
      %v875 = vsub.f32 %v675, %v744
      %v876 = vsub.f32 %v675, %v748
      %877 = vset.pattern.permute.xlu0 2
      %878 = vperm.xlu0 %877, %v309
      %v879 = vpop.permute.xlu0 %878
      %881 = vset.pattern.permute.xlu0 2
      %882 = vperm.xlu0 %881, %v310
      %v883 = vpop.permute.xlu0 %882
      %885 = vset.pattern.permute.xlu0 2
      %886 = vperm.xlu0 %885, %v311
      %v887 = vpop.permute.xlu0 %886
      %889 = vset.pattern.permute.xlu0 2
      %890 = vperm.xlu0 %889, %v312
      %v891 = vpop.permute.xlu0 %890
      %893 = vset.pattern.permute.xlu0 2
      %894 = vperm.xlu0 %893, %v313
      %v895 = vpop.permute.xlu0 %894
      %897 = vset.pattern.permute.xlu0 2
      %898 = vperm.xlu0 %897, %v314
      %v899 = vpop.permute.xlu0 %898
      %901 = vset.pattern.permute.xlu0 2
      %902 = vperm.xlu0 %901, %v315
      %v903 = vpop.permute.xlu0 %902
      %905 = vset.pattern.permute.xlu0 2
      %906 = vperm.xlu0 %905, %v316
      %v907 = vpop.permute.xlu0 %906
      %909 = vset.pattern.permute.xlu0 2
      %910 = vperm.xlu0 %909, %v317
      %v911 = vpop.permute.xlu0 %910
      %913 = vset.pattern.permute.xlu0 2
      %914 = vperm.xlu0 %913, %v318
      %v915 = vpop.permute.xlu0 %914
      %917 = vset.pattern.permute.xlu0 2
      %918 = vperm.xlu0 %917, %v319
      %v919 = vpop.permute.xlu0 %918
      %921 = vset.pattern.permute.xlu0 2
      %922 = vperm.xlu0 %921, %v320
      %v923 = vpop.permute.xlu0 %922
      %925 = vset.pattern.permute.xlu0 2
      %926 = vperm.xlu0 %925, %v321
      %v927 = vpop.permute.xlu0 %926
      %929 = vset.pattern.permute.xlu0 2
      %930 = vperm.xlu0 %929, %v322
      %v931 = vpop.permute.xlu0 %930
      %933 = vset.pattern.permute.xlu0 2
      %934 = vperm.xlu0 %933, %v323
      %v935 = vpop.permute.xlu0 %934
      %937 = vset.pattern.permute.xlu0 2
      %938 = vperm.xlu0 %937, %v324
      %v939 = vpop.permute.xlu0 %938
      %v941 = vlaneseq
      %v942 = vshrl.u32 %v941, 7
      %v943 = vsub.s32 2, %v942
      %v944 = vrot.slane %v325, %v943
      %v945 = vlaneseq
      %v946 = vshrl.u32 %v945, 7
      %v947 = vsub.s32 6, %v946
      %v948 = vrot.slane %v325, %v947
      %v949 = vlaneseq
      %v950 = vshrl.u32 %v949, 7
      %v951 = vsub.s32 2, %v950
      %v952 = vrot.slane %v326, %v951
      %v953 = vlaneseq
      %v954 = vshrl.u32 %v953, 7
      %v955 = vsub.s32 6, %v954
      %v956 = vrot.slane %v326, %v955
      %v957 = vlaneseq
      %v958 = vshrl.u32 %v957, 7
      %v959 = vsub.s32 2, %v958
      %v960 = vrot.slane %v327, %v959
      %v961 = vlaneseq
      %v962 = vshrl.u32 %v961, 7
      %v963 = vsub.s32 6, %v962
      %v964 = vrot.slane %v327, %v963
      %v965 = vlaneseq
      %v966 = vshrl.u32 %v965, 7
      %v967 = vsub.s32 2, %v966
      %v968 = vrot.slane %v328, %v967
      %v969 = vlaneseq
      %v970 = vshrl.u32 %v969, 7
      %v971 = vsub.s32 6, %v970
      %v972 = vrot.slane %v328, %v971
      %v981 = vlaneseq
      %v982 = vshrl.u32 %v981, 7
      %v983 = vsub.s32 2, %v982
      %v984 = vrot.slane %v944, %v983
      %v985 = vlaneseq
      %v986 = vshrl.u32 %v985, 7
      %v987 = vsub.s32 2, %v986
      %v988 = vrot.slane %v948, %v987
      %v989 = vlaneseq
      %v990 = vshrl.u32 %v989, 7
      %v991 = vsub.s32 2, %v990
      %v992 = vrot.slane %v952, %v991
      %v993 = vlaneseq
      %v994 = vshrl.u32 %v993, 7
      %v995 = vsub.s32 2, %v994
      %v996 = vrot.slane %v956, %v995
      %v997 = vlaneseq
      %v998 = vshrl.u32 %v997, 7
      %v999 = vsub.s32 2, %v998
      %v1000 = vrot.slane %v960, %v999
      %v1001 = vlaneseq
      %v1002 = vshrl.u32 %v1001, 7
      %v1003 = vsub.s32 2, %v1002
      %v1004 = vrot.slane %v964, %v1003
      %v1005 = vlaneseq
      %v1006 = vshrl.u32 %v1005, 7
      %v1007 = vsub.s32 2, %v1006
      %v1008 = vrot.slane %v968, %v1007
      %v1009 = vlaneseq
      %v1010 = vshrl.u32 %v1009, 7
      %v1011 = vsub.s32 2, %v1010
      %v1012 = vrot.slane %v972, %v1011
      %v1013 = vsub.f32 %v879, %v984
      %v1014 = vsub.f32 %v879, %v988
      %v1015 = vsub.f32 %v879, %v992
      %v1016 = vsub.f32 %v879, %v996
      %v1017 = vsub.f32 %v879, %v1000
      %v1018 = vsub.f32 %v879, %v1004
      %v1019 = vsub.f32 %v879, %v1008
      %v1020 = vsub.f32 %v879, %v1012
      %v1021 = vsub.f32 %v883, %v984
      %v1022 = vsub.f32 %v883, %v988
      %v1023 = vsub.f32 %v883, %v992
      %v1024 = vsub.f32 %v883, %v996
      %v1025 = vsub.f32 %v883, %v1000
      %v1026 = vsub.f32 %v883, %v1004
      %v1027 = vsub.f32 %v883, %v1008
      %v1028 = vsub.f32 %v883, %v1012
      %v1029 = vsub.f32 %v887, %v984
      %v1030 = vsub.f32 %v887, %v988
      %v1031 = vsub.f32 %v887, %v992
      %v1032 = vsub.f32 %v887, %v996
      %v1033 = vsub.f32 %v887, %v1000
      %v1034 = vsub.f32 %v887, %v1004
      %v1035 = vsub.f32 %v887, %v1008
      %v1036 = vsub.f32 %v887, %v1012
      %v1037 = vsub.f32 %v891, %v984
      %v1038 = vsub.f32 %v891, %v988
      %v1039 = vsub.f32 %v891, %v992
      %v1040 = vsub.f32 %v891, %v996
      %v1041 = vsub.f32 %v891, %v1000
      %v1042 = vsub.f32 %v891, %v1004
      %v1043 = vsub.f32 %v891, %v1008
      %v1044 = vsub.f32 %v891, %v1012
      %v1045 = vsub.f32 %v895, %v984
      %v1046 = vsub.f32 %v895, %v988
      %v1047 = vsub.f32 %v895, %v992
      %v1048 = vsub.f32 %v895, %v996
      %v1049 = vsub.f32 %v895, %v1000
      %v1050 = vsub.f32 %v895, %v1004
      %v1051 = vsub.f32 %v895, %v1008
      %v1052 = vsub.f32 %v895, %v1012
      %v1053 = vsub.f32 %v899, %v984
      %v1054 = vsub.f32 %v899, %v988
      %v1055 = vsub.f32 %v899, %v992
      %v1056 = vsub.f32 %v899, %v996
      %v1057 = vsub.f32 %v899, %v1000
      %v1058 = vsub.f32 %v899, %v1004
      %v1059 = vsub.f32 %v899, %v1008
      %v1060 = vsub.f32 %v899, %v1012
      %v1061 = vsub.f32 %v903, %v984
      %v1062 = vsub.f32 %v903, %v988
      %v1063 = vsub.f32 %v903, %v992
      %v1064 = vsub.f32 %v903, %v996
      %v1065 = vsub.f32 %v903, %v1000
      %v1066 = vsub.f32 %v903, %v1004
      %v1067 = vsub.f32 %v903, %v1008
      %v1068 = vsub.f32 %v903, %v1012
      %v1069 = vsub.f32 %v907, %v984
      %v1070 = vsub.f32 %v907, %v988
      %v1071 = vsub.f32 %v907, %v992
      %v1072 = vsub.f32 %v907, %v996
      %v1073 = vsub.f32 %v907, %v1000
      %v1074 = vsub.f32 %v907, %v1004
      %v1075 = vsub.f32 %v907, %v1008
      %v1076 = vsub.f32 %v907, %v1012
      %v1077 = vsub.f32 %v911, %v984
      %v1078 = vsub.f32 %v911, %v988
      %v1079 = vsub.f32 %v911, %v992
      %v1080 = vsub.f32 %v911, %v996
      %v1081 = vsub.f32 %v911, %v1000
      %v1082 = vsub.f32 %v911, %v1004
      %v1083 = vsub.f32 %v911, %v1008
      %v1084 = vsub.f32 %v911, %v1012
      %v1085 = vsub.f32 %v915, %v984
      %v1086 = vsub.f32 %v915, %v988
      %v1087 = vsub.f32 %v915, %v992
      %v1088 = vsub.f32 %v915, %v996
      %v1089 = vsub.f32 %v915, %v1000
      %v1090 = vsub.f32 %v915, %v1004
      %v1091 = vsub.f32 %v915, %v1008
      %v1092 = vsub.f32 %v915, %v1012
      %v1093 = vsub.f32 %v919, %v984
      %v1094 = vsub.f32 %v919, %v988
      %v1095 = vsub.f32 %v919, %v992
      %v1096 = vsub.f32 %v919, %v996
      %v1097 = vsub.f32 %v919, %v1000
      %v1098 = vsub.f32 %v919, %v1004
      %v1099 = vsub.f32 %v919, %v1008
      %v1100 = vsub.f32 %v919, %v1012
      %v1101 = vsub.f32 %v923, %v984
      %v1102 = vsub.f32 %v923, %v988
      %v1103 = vsub.f32 %v923, %v992
      %v1104 = vsub.f32 %v923, %v996
      %v1105 = vsub.f32 %v923, %v1000
      %v1106 = vsub.f32 %v923, %v1004
      %v1107 = vsub.f32 %v923, %v1008
      %v1108 = vsub.f32 %v923, %v1012
      %v1109 = vsub.f32 %v927, %v984
      %v1110 = vsub.f32 %v927, %v988
      %v1111 = vsub.f32 %v927, %v992
      %v1112 = vsub.f32 %v927, %v996
      %v1113 = vsub.f32 %v927, %v1000
      %v1114 = vsub.f32 %v927, %v1004
      %v1115 = vsub.f32 %v927, %v1008
      %v1116 = vsub.f32 %v927, %v1012
      %v1117 = vsub.f32 %v931, %v984
      %v1118 = vsub.f32 %v931, %v988
      %v1119 = vsub.f32 %v931, %v992
      %v1120 = vsub.f32 %v931, %v996
      %v1121 = vsub.f32 %v931, %v1000
      %v1122 = vsub.f32 %v931, %v1004
      %v1123 = vsub.f32 %v931, %v1008
      %v1124 = vsub.f32 %v931, %v1012
      %v1125 = vsub.f32 %v935, %v984
      %v1126 = vsub.f32 %v935, %v988
      %v1127 = vsub.f32 %v935, %v992
      %v1128 = vsub.f32 %v935, %v996
      %v1129 = vsub.f32 %v935, %v1000
      %v1130 = vsub.f32 %v935, %v1004
      %v1131 = vsub.f32 %v935, %v1008
      %v1132 = vsub.f32 %v935, %v1012
      %v1133 = vsub.f32 %v939, %v984
      %v1134 = vsub.f32 %v939, %v988
      %v1135 = vsub.f32 %v939, %v992
      %v1136 = vsub.f32 %v939, %v996
      %v1137 = vsub.f32 %v939, %v1000
      %v1138 = vsub.f32 %v939, %v1004
      %v1139 = vsub.f32 %v939, %v1008
      %v1140 = vsub.f32 %v939, %v1012
      %v1141 = vmul.f32 %v485, %v485
      %v1142 = vmul.f32 %v486, %v486
      %v1143 = vmul.f32 %v487, %v487
      %v1144 = vmul.f32 %v488, %v488
      %v1145 = vmul.f32 %v489, %v489
      %v1146 = vmul.f32 %v490, %v490
      %v1147 = vmul.f32 %v491, %v491
      %v1148 = vmul.f32 %v492, %v492
      %v1149 = vmul.f32 %v493, %v493
      %v1150 = vmul.f32 %v494, %v494
      %v1151 = vmul.f32 %v495, %v495
      %v1152 = vmul.f32 %v496, %v496
      %v1153 = vmul.f32 %v497, %v497
      %v1154 = vmul.f32 %v498, %v498
      %v1155 = vmul.f32 %v499, %v499
      %v1156 = vmul.f32 %v500, %v500
      %v1157 = vmul.f32 %v501, %v501
      %v1158 = vmul.f32 %v502, %v502
      %v1159 = vmul.f32 %v503, %v503
      %v1160 = vmul.f32 %v504, %v504
      %v1161 = vmul.f32 %v505, %v505
      %v1162 = vmul.f32 %v506, %v506
      %v1163 = vmul.f32 %v507, %v507
      %v1164 = vmul.f32 %v508, %v508
      %v1165 = vmul.f32 %v509, %v509
      %v1166 = vmul.f32 %v510, %v510
      %v1167 = vmul.f32 %v511, %v511
      %v1168 = vmul.f32 %v512, %v512
      %v1169 = vmul.f32 %v513, %v513
      %v1170 = vmul.f32 %v514, %v514
      %v1171 = vmul.f32 %v515, %v515
      %v1172 = vmul.f32 %v516, %v516
      %v1173 = vmul.f32 %v517, %v517
      %v1174 = vmul.f32 %v518, %v518
      %v1175 = vmul.f32 %v519, %v519
      %v1176 = vmul.f32 %v520, %v520
      %v1177 = vmul.f32 %v521, %v521
      %v1178 = vmul.f32 %v522, %v522
      %v1179 = vmul.f32 %v523, %v523
      %v1180 = vmul.f32 %v524, %v524
      %v1181 = vmul.f32 %v525, %v525
      %v1182 = vmul.f32 %v526, %v526
      %v1183 = vmul.f32 %v527, %v527
      %v1184 = vmul.f32 %v528, %v528
      %v1185 = vmul.f32 %v529, %v529
      %v1186 = vmul.f32 %v530, %v530
      %v1187 = vmul.f32 %v531, %v531
      %v1188 = vmul.f32 %v532, %v532
      %v1189 = vmul.f32 %v533, %v533
      %v1190 = vmul.f32 %v534, %v534
      %v1191 = vmul.f32 %v535, %v535
      %v1192 = vmul.f32 %v536, %v536
      %v1193 = vmul.f32 %v537, %v537
      %v1194 = vmul.f32 %v538, %v538
      %v1195 = vmul.f32 %v539, %v539
      %v1196 = vmul.f32 %v540, %v540
      %v1197 = vmul.f32 %v541, %v541
      %v1198 = vmul.f32 %v542, %v542
      %v1199 = vmul.f32 %v543, %v543
      %v1200 = vmul.f32 %v544, %v544
      %v1201 = vmul.f32 %v545, %v545
      %v1202 = vmul.f32 %v546, %v546
      %v1203 = vmul.f32 %v547, %v547
      %v1204 = vmul.f32 %v548, %v548
      %v1205 = vmul.f32 %v549, %v549
      %v1206 = vmul.f32 %v550, %v550
      %v1207 = vmul.f32 %v551, %v551
      %v1208 = vmul.f32 %v552, %v552
      %v1209 = vmul.f32 %v553, %v553
      %v1210 = vmul.f32 %v554, %v554
      %v1211 = vmul.f32 %v555, %v555
      %v1212 = vmul.f32 %v556, %v556
      %v1213 = vmul.f32 %v557, %v557
      %v1214 = vmul.f32 %v558, %v558
      %v1215 = vmul.f32 %v559, %v559
      %v1216 = vmul.f32 %v560, %v560
      %v1217 = vmul.f32 %v561, %v561
      %v1218 = vmul.f32 %v562, %v562
      %v1219 = vmul.f32 %v563, %v563
      %v1220 = vmul.f32 %v564, %v564
      %v1221 = vmul.f32 %v565, %v565
      %v1222 = vmul.f32 %v566, %v566
      %v1223 = vmul.f32 %v567, %v567
      %v1224 = vmul.f32 %v568, %v568
      %v1225 = vmul.f32 %v569, %v569
      %v1226 = vmul.f32 %v570, %v570
      %v1227 = vmul.f32 %v571, %v571
      %v1228 = vmul.f32 %v572, %v572
      %v1229 = vmul.f32 %v573, %v573
      %v1230 = vmul.f32 %v574, %v574
      %v1231 = vmul.f32 %v575, %v575
      %v1232 = vmul.f32 %v576, %v576
      %v1233 = vmul.f32 %v577, %v577
      %v1234 = vmul.f32 %v578, %v578
      %v1235 = vmul.f32 %v579, %v579
      %v1236 = vmul.f32 %v580, %v580
      %v1237 = vmul.f32 %v581, %v581
      %v1238 = vmul.f32 %v582, %v582
      %v1239 = vmul.f32 %v583, %v583
      %v1240 = vmul.f32 %v584, %v584
      %v1241 = vmul.f32 %v585, %v585
      %v1242 = vmul.f32 %v586, %v586
      %v1243 = vmul.f32 %v587, %v587
      %v1244 = vmul.f32 %v588, %v588
      %v1245 = vmul.f32 %v589, %v589
      %v1246 = vmul.f32 %v590, %v590
      %v1247 = vmul.f32 %v591, %v591
      %v1248 = vmul.f32 %v592, %v592
      %v1249 = vmul.f32 %v593, %v593
      %v1250 = vmul.f32 %v594, %v594
      %v1251 = vmul.f32 %v595, %v595
      %v1252 = vmul.f32 %v596, %v596
      %v1253 = vmul.f32 %v597, %v597
      %v1254 = vmul.f32 %v598, %v598
      %v1255 = vmul.f32 %v599, %v599
      %v1256 = vmul.f32 %v600, %v600
      %v1257 = vmul.f32 %v601, %v601
      %v1258 = vmul.f32 %v602, %v602
      %v1259 = vmul.f32 %v603, %v603
      %v1260 = vmul.f32 %v604, %v604
      %v1261 = vmul.f32 %v605, %v605
      %v1262 = vmul.f32 %v606, %v606
      %v1263 = vmul.f32 %v607, %v607
      %v1264 = vmul.f32 %v608, %v608
      %v1265 = vmul.f32 %v609, %v609
      %v1266 = vmul.f32 %v610, %v610
      %v1267 = vmul.f32 %v611, %v611
      %v1268 = vmul.f32 %v612, %v612
      %v1269 = vmul.f32 %v749, %v749
      %v1270 = vmul.f32 %v750, %v750
      %v1271 = vmul.f32 %v751, %v751
      %v1272 = vmul.f32 %v752, %v752
      %v1273 = vmul.f32 %v753, %v753
      %v1274 = vmul.f32 %v754, %v754
      %v1275 = vmul.f32 %v755, %v755
      %v1276 = vmul.f32 %v756, %v756
      %v1277 = vmul.f32 %v757, %v757
      %v1278 = vmul.f32 %v758, %v758
      %v1279 = vmul.f32 %v759, %v759
      %v1280 = vmul.f32 %v760, %v760
      %v1281 = vmul.f32 %v761, %v761
      %v1282 = vmul.f32 %v762, %v762
      %v1283 = vmul.f32 %v763, %v763
      %v1284 = vmul.f32 %v764, %v764
      %v1285 = vmul.f32 %v765, %v765
      %v1286 = vmul.f32 %v766, %v766
      %v1287 = vmul.f32 %v767, %v767
      %v1288 = vmul.f32 %v768, %v768
      %v1289 = vmul.f32 %v769, %v769
      %v1290 = vmul.f32 %v770, %v770
      %v1291 = vmul.f32 %v771, %v771
      %v1292 = vmul.f32 %v772, %v772
      %v1293 = vmul.f32 %v773, %v773
      %v1294 = vmul.f32 %v774, %v774
      %v1295 = vmul.f32 %v775, %v775
      %v1296 = vmul.f32 %v776, %v776
      %v1297 = vmul.f32 %v777, %v777
      %v1298 = vmul.f32 %v778, %v778
      %v1299 = vmul.f32 %v779, %v779
      %v1300 = vmul.f32 %v780, %v780
      %v1301 = vmul.f32 %v781, %v781
      %v1302 = vmul.f32 %v782, %v782
      %v1303 = vmul.f32 %v783, %v783
      %v1304 = vmul.f32 %v784, %v784
      %v1305 = vmul.f32 %v785, %v785
      %v1306 = vmul.f32 %v786, %v786
      %v1307 = vmul.f32 %v787, %v787
      %v1308 = vmul.f32 %v788, %v788
      %v1309 = vmul.f32 %v789, %v789
      %v1310 = vmul.f32 %v790, %v790
      %v1311 = vmul.f32 %v791, %v791
      %v1312 = vmul.f32 %v792, %v792
      %v1313 = vmul.f32 %v793, %v793
      %v1314 = vmul.f32 %v794, %v794
      %v1315 = vmul.f32 %v795, %v795
      %v1316 = vmul.f32 %v796, %v796
      %v1317 = vmul.f32 %v797, %v797
      %v1318 = vmul.f32 %v798, %v798
      %v1319 = vmul.f32 %v799, %v799
      %v1320 = vmul.f32 %v800, %v800
      %v1321 = vmul.f32 %v801, %v801
      %v1322 = vmul.f32 %v802, %v802
      %v1323 = vmul.f32 %v803, %v803
      %v1324 = vmul.f32 %v804, %v804
      %v1325 = vmul.f32 %v805, %v805
      %v1326 = vmul.f32 %v806, %v806
      %v1327 = vmul.f32 %v807, %v807
      %v1328 = vmul.f32 %v808, %v808
      %v1329 = vmul.f32 %v809, %v809
      %v1330 = vmul.f32 %v810, %v810
      %v1331 = vmul.f32 %v811, %v811
      %v1332 = vmul.f32 %v812, %v812
      %v1333 = vmul.f32 %v813, %v813
      %v1334 = vmul.f32 %v814, %v814
      %v1335 = vmul.f32 %v815, %v815
      %v1336 = vmul.f32 %v816, %v816
      %v1337 = vmul.f32 %v817, %v817
      %v1338 = vmul.f32 %v818, %v818
      %v1339 = vmul.f32 %v819, %v819
      %v1340 = vmul.f32 %v820, %v820
      %v1341 = vmul.f32 %v821, %v821
      %v1342 = vmul.f32 %v822, %v822
      %v1343 = vmul.f32 %v823, %v823
      %v1344 = vmul.f32 %v824, %v824
      %v1345 = vmul.f32 %v825, %v825
      %v1346 = vmul.f32 %v826, %v826
      %v1347 = vmul.f32 %v827, %v827
      %v1348 = vmul.f32 %v828, %v828
      %v1349 = vmul.f32 %v829, %v829
      %v1350 = vmul.f32 %v830, %v830
      %v1351 = vmul.f32 %v831, %v831
      %v1352 = vmul.f32 %v832, %v832
      %v1353 = vmul.f32 %v833, %v833
      %v1354 = vmul.f32 %v834, %v834
      %v1355 = vmul.f32 %v835, %v835
      %v1356 = vmul.f32 %v836, %v836
      %v1357 = vmul.f32 %v837, %v837
      %v1358 = vmul.f32 %v838, %v838
      %v1359 = vmul.f32 %v839, %v839
      %v1360 = vmul.f32 %v840, %v840
      %v1361 = vmul.f32 %v841, %v841
      %v1362 = vmul.f32 %v842, %v842
      %v1363 = vmul.f32 %v843, %v843
      %v1364 = vmul.f32 %v844, %v844
      %v1365 = vmul.f32 %v845, %v845
      %v1366 = vmul.f32 %v846, %v846
      %v1367 = vmul.f32 %v847, %v847
      %v1368 = vmul.f32 %v848, %v848
      %v1369 = vmul.f32 %v849, %v849
      %v1370 = vmul.f32 %v850, %v850
      %v1371 = vmul.f32 %v851, %v851
      %v1372 = vmul.f32 %v852, %v852
      %v1373 = vmul.f32 %v853, %v853
      %v1374 = vmul.f32 %v854, %v854
      %v1375 = vmul.f32 %v855, %v855
      %v1376 = vmul.f32 %v856, %v856
      %v1377 = vmul.f32 %v857, %v857
      %v1378 = vmul.f32 %v858, %v858
      %v1379 = vmul.f32 %v859, %v859
      %v1380 = vmul.f32 %v860, %v860
      %v1381 = vmul.f32 %v861, %v861
      %v1382 = vmul.f32 %v862, %v862
      %v1383 = vmul.f32 %v863, %v863
      %v1384 = vmul.f32 %v864, %v864
      %v1385 = vmul.f32 %v865, %v865
      %v1386 = vmul.f32 %v866, %v866
      %v1387 = vmul.f32 %v867, %v867
      %v1388 = vmul.f32 %v868, %v868
      %v1389 = vmul.f32 %v869, %v869
      %v1390 = vmul.f32 %v870, %v870
      %v1391 = vmul.f32 %v871, %v871
      %v1392 = vmul.f32 %v872, %v872
      %v1393 = vmul.f32 %v873, %v873
      %v1394 = vmul.f32 %v874, %v874
      %v1395 = vmul.f32 %v875, %v875
      %v1396 = vmul.f32 %v876, %v876
      %v1397 = vadd.f32 %v1141, %v1269
      %v1398 = vadd.f32 %v1142, %v1270
      %v1399 = vadd.f32 %v1143, %v1271
      %v1400 = vadd.f32 %v1144, %v1272
      %v1401 = vadd.f32 %v1145, %v1273
      %v1402 = vadd.f32 %v1146, %v1274
      %v1403 = vadd.f32 %v1147, %v1275
      %v1404 = vadd.f32 %v1148, %v1276
      %v1405 = vadd.f32 %v1149, %v1277
      %v1406 = vadd.f32 %v1150, %v1278
      %v1407 = vadd.f32 %v1151, %v1279
      %v1408 = vadd.f32 %v1152, %v1280
      %v1409 = vadd.f32 %v1153, %v1281
      %v1410 = vadd.f32 %v1154, %v1282
      %v1411 = vadd.f32 %v1155, %v1283
      %v1412 = vadd.f32 %v1156, %v1284
      %v1413 = vadd.f32 %v1157, %v1285
      %v1414 = vadd.f32 %v1158, %v1286
      %v1415 = vadd.f32 %v1159, %v1287
      %v1416 = vadd.f32 %v1160, %v1288
      %v1417 = vadd.f32 %v1161, %v1289
      %v1418 = vadd.f32 %v1162, %v1290
      %v1419 = vadd.f32 %v1163, %v1291
      %v1420 = vadd.f32 %v1164, %v1292
      %v1421 = vadd.f32 %v1165, %v1293
      %v1422 = vadd.f32 %v1166, %v1294
      %v1423 = vadd.f32 %v1167, %v1295
      %v1424 = vadd.f32 %v1168, %v1296
      %v1425 = vadd.f32 %v1169, %v1297
      %v1426 = vadd.f32 %v1170, %v1298
      %v1427 = vadd.f32 %v1171, %v1299
      %v1428 = vadd.f32 %v1172, %v1300
      %v1429 = vadd.f32 %v1173, %v1301
      %v1430 = vadd.f32 %v1174, %v1302
      %v1431 = vadd.f32 %v1175, %v1303
      %v1432 = vadd.f32 %v1176, %v1304
      %v1433 = vadd.f32 %v1177, %v1305
      %v1434 = vadd.f32 %v1178, %v1306
      %v1435 = vadd.f32 %v1179, %v1307
      %v1436 = vadd.f32 %v1180, %v1308
      %v1437 = vadd.f32 %v1181, %v1309
      %v1438 = vadd.f32 %v1182, %v1310
      %v1439 = vadd.f32 %v1183, %v1311
      %v1440 = vadd.f32 %v1184, %v1312
      %v1441 = vadd.f32 %v1185, %v1313
      %v1442 = vadd.f32 %v1186, %v1314
      %v1443 = vadd.f32 %v1187, %v1315
      %v1444 = vadd.f32 %v1188, %v1316
      %v1445 = vadd.f32 %v1189, %v1317
      %v1446 = vadd.f32 %v1190, %v1318
      %v1447 = vadd.f32 %v1191, %v1319
      %v1448 = vadd.f32 %v1192, %v1320
      %v1449 = vadd.f32 %v1193, %v1321
      %v1450 = vadd.f32 %v1194, %v1322
      %v1451 = vadd.f32 %v1195, %v1323
      %v1452 = vadd.f32 %v1196, %v1324
      %v1453 = vadd.f32 %v1197, %v1325
      %v1454 = vadd.f32 %v1198, %v1326
      %v1455 = vadd.f32 %v1199, %v1327
      %v1456 = vadd.f32 %v1200, %v1328
      %v1457 = vadd.f32 %v1201, %v1329
      %v1458 = vadd.f32 %v1202, %v1330
      %v1459 = vadd.f32 %v1203, %v1331
      %v1460 = vadd.f32 %v1204, %v1332
      %v1461 = vadd.f32 %v1205, %v1333
      %v1462 = vadd.f32 %v1206, %v1334
      %v1463 = vadd.f32 %v1207, %v1335
      %v1464 = vadd.f32 %v1208, %v1336
      %v1465 = vadd.f32 %v1209, %v1337
      %v1466 = vadd.f32 %v1210, %v1338
      %v1467 = vadd.f32 %v1211, %v1339
      %v1468 = vadd.f32 %v1212, %v1340
      %v1469 = vadd.f32 %v1213, %v1341
      %v1470 = vadd.f32 %v1214, %v1342
      %v1471 = vadd.f32 %v1215, %v1343
      %v1472 = vadd.f32 %v1216, %v1344
      %v1473 = vadd.f32 %v1217, %v1345
      %v1474 = vadd.f32 %v1218, %v1346
      %v1475 = vadd.f32 %v1219, %v1347
      %v1476 = vadd.f32 %v1220, %v1348
      %v1477 = vadd.f32 %v1221, %v1349
      %v1478 = vadd.f32 %v1222, %v1350
      %v1479 = vadd.f32 %v1223, %v1351
      %v1480 = vadd.f32 %v1224, %v1352
      %v1481 = vadd.f32 %v1225, %v1353
      %v1482 = vadd.f32 %v1226, %v1354
      %v1483 = vadd.f32 %v1227, %v1355
      %v1484 = vadd.f32 %v1228, %v1356
      %v1485 = vadd.f32 %v1229, %v1357
      %v1486 = vadd.f32 %v1230, %v1358
      %v1487 = vadd.f32 %v1231, %v1359
      %v1488 = vadd.f32 %v1232, %v1360
      %v1489 = vadd.f32 %v1233, %v1361
      %v1490 = vadd.f32 %v1234, %v1362
      %v1491 = vadd.f32 %v1235, %v1363
      %v1492 = vadd.f32 %v1236, %v1364
      %v1493 = vadd.f32 %v1237, %v1365
      %v1494 = vadd.f32 %v1238, %v1366
      %v1495 = vadd.f32 %v1239, %v1367
      %v1496 = vadd.f32 %v1240, %v1368
      %v1497 = vadd.f32 %v1241, %v1369
      %v1498 = vadd.f32 %v1242, %v1370
      %v1499 = vadd.f32 %v1243, %v1371
      %v1500 = vadd.f32 %v1244, %v1372
      %v1501 = vadd.f32 %v1245, %v1373
      %v1502 = vadd.f32 %v1246, %v1374
      %v1503 = vadd.f32 %v1247, %v1375
      %v1504 = vadd.f32 %v1248, %v1376
      %v1505 = vadd.f32 %v1249, %v1377
      %v1506 = vadd.f32 %v1250, %v1378
      %v1507 = vadd.f32 %v1251, %v1379
      %v1508 = vadd.f32 %v1252, %v1380
      %v1509 = vadd.f32 %v1253, %v1381
      %v1510 = vadd.f32 %v1254, %v1382
      %v1511 = vadd.f32 %v1255, %v1383
      %v1512 = vadd.f32 %v1256, %v1384
      %v1513 = vadd.f32 %v1257, %v1385
      %v1514 = vadd.f32 %v1258, %v1386
      %v1515 = vadd.f32 %v1259, %v1387
      %v1516 = vadd.f32 %v1260, %v1388
      %v1517 = vadd.f32 %v1261, %v1389
      %v1518 = vadd.f32 %v1262, %v1390
      %v1519 = vadd.f32 %v1263, %v1391
      %v1520 = vadd.f32 %v1264, %v1392
      %v1521 = vadd.f32 %v1265, %v1393
      %v1522 = vadd.f32 %v1266, %v1394
      %v1523 = vadd.f32 %v1267, %v1395
      %v1524 = vadd.f32 %v1268, %v1396
      %v1525 = vmul.f32 %v1013, %v1013
      %v1526 = vmul.f32 %v1014, %v1014
      %v1527 = vmul.f32 %v1015, %v1015
      %v1528 = vmul.f32 %v1016, %v1016
      %v1529 = vmul.f32 %v1017, %v1017
      %v1530 = vmul.f32 %v1018, %v1018
      %v1531 = vmul.f32 %v1019, %v1019
      %v1532 = vmul.f32 %v1020, %v1020
      %v1533 = vmul.f32 %v1021, %v1021
      %v1534 = vmul.f32 %v1022, %v1022
      %v1535 = vmul.f32 %v1023, %v1023
      %v1536 = vmul.f32 %v1024, %v1024
      %v1537 = vmul.f32 %v1025, %v1025
      %v1538 = vmul.f32 %v1026, %v1026
      %v1539 = vmul.f32 %v1027, %v1027
      %v1540 = vmul.f32 %v1028, %v1028
      %v1541 = vmul.f32 %v1029, %v1029
      %v1542 = vmul.f32 %v1030, %v1030
      %v1543 = vmul.f32 %v1031, %v1031
      %v1544 = vmul.f32 %v1032, %v1032
      %v1545 = vmul.f32 %v1033, %v1033
      %v1546 = vmul.f32 %v1034, %v1034
      %v1547 = vmul.f32 %v1035, %v1035
      %v1548 = vmul.f32 %v1036, %v1036
      %v1549 = vmul.f32 %v1037, %v1037
      %v1550 = vmul.f32 %v1038, %v1038
      %v1551 = vmul.f32 %v1039, %v1039
      %v1552 = vmul.f32 %v1040, %v1040
      %v1553 = vmul.f32 %v1041, %v1041
      %v1554 = vmul.f32 %v1042, %v1042
      %v1555 = vmul.f32 %v1043, %v1043
      %v1556 = vmul.f32 %v1044, %v1044
      %v1557 = vmul.f32 %v1045, %v1045
      %v1558 = vmul.f32 %v1046, %v1046
      %v1559 = vmul.f32 %v1047, %v1047
      %v1560 = vmul.f32 %v1048, %v1048
      %v1561 = vmul.f32 %v1049, %v1049
      %v1562 = vmul.f32 %v1050, %v1050
      %v1563 = vmul.f32 %v1051, %v1051
      %v1564 = vmul.f32 %v1052, %v1052
      %v1565 = vmul.f32 %v1053, %v1053
      %v1566 = vmul.f32 %v1054, %v1054
      %v1567 = vmul.f32 %v1055, %v1055
      %v1568 = vmul.f32 %v1056, %v1056
      %v1569 = vmul.f32 %v1057, %v1057
      %v1570 = vmul.f32 %v1058, %v1058
      %v1571 = vmul.f32 %v1059, %v1059
      %v1572 = vmul.f32 %v1060, %v1060
      %v1573 = vmul.f32 %v1061, %v1061
      %v1574 = vmul.f32 %v1062, %v1062
      %v1575 = vmul.f32 %v1063, %v1063
      %v1576 = vmul.f32 %v1064, %v1064
      %v1577 = vmul.f32 %v1065, %v1065
      %v1578 = vmul.f32 %v1066, %v1066
      %v1579 = vmul.f32 %v1067, %v1067
      %v1580 = vmul.f32 %v1068, %v1068
      %v1581 = vmul.f32 %v1069, %v1069
      %v1582 = vmul.f32 %v1070, %v1070
      %v1583 = vmul.f32 %v1071, %v1071
      %v1584 = vmul.f32 %v1072, %v1072
      %v1585 = vmul.f32 %v1073, %v1073
      %v1586 = vmul.f32 %v1074, %v1074
      %v1587 = vmul.f32 %v1075, %v1075
      %v1588 = vmul.f32 %v1076, %v1076
      %v1589 = vmul.f32 %v1077, %v1077
      %v1590 = vmul.f32 %v1078, %v1078
      %v1591 = vmul.f32 %v1079, %v1079
      %v1592 = vmul.f32 %v1080, %v1080
      %v1593 = vmul.f32 %v1081, %v1081
      %v1594 = vmul.f32 %v1082, %v1082
      %v1595 = vmul.f32 %v1083, %v1083
      %v1596 = vmul.f32 %v1084, %v1084
      %v1597 = vmul.f32 %v1085, %v1085
      %v1598 = vmul.f32 %v1086, %v1086
      %v1599 = vmul.f32 %v1087, %v1087
      %v1600 = vmul.f32 %v1088, %v1088
      %v1601 = vmul.f32 %v1089, %v1089
      %v1602 = vmul.f32 %v1090, %v1090
      %v1603 = vmul.f32 %v1091, %v1091
      %v1604 = vmul.f32 %v1092, %v1092
      %v1605 = vmul.f32 %v1093, %v1093
      %v1606 = vmul.f32 %v1094, %v1094
      %v1607 = vmul.f32 %v1095, %v1095
      %v1608 = vmul.f32 %v1096, %v1096
      %v1609 = vmul.f32 %v1097, %v1097
      %v1610 = vmul.f32 %v1098, %v1098
      %v1611 = vmul.f32 %v1099, %v1099
      %v1612 = vmul.f32 %v1100, %v1100
      %v1613 = vmul.f32 %v1101, %v1101
      %v1614 = vmul.f32 %v1102, %v1102
      %v1615 = vmul.f32 %v1103, %v1103
      %v1616 = vmul.f32 %v1104, %v1104
      %v1617 = vmul.f32 %v1105, %v1105
      %v1618 = vmul.f32 %v1106, %v1106
      %v1619 = vmul.f32 %v1107, %v1107
      %v1620 = vmul.f32 %v1108, %v1108
      %v1621 = vmul.f32 %v1109, %v1109
      %v1622 = vmul.f32 %v1110, %v1110
      %v1623 = vmul.f32 %v1111, %v1111
      %v1624 = vmul.f32 %v1112, %v1112
      %v1625 = vmul.f32 %v1113, %v1113
      %v1626 = vmul.f32 %v1114, %v1114
      %v1627 = vmul.f32 %v1115, %v1115
      %v1628 = vmul.f32 %v1116, %v1116
      %v1629 = vmul.f32 %v1117, %v1117
      %v1630 = vmul.f32 %v1118, %v1118
      %v1631 = vmul.f32 %v1119, %v1119
      %v1632 = vmul.f32 %v1120, %v1120
      %v1633 = vmul.f32 %v1121, %v1121
      %v1634 = vmul.f32 %v1122, %v1122
      %v1635 = vmul.f32 %v1123, %v1123
      %v1636 = vmul.f32 %v1124, %v1124
      %v1637 = vmul.f32 %v1125, %v1125
      %v1638 = vmul.f32 %v1126, %v1126
      %v1639 = vmul.f32 %v1127, %v1127
      %v1640 = vmul.f32 %v1128, %v1128
      %v1641 = vmul.f32 %v1129, %v1129
      %v1642 = vmul.f32 %v1130, %v1130
      %v1643 = vmul.f32 %v1131, %v1131
      %v1644 = vmul.f32 %v1132, %v1132
      %v1645 = vmul.f32 %v1133, %v1133
      %v1646 = vmul.f32 %v1134, %v1134
      %v1647 = vmul.f32 %v1135, %v1135
      %v1648 = vmul.f32 %v1136, %v1136
      %v1649 = vmul.f32 %v1137, %v1137
      %v1650 = vmul.f32 %v1138, %v1138
      %v1651 = vmul.f32 %v1139, %v1139
      %v1652 = vmul.f32 %v1140, %v1140
      %v1653 = vadd.f32 %v1397, %v1525
      %v1654 = vadd.f32 %v1398, %v1526
      %v1655 = vadd.f32 %v1399, %v1527
      %v1656 = vadd.f32 %v1400, %v1528
      %v1657 = vadd.f32 %v1401, %v1529
      %v1658 = vadd.f32 %v1402, %v1530
      %v1659 = vadd.f32 %v1403, %v1531
      %v1660 = vadd.f32 %v1404, %v1532
      %v1661 = vadd.f32 %v1405, %v1533
      %v1662 = vadd.f32 %v1406, %v1534
      %v1663 = vadd.f32 %v1407, %v1535
      %v1664 = vadd.f32 %v1408, %v1536
      %v1665 = vadd.f32 %v1409, %v1537
      %v1666 = vadd.f32 %v1410, %v1538
      %v1667 = vadd.f32 %v1411, %v1539
      %v1668 = vadd.f32 %v1412, %v1540
      %v1669 = vadd.f32 %v1413, %v1541
      %v1670 = vadd.f32 %v1414, %v1542
      %v1671 = vadd.f32 %v1415, %v1543
      %v1672 = vadd.f32 %v1416, %v1544
      %v1673 = vadd.f32 %v1417, %v1545
      %v1674 = vadd.f32 %v1418, %v1546
      %v1675 = vadd.f32 %v1419, %v1547
      %v1676 = vadd.f32 %v1420, %v1548
      %v1677 = vadd.f32 %v1421, %v1549
      %v1678 = vadd.f32 %v1422, %v1550
      %v1679 = vadd.f32 %v1423, %v1551
      %v1680 = vadd.f32 %v1424, %v1552
      %v1681 = vadd.f32 %v1425, %v1553
      %v1682 = vadd.f32 %v1426, %v1554
      %v1683 = vadd.f32 %v1427, %v1555
      %v1684 = vadd.f32 %v1428, %v1556
      %v1685 = vadd.f32 %v1429, %v1557
      %v1686 = vadd.f32 %v1430, %v1558
      %v1687 = vadd.f32 %v1431, %v1559
      %v1688 = vadd.f32 %v1432, %v1560
      %v1689 = vadd.f32 %v1433, %v1561
      %v1690 = vadd.f32 %v1434, %v1562
      %v1691 = vadd.f32 %v1435, %v1563
      %v1692 = vadd.f32 %v1436, %v1564
      %v1693 = vadd.f32 %v1437, %v1565
      %v1694 = vadd.f32 %v1438, %v1566
      %v1695 = vadd.f32 %v1439, %v1567
      %v1696 = vadd.f32 %v1440, %v1568
      %v1697 = vadd.f32 %v1441, %v1569
      %v1698 = vadd.f32 %v1442, %v1570
      %v1699 = vadd.f32 %v1443, %v1571
      %v1700 = vadd.f32 %v1444, %v1572
      %v1701 = vadd.f32 %v1445, %v1573
      %v1702 = vadd.f32 %v1446, %v1574
      %v1703 = vadd.f32 %v1447, %v1575
      %v1704 = vadd.f32 %v1448, %v1576
      %v1705 = vadd.f32 %v1449, %v1577
      %v1706 = vadd.f32 %v1450, %v1578
      %v1707 = vadd.f32 %v1451, %v1579
      %v1708 = vadd.f32 %v1452, %v1580
      %v1709 = vadd.f32 %v1453, %v1581
      %v1710 = vadd.f32 %v1454, %v1582
      %v1711 = vadd.f32 %v1455, %v1583
      %v1712 = vadd.f32 %v1456, %v1584
      %v1713 = vadd.f32 %v1457, %v1585
      %v1714 = vadd.f32 %v1458, %v1586
      %v1715 = vadd.f32 %v1459, %v1587
      %v1716 = vadd.f32 %v1460, %v1588
      %v1717 = vadd.f32 %v1461, %v1589
      %v1718 = vadd.f32 %v1462, %v1590
      %v1719 = vadd.f32 %v1463, %v1591
      %v1720 = vadd.f32 %v1464, %v1592
      %v1721 = vadd.f32 %v1465, %v1593
      %v1722 = vadd.f32 %v1466, %v1594
      %v1723 = vadd.f32 %v1467, %v1595
      %v1724 = vadd.f32 %v1468, %v1596
      %v1725 = vadd.f32 %v1469, %v1597
      %v1726 = vadd.f32 %v1470, %v1598
      %v1727 = vadd.f32 %v1471, %v1599
      %v1728 = vadd.f32 %v1472, %v1600
      %v1729 = vadd.f32 %v1473, %v1601
      %v1730 = vadd.f32 %v1474, %v1602
      %v1731 = vadd.f32 %v1475, %v1603
      %v1732 = vadd.f32 %v1476, %v1604
      %v1733 = vadd.f32 %v1477, %v1605
      %v1734 = vadd.f32 %v1478, %v1606
      %v1735 = vadd.f32 %v1479, %v1607
      %v1736 = vadd.f32 %v1480, %v1608
      %v1737 = vadd.f32 %v1481, %v1609
      %v1738 = vadd.f32 %v1482, %v1610
      %v1739 = vadd.f32 %v1483, %v1611
      %v1740 = vadd.f32 %v1484, %v1612
      %v1741 = vadd.f32 %v1485, %v1613
      %v1742 = vadd.f32 %v1486, %v1614
      %v1743 = vadd.f32 %v1487, %v1615
      %v1744 = vadd.f32 %v1488, %v1616
      %v1745 = vadd.f32 %v1489, %v1617
      %v1746 = vadd.f32 %v1490, %v1618
      %v1747 = vadd.f32 %v1491, %v1619
      %v1748 = vadd.f32 %v1492, %v1620
      %v1749 = vadd.f32 %v1493, %v1621
      %v1750 = vadd.f32 %v1494, %v1622
      %v1751 = vadd.f32 %v1495, %v1623
      %v1752 = vadd.f32 %v1496, %v1624
      %v1753 = vadd.f32 %v1497, %v1625
      %v1754 = vadd.f32 %v1498, %v1626
      %v1755 = vadd.f32 %v1499, %v1627
      %v1756 = vadd.f32 %v1500, %v1628
      %v1757 = vadd.f32 %v1501, %v1629
      %v1758 = vadd.f32 %v1502, %v1630
      %v1759 = vadd.f32 %v1503, %v1631
      %v1760 = vadd.f32 %v1504, %v1632
      %v1761 = vadd.f32 %v1505, %v1633
      %v1762 = vadd.f32 %v1506, %v1634
      %v1763 = vadd.f32 %v1507, %v1635
      %v1764 = vadd.f32 %v1508, %v1636
      %v1765 = vadd.f32 %v1509, %v1637
      %v1766 = vadd.f32 %v1510, %v1638
      %v1767 = vadd.f32 %v1511, %v1639
      %v1768 = vadd.f32 %v1512, %v1640
      %v1769 = vadd.f32 %v1513, %v1641
      %v1770 = vadd.f32 %v1514, %v1642
      %v1771 = vadd.f32 %v1515, %v1643
      %v1772 = vadd.f32 %v1516, %v1644
      %v1773 = vadd.f32 %v1517, %v1645
      %v1774 = vadd.f32 %v1518, %v1646
      %v1775 = vadd.f32 %v1519, %v1647
      %v1776 = vadd.f32 %v1520, %v1648
      %v1777 = vadd.f32 %v1521, %v1649
      %v1778 = vadd.f32 %v1522, %v1650
      %v1779 = vadd.f32 %v1523, %v1651
      %v1780 = vadd.f32 %v1524, %v1652
      %v1781 = vlaneseq
      %v1782 = vshrl.u32 %v1781, 7
      %v1783 = vadd.s32 %v1782, 8
      %v1784 = vadd.s32 %v1782, 16
      %v1785 = vadd.s32 %v1782, 24
      %v1786 = vadd.s32 %v1782, 32
      %v1787 = vadd.s32 %v1782, 40
      %v1788 = vadd.s32 %v1782, 48
      %v1789 = vadd.s32 %v1782, 56
      %v1790 = vadd.s32 %v1782, 64
      %v1791 = vadd.s32 %v1782, 72
      %v1792 = vadd.s32 %v1782, 80
      %v1793 = vadd.s32 %v1782, 88
      %v1794 = vadd.s32 %v1782, 96
      %v1795 = vadd.s32 %v1782, 104
      %v1796 = vadd.s32 %v1782, 112
      %v1797 = vadd.s32 %v1782, 120
      %v1798 = vlaneseq
      %v1799 = vand.u32 %v1798, 127
      %v1800 = vadd.s32 %v1799, 128
      %v1801 = vadd.s32 %v1799, 256
      %v1802 = vadd.s32 %v1799, 384
      %v1803 = vadd.s32 %v1799, 512
      %v1804 = vadd.s32 %v1799, 640
      %v1805 = vadd.s32 %v1799, 768
      %v1806 = vadd.s32 %v1799, 896
      %v1807 = vsub.s32 %v1782, %v1799
      %v1808 = vsub.s32 %v1782, %v1800
      %v1809 = vsub.s32 %v1782, %v1801
      %v1810 = vsub.s32 %v1782, %v1802
      %v1811 = vsub.s32 %v1782, %v1803
      %v1812 = vsub.s32 %v1782, %v1804
      %v1813 = vsub.s32 %v1782, %v1805
      %v1814 = vsub.s32 %v1782, %v1806
      %v1815 = vsub.s32 %v1783, %v1799
      %v1816 = vsub.s32 %v1783, %v1800
      %v1817 = vsub.s32 %v1783, %v1801
      %v1818 = vsub.s32 %v1783, %v1802
      %v1819 = vsub.s32 %v1783, %v1803
      %v1820 = vsub.s32 %v1783, %v1804
      %v1821 = vsub.s32 %v1783, %v1805
      %v1822 = vsub.s32 %v1783, %v1806
      %v1823 = vsub.s32 %v1784, %v1799
      %v1824 = vsub.s32 %v1784, %v1800
      %v1825 = vsub.s32 %v1784, %v1801
      %v1826 = vsub.s32 %v1784, %v1802
      %v1827 = vsub.s32 %v1784, %v1803
      %v1828 = vsub.s32 %v1784, %v1804
      %v1829 = vsub.s32 %v1784, %v1805
      %v1830 = vsub.s32 %v1784, %v1806
      %v1831 = vsub.s32 %v1785, %v1799
      %v1832 = vsub.s32 %v1785, %v1800
      %v1833 = vsub.s32 %v1785, %v1801
      %v1834 = vsub.s32 %v1785, %v1802
      %v1835 = vsub.s32 %v1785, %v1803
      %v1836 = vsub.s32 %v1785, %v1804
      %v1837 = vsub.s32 %v1785, %v1805
      %v1838 = vsub.s32 %v1785, %v1806
      %v1839 = vsub.s32 %v1786, %v1799
      %v1840 = vsub.s32 %v1786, %v1800
      %v1841 = vsub.s32 %v1786, %v1801
      %v1842 = vsub.s32 %v1786, %v1802
      %v1843 = vsub.s32 %v1786, %v1803
      %v1844 = vsub.s32 %v1786, %v1804
      %v1845 = vsub.s32 %v1786, %v1805
      %v1846 = vsub.s32 %v1786, %v1806
      %v1847 = vsub.s32 %v1787, %v1799
      %v1848 = vsub.s32 %v1787, %v1800
      %v1849 = vsub.s32 %v1787, %v1801
      %v1850 = vsub.s32 %v1787, %v1802
      %v1851 = vsub.s32 %v1787, %v1803
      %v1852 = vsub.s32 %v1787, %v1804
      %v1853 = vsub.s32 %v1787, %v1805
      %v1854 = vsub.s32 %v1787, %v1806
      %v1855 = vsub.s32 %v1788, %v1799
      %v1856 = vsub.s32 %v1788, %v1800
      %v1857 = vsub.s32 %v1788, %v1801
      %v1858 = vsub.s32 %v1788, %v1802
      %v1859 = vsub.s32 %v1788, %v1803
      %v1860 = vsub.s32 %v1788, %v1804
      %v1861 = vsub.s32 %v1788, %v1805
      %v1862 = vsub.s32 %v1788, %v1806
      %v1863 = vsub.s32 %v1789, %v1799
      %v1864 = vsub.s32 %v1789, %v1800
      %v1865 = vsub.s32 %v1789, %v1801
      %v1866 = vsub.s32 %v1789, %v1802
      %v1867 = vsub.s32 %v1789, %v1803
      %v1868 = vsub.s32 %v1789, %v1804
      %v1869 = vsub.s32 %v1789, %v1805
      %v1870 = vsub.s32 %v1789, %v1806
      %v1871 = vsub.s32 %v1790, %v1799
      %v1872 = vsub.s32 %v1790, %v1800
      %v1873 = vsub.s32 %v1790, %v1801
      %v1874 = vsub.s32 %v1790, %v1802
      %v1875 = vsub.s32 %v1790, %v1803
      %v1876 = vsub.s32 %v1790, %v1804
      %v1877 = vsub.s32 %v1790, %v1805
      %v1878 = vsub.s32 %v1790, %v1806
      %v1879 = vsub.s32 %v1791, %v1799
      %v1880 = vsub.s32 %v1791, %v1800
      %v1881 = vsub.s32 %v1791, %v1801
      %v1882 = vsub.s32 %v1791, %v1802
      %v1883 = vsub.s32 %v1791, %v1803
      %v1884 = vsub.s32 %v1791, %v1804
      %v1885 = vsub.s32 %v1791, %v1805
      %v1886 = vsub.s32 %v1791, %v1806
      %v1887 = vsub.s32 %v1792, %v1799
      %v1888 = vsub.s32 %v1792, %v1800
      %v1889 = vsub.s32 %v1792, %v1801
      %v1890 = vsub.s32 %v1792, %v1802
      %v1891 = vsub.s32 %v1792, %v1803
      %v1892 = vsub.s32 %v1792, %v1804
      %v1893 = vsub.s32 %v1792, %v1805
      %v1894 = vsub.s32 %v1792, %v1806
      %v1895 = vsub.s32 %v1793, %v1799
      %v1896 = vsub.s32 %v1793, %v1800
      %v1897 = vsub.s32 %v1793, %v1801
      %v1898 = vsub.s32 %v1793, %v1802
      %v1899 = vsub.s32 %v1793, %v1803
      %v1900 = vsub.s32 %v1793, %v1804
      %v1901 = vsub.s32 %v1793, %v1805
      %v1902 = vsub.s32 %v1793, %v1806
      %v1903 = vsub.s32 %v1794, %v1799
      %v1904 = vsub.s32 %v1794, %v1800
      %v1905 = vsub.s32 %v1794, %v1801
      %v1906 = vsub.s32 %v1794, %v1802
      %v1907 = vsub.s32 %v1794, %v1803
      %v1908 = vsub.s32 %v1794, %v1804
      %v1909 = vsub.s32 %v1794, %v1805
      %v1910 = vsub.s32 %v1794, %v1806
      %v1911 = vsub.s32 %v1795, %v1799
      %v1912 = vsub.s32 %v1795, %v1800
      %v1913 = vsub.s32 %v1795, %v1801
      %v1914 = vsub.s32 %v1795, %v1802
      %v1915 = vsub.s32 %v1795, %v1803
      %v1916 = vsub.s32 %v1795, %v1804
      %v1917 = vsub.s32 %v1795, %v1805
      %v1918 = vsub.s32 %v1795, %v1806
      %v1919 = vsub.s32 %v1796, %v1799
      %v1920 = vsub.s32 %v1796, %v1800
      %v1921 = vsub.s32 %v1796, %v1801
      %v1922 = vsub.s32 %v1796, %v1802
      %v1923 = vsub.s32 %v1796, %v1803
      %v1924 = vsub.s32 %v1796, %v1804
      %v1925 = vsub.s32 %v1796, %v1805
      %v1926 = vsub.s32 %v1796, %v1806
      %v1927 = vsub.s32 %v1797, %v1799
      %v1928 = vsub.s32 %v1797, %v1800
      %v1929 = vsub.s32 %v1797, %v1801
      %v1930 = vsub.s32 %v1797, %v1802
      %v1931 = vsub.s32 %v1797, %v1803
      %v1932 = vsub.s32 %v1797, %v1804
      %v1933 = vsub.s32 %v1797, %v1805
      %v1934 = vsub.s32 %v1797, %v1806
      %s1935 = smul.u32 %s21, 1024
      %s1936 = smul.u32 %s20, 128
      %s1937 = ssub.s32 %s1935, %s1936
      %v1938 = vstv %s1937
      %vm1939 = vcmp.ne.s32.totalorder %v1807, %v1938
      %vm1940 = vcmp.ne.s32.totalorder %v1808, %v1938
      %vm1941 = vcmp.ne.s32.totalorder %v1809, %v1938
      %vm1942 = vcmp.ne.s32.totalorder %v1810, %v1938
      %vm1943 = vcmp.ne.s32.totalorder %v1811, %v1938
      %vm1944 = vcmp.ne.s32.totalorder %v1812, %v1938
      %vm1945 = vcmp.ne.s32.totalorder %v1813, %v1938
      %vm1946 = vcmp.ne.s32.totalorder %v1814, %v1938
      %vm1947 = vcmp.ne.s32.totalorder %v1815, %v1938
      %vm1948 = vcmp.ne.s32.totalorder %v1816, %v1938
      %vm1949 = vcmp.ne.s32.totalorder %v1817, %v1938
      %vm1950 = vcmp.ne.s32.totalorder %v1818, %v1938
      %vm1951 = vcmp.ne.s32.totalorder %v1819, %v1938
      %vm1952 = vcmp.ne.s32.totalorder %v1820, %v1938
      %vm1953 = vcmp.ne.s32.totalorder %v1821, %v1938
      %vm1954 = vcmp.ne.s32.totalorder %v1822, %v1938
      %vm1955 = vcmp.ne.s32.totalorder %v1823, %v1938
      %vm1956 = vcmp.ne.s32.totalorder %v1824, %v1938
      %vm1957 = vcmp.ne.s32.totalorder %v1825, %v1938
      %vm1958 = vcmp.ne.s32.totalorder %v1826, %v1938
      %vm1959 = vcmp.ne.s32.totalorder %v1827, %v1938
      %vm1960 = vcmp.ne.s32.totalorder %v1828, %v1938
      %vm1961 = vcmp.ne.s32.totalorder %v1829, %v1938
      %vm1962 = vcmp.ne.s32.totalorder %v1830, %v1938
      %vm1963 = vcmp.ne.s32.totalorder %v1831, %v1938
      %vm1964 = vcmp.ne.s32.totalorder %v1832, %v1938
      %vm1965 = vcmp.ne.s32.totalorder %v1833, %v1938
      %vm1966 = vcmp.ne.s32.totalorder %v1834, %v1938
      %vm1967 = vcmp.ne.s32.totalorder %v1835, %v1938
      %vm1968 = vcmp.ne.s32.totalorder %v1836, %v1938
      %vm1969 = vcmp.ne.s32.totalorder %v1837, %v1938
      %vm1970 = vcmp.ne.s32.totalorder %v1838, %v1938
      %vm1971 = vcmp.ne.s32.totalorder %v1839, %v1938
      %vm1972 = vcmp.ne.s32.totalorder %v1840, %v1938
      %vm1973 = vcmp.ne.s32.totalorder %v1841, %v1938
      %vm1974 = vcmp.ne.s32.totalorder %v1842, %v1938
      %vm1975 = vcmp.ne.s32.totalorder %v1843, %v1938
      %vm1976 = vcmp.ne.s32.totalorder %v1844, %v1938
      %vm1977 = vcmp.ne.s32.totalorder %v1845, %v1938
      %vm1978 = vcmp.ne.s32.totalorder %v1846, %v1938
      %vm1979 = vcmp.ne.s32.totalorder %v1847, %v1938
      %vm1980 = vcmp.ne.s32.totalorder %v1848, %v1938
      %vm1981 = vcmp.ne.s32.totalorder %v1849, %v1938
      %vm1982 = vcmp.ne.s32.totalorder %v1850, %v1938
      %vm1983 = vcmp.ne.s32.totalorder %v1851, %v1938
      %vm1984 = vcmp.ne.s32.totalorder %v1852, %v1938
      %vm1985 = vcmp.ne.s32.totalorder %v1853, %v1938
      %vm1986 = vcmp.ne.s32.totalorder %v1854, %v1938
      %vm1987 = vcmp.ne.s32.totalorder %v1855, %v1938
      %vm1988 = vcmp.ne.s32.totalorder %v1856, %v1938
      %vm1989 = vcmp.ne.s32.totalorder %v1857, %v1938
      %vm1990 = vcmp.ne.s32.totalorder %v1858, %v1938
      %vm1991 = vcmp.ne.s32.totalorder %v1859, %v1938
      %vm1992 = vcmp.ne.s32.totalorder %v1860, %v1938
      %vm1993 = vcmp.ne.s32.totalorder %v1861, %v1938
      %vm1994 = vcmp.ne.s32.totalorder %v1862, %v1938
      %vm1995 = vcmp.ne.s32.totalorder %v1863, %v1938
      %vm1996 = vcmp.ne.s32.totalorder %v1864, %v1938
      %vm1997 = vcmp.ne.s32.totalorder %v1865, %v1938
      %vm1998 = vcmp.ne.s32.totalorder %v1866, %v1938
      %vm1999 = vcmp.ne.s32.totalorder %v1867, %v1938
      %vm2000 = vcmp.ne.s32.totalorder %v1868, %v1938
      %vm2001 = vcmp.ne.s32.totalorder %v1869, %v1938
      %vm2002 = vcmp.ne.s32.totalorder %v1870, %v1938
      %vm2003 = vcmp.ne.s32.totalorder %v1871, %v1938
      %vm2004 = vcmp.ne.s32.totalorder %v1872, %v1938
      %vm2005 = vcmp.ne.s32.totalorder %v1873, %v1938
      %vm2006 = vcmp.ne.s32.totalorder %v1874, %v1938
      %vm2007 = vcmp.ne.s32.totalorder %v1875, %v1938
      %vm2008 = vcmp.ne.s32.totalorder %v1876, %v1938
      %vm2009 = vcmp.ne.s32.totalorder %v1877, %v1938
      %vm2010 = vcmp.ne.s32.totalorder %v1878, %v1938
      %vm2011 = vcmp.ne.s32.totalorder %v1879, %v1938
      %vm2012 = vcmp.ne.s32.totalorder %v1880, %v1938
      %vm2013 = vcmp.ne.s32.totalorder %v1881, %v1938
      %vm2014 = vcmp.ne.s32.totalorder %v1882, %v1938
      %vm2015 = vcmp.ne.s32.totalorder %v1883, %v1938
      %vm2016 = vcmp.ne.s32.totalorder %v1884, %v1938
      %vm2017 = vcmp.ne.s32.totalorder %v1885, %v1938
      %vm2018 = vcmp.ne.s32.totalorder %v1886, %v1938
      %vm2019 = vcmp.ne.s32.totalorder %v1887, %v1938
      %vm2020 = vcmp.ne.s32.totalorder %v1888, %v1938
      %vm2021 = vcmp.ne.s32.totalorder %v1889, %v1938
      %vm2022 = vcmp.ne.s32.totalorder %v1890, %v1938
      %vm2023 = vcmp.ne.s32.totalorder %v1891, %v1938
      %vm2024 = vcmp.ne.s32.totalorder %v1892, %v1938
      %vm2025 = vcmp.ne.s32.totalorder %v1893, %v1938
      %vm2026 = vcmp.ne.s32.totalorder %v1894, %v1938
      %vm2027 = vcmp.ne.s32.totalorder %v1895, %v1938
      %vm2028 = vcmp.ne.s32.totalorder %v1896, %v1938
      %vm2029 = vcmp.ne.s32.totalorder %v1897, %v1938
      %vm2030 = vcmp.ne.s32.totalorder %v1898, %v1938
      %vm2031 = vcmp.ne.s32.totalorder %v1899, %v1938
      %vm2032 = vcmp.ne.s32.totalorder %v1900, %v1938
      %vm2033 = vcmp.ne.s32.totalorder %v1901, %v1938
      %vm2034 = vcmp.ne.s32.totalorder %v1902, %v1938
      %vm2035 = vcmp.ne.s32.totalorder %v1903, %v1938
      %vm2036 = vcmp.ne.s32.totalorder %v1904, %v1938
      %vm2037 = vcmp.ne.s32.totalorder %v1905, %v1938
      %vm2038 = vcmp.ne.s32.totalorder %v1906, %v1938
      %vm2039 = vcmp.ne.s32.totalorder %v1907, %v1938
      %vm2040 = vcmp.ne.s32.totalorder %v1908, %v1938
      %vm2041 = vcmp.ne.s32.totalorder %v1909, %v1938
      %vm2042 = vcmp.ne.s32.totalorder %v1910, %v1938
      %vm2043 = vcmp.ne.s32.totalorder %v1911, %v1938
      %vm2044 = vcmp.ne.s32.totalorder %v1912, %v1938
      %vm2045 = vcmp.ne.s32.totalorder %v1913, %v1938
      %vm2046 = vcmp.ne.s32.totalorder %v1914, %v1938
      %vm2047 = vcmp.ne.s32.totalorder %v1915, %v1938
      %vm2048 = vcmp.ne.s32.totalorder %v1916, %v1938
      %vm2049 = vcmp.ne.s32.totalorder %v1917, %v1938
      %vm2050 = vcmp.ne.s32.totalorder %v1918, %v1938
      %vm2051 = vcmp.ne.s32.totalorder %v1919, %v1938
      %vm2052 = vcmp.ne.s32.totalorder %v1920, %v1938
      %vm2053 = vcmp.ne.s32.totalorder %v1921, %v1938
      %vm2054 = vcmp.ne.s32.totalorder %v1922, %v1938
      %vm2055 = vcmp.ne.s32.totalorder %v1923, %v1938
      %vm2056 = vcmp.ne.s32.totalorder %v1924, %v1938
      %vm2057 = vcmp.ne.s32.totalorder %v1925, %v1938
      %vm2058 = vcmp.ne.s32.totalorder %v1926, %v1938
      %vm2059 = vcmp.ne.s32.totalorder %v1927, %v1938
      %vm2060 = vcmp.ne.s32.totalorder %v1928, %v1938
      %vm2061 = vcmp.ne.s32.totalorder %v1929, %v1938
      %vm2062 = vcmp.ne.s32.totalorder %v1930, %v1938
      %vm2063 = vcmp.ne.s32.totalorder %v1931, %v1938
      %vm2064 = vcmp.ne.s32.totalorder %v1932, %v1938
      %vm2065 = vcmp.ne.s32.totalorder %v1933, %v1938
      %vm2066 = vcmp.ne.s32.totalorder %v1934, %v1938
      %vm2067 = vcmp.lt.f32.partialorder %v1653, 1.0
      %vm2068 = vcmp.lt.f32.partialorder %v1654, 1.0
      %vm2069 = vcmp.lt.f32.partialorder %v1655, 1.0
      %vm2070 = vcmp.lt.f32.partialorder %v1656, 1.0
      %vm2071 = vcmp.lt.f32.partialorder %v1657, 1.0
      %vm2072 = vcmp.lt.f32.partialorder %v1658, 1.0
      %vm2073 = vcmp.lt.f32.partialorder %v1659, 1.0
      %vm2074 = vcmp.lt.f32.partialorder %v1660, 1.0
      %vm2075 = vcmp.lt.f32.partialorder %v1661, 1.0
      %vm2076 = vcmp.lt.f32.partialorder %v1662, 1.0
      %vm2077 = vcmp.lt.f32.partialorder %v1663, 1.0
      %vm2078 = vcmp.lt.f32.partialorder %v1664, 1.0
      %vm2079 = vcmp.lt.f32.partialorder %v1665, 1.0
      %vm2080 = vcmp.lt.f32.partialorder %v1666, 1.0
      %vm2081 = vcmp.lt.f32.partialorder %v1667, 1.0
      %vm2082 = vcmp.lt.f32.partialorder %v1668, 1.0
      %vm2083 = vcmp.lt.f32.partialorder %v1669, 1.0
      %vm2084 = vcmp.lt.f32.partialorder %v1670, 1.0
      %vm2085 = vcmp.lt.f32.partialorder %v1671, 1.0
      %vm2086 = vcmp.lt.f32.partialorder %v1672, 1.0
      %vm2087 = vcmp.lt.f32.partialorder %v1673, 1.0
      %vm2088 = vcmp.lt.f32.partialorder %v1674, 1.0
      %vm2089 = vcmp.lt.f32.partialorder %v1675, 1.0
      %vm2090 = vcmp.lt.f32.partialorder %v1676, 1.0
      %vm2091 = vcmp.lt.f32.partialorder %v1677, 1.0
      %vm2092 = vcmp.lt.f32.partialorder %v1678, 1.0
      %vm2093 = vcmp.lt.f32.partialorder %v1679, 1.0
      %vm2094 = vcmp.lt.f32.partialorder %v1680, 1.0
      %vm2095 = vcmp.lt.f32.partialorder %v1681, 1.0
      %vm2096 = vcmp.lt.f32.partialorder %v1682, 1.0
      %vm2097 = vcmp.lt.f32.partialorder %v1683, 1.0
      %vm2098 = vcmp.lt.f32.partialorder %v1684, 1.0
      %vm2099 = vcmp.lt.f32.partialorder %v1685, 1.0
      %vm2100 = vcmp.lt.f32.partialorder %v1686, 1.0
      %vm2101 = vcmp.lt.f32.partialorder %v1687, 1.0
      %vm2102 = vcmp.lt.f32.partialorder %v1688, 1.0
      %vm2103 = vcmp.lt.f32.partialorder %v1689, 1.0
      %vm2104 = vcmp.lt.f32.partialorder %v1690, 1.0
      %vm2105 = vcmp.lt.f32.partialorder %v1691, 1.0
      %vm2106 = vcmp.lt.f32.partialorder %v1692, 1.0
      %vm2107 = vcmp.lt.f32.partialorder %v1693, 1.0
      %vm2108 = vcmp.lt.f32.partialorder %v1694, 1.0
      %vm2109 = vcmp.lt.f32.partialorder %v1695, 1.0
      %vm2110 = vcmp.lt.f32.partialorder %v1696, 1.0
      %vm2111 = vcmp.lt.f32.partialorder %v1697, 1.0
      %vm2112 = vcmp.lt.f32.partialorder %v1698, 1.0
      %vm2113 = vcmp.lt.f32.partialorder %v1699, 1.0
      %vm2114 = vcmp.lt.f32.partialorder %v1700, 1.0
      %vm2115 = vcmp.lt.f32.partialorder %v1701, 1.0
      %vm2116 = vcmp.lt.f32.partialorder %v1702, 1.0
      %vm2117 = vcmp.lt.f32.partialorder %v1703, 1.0
      %vm2118 = vcmp.lt.f32.partialorder %v1704, 1.0
      %vm2119 = vcmp.lt.f32.partialorder %v1705, 1.0
      %vm2120 = vcmp.lt.f32.partialorder %v1706, 1.0
      %vm2121 = vcmp.lt.f32.partialorder %v1707, 1.0
      %vm2122 = vcmp.lt.f32.partialorder %v1708, 1.0
      %vm2123 = vcmp.lt.f32.partialorder %v1709, 1.0
      %vm2124 = vcmp.lt.f32.partialorder %v1710, 1.0
      %vm2125 = vcmp.lt.f32.partialorder %v1711, 1.0
      %vm2126 = vcmp.lt.f32.partialorder %v1712, 1.0
      %vm2127 = vcmp.lt.f32.partialorder %v1713, 1.0
      %vm2128 = vcmp.lt.f32.partialorder %v1714, 1.0
      %vm2129 = vcmp.lt.f32.partialorder %v1715, 1.0
      %vm2130 = vcmp.lt.f32.partialorder %v1716, 1.0
      %vm2131 = vcmp.lt.f32.partialorder %v1717, 1.0
      %vm2132 = vcmp.lt.f32.partialorder %v1718, 1.0
      %vm2133 = vcmp.lt.f32.partialorder %v1719, 1.0
      %vm2134 = vcmp.lt.f32.partialorder %v1720, 1.0
      %vm2135 = vcmp.lt.f32.partialorder %v1721, 1.0
      %vm2136 = vcmp.lt.f32.partialorder %v1722, 1.0
      %vm2137 = vcmp.lt.f32.partialorder %v1723, 1.0
      %vm2138 = vcmp.lt.f32.partialorder %v1724, 1.0
      %vm2139 = vcmp.lt.f32.partialorder %v1725, 1.0
      %vm2140 = vcmp.lt.f32.partialorder %v1726, 1.0
      %vm2141 = vcmp.lt.f32.partialorder %v1727, 1.0
      %vm2142 = vcmp.lt.f32.partialorder %v1728, 1.0
      %vm2143 = vcmp.lt.f32.partialorder %v1729, 1.0
      %vm2144 = vcmp.lt.f32.partialorder %v1730, 1.0
      %vm2145 = vcmp.lt.f32.partialorder %v1731, 1.0
      %vm2146 = vcmp.lt.f32.partialorder %v1732, 1.0
      %vm2147 = vcmp.lt.f32.partialorder %v1733, 1.0
      %vm2148 = vcmp.lt.f32.partialorder %v1734, 1.0
      %vm2149 = vcmp.lt.f32.partialorder %v1735, 1.0
      %vm2150 = vcmp.lt.f32.partialorder %v1736, 1.0
      %vm2151 = vcmp.lt.f32.partialorder %v1737, 1.0
      %vm2152 = vcmp.lt.f32.partialorder %v1738, 1.0
      %vm2153 = vcmp.lt.f32.partialorder %v1739, 1.0
      %vm2154 = vcmp.lt.f32.partialorder %v1740, 1.0
      %vm2155 = vcmp.lt.f32.partialorder %v1741, 1.0
      %vm2156 = vcmp.lt.f32.partialorder %v1742, 1.0
      %vm2157 = vcmp.lt.f32.partialorder %v1743, 1.0
      %vm2158 = vcmp.lt.f32.partialorder %v1744, 1.0
      %vm2159 = vcmp.lt.f32.partialorder %v1745, 1.0
      %vm2160 = vcmp.lt.f32.partialorder %v1746, 1.0
      %vm2161 = vcmp.lt.f32.partialorder %v1747, 1.0
      %vm2162 = vcmp.lt.f32.partialorder %v1748, 1.0
      %vm2163 = vcmp.lt.f32.partialorder %v1749, 1.0
      %vm2164 = vcmp.lt.f32.partialorder %v1750, 1.0
      %vm2165 = vcmp.lt.f32.partialorder %v1751, 1.0
      %vm2166 = vcmp.lt.f32.partialorder %v1752, 1.0
      %vm2167 = vcmp.lt.f32.partialorder %v1753, 1.0
      %vm2168 = vcmp.lt.f32.partialorder %v1754, 1.0
      %vm2169 = vcmp.lt.f32.partialorder %v1755, 1.0
      %vm2170 = vcmp.lt.f32.partialorder %v1756, 1.0
      %vm2171 = vcmp.lt.f32.partialorder %v1757, 1.0
      %vm2172 = vcmp.lt.f32.partialorder %v1758, 1.0
      %vm2173 = vcmp.lt.f32.partialorder %v1759, 1.0
      %vm2174 = vcmp.lt.f32.partialorder %v1760, 1.0
      %vm2175 = vcmp.lt.f32.partialorder %v1761, 1.0
      %vm2176 = vcmp.lt.f32.partialorder %v1762, 1.0
      %vm2177 = vcmp.lt.f32.partialorder %v1763, 1.0
      %vm2178 = vcmp.lt.f32.partialorder %v1764, 1.0
      %vm2179 = vcmp.lt.f32.partialorder %v1765, 1.0
      %vm2180 = vcmp.lt.f32.partialorder %v1766, 1.0
      %vm2181 = vcmp.lt.f32.partialorder %v1767, 1.0
      %vm2182 = vcmp.lt.f32.partialorder %v1768, 1.0
      %vm2183 = vcmp.lt.f32.partialorder %v1769, 1.0
      %vm2184 = vcmp.lt.f32.partialorder %v1770, 1.0
      %vm2185 = vcmp.lt.f32.partialorder %v1771, 1.0
      %vm2186 = vcmp.lt.f32.partialorder %v1772, 1.0
      %vm2187 = vcmp.lt.f32.partialorder %v1773, 1.0
      %vm2188 = vcmp.lt.f32.partialorder %v1774, 1.0
      %vm2189 = vcmp.lt.f32.partialorder %v1775, 1.0
      %vm2190 = vcmp.lt.f32.partialorder %v1776, 1.0
      %vm2191 = vcmp.lt.f32.partialorder %v1777, 1.0
      %vm2192 = vcmp.lt.f32.partialorder %v1778, 1.0
      %vm2193 = vcmp.lt.f32.partialorder %v1779, 1.0
      %vm2194 = vcmp.lt.f32.partialorder %v1780, 1.0
      %vm2195 = vmand %vm1939, %vm2067
      %vm2196 = vmand %vm1940, %vm2068
      %vm2197 = vmand %vm1941, %vm2069
      %vm2198 = vmand %vm1942, %vm2070
      %vm2199 = vmand %vm1943, %vm2071
      %vm2200 = vmand %vm1944, %vm2072
      %vm2201 = vmand %vm1945, %vm2073
      %vm2202 = vmand %vm1946, %vm2074
      %vm2203 = vmand %vm1947, %vm2075
      %vm2204 = vmand %vm1948, %vm2076
      %vm2205 = vmand %vm1949, %vm2077
      %vm2206 = vmand %vm1950, %vm2078
      %vm2207 = vmand %vm1951, %vm2079
      %vm2208 = vmand %vm1952, %vm2080
      %vm2209 = vmand %vm1953, %vm2081
      %vm2210 = vmand %vm1954, %vm2082
      %vm2211 = vmand %vm1955, %vm2083
      %vm2212 = vmand %vm1956, %vm2084
      %vm2213 = vmand %vm1957, %vm2085
      %vm2214 = vmand %vm1958, %vm2086
      %vm2215 = vmand %vm1959, %vm2087
      %vm2216 = vmand %vm1960, %vm2088
      %vm2217 = vmand %vm1961, %vm2089
      %vm2218 = vmand %vm1962, %vm2090
      %vm2219 = vmand %vm1963, %vm2091
      %vm2220 = vmand %vm1964, %vm2092
      %vm2221 = vmand %vm1965, %vm2093
      %vm2222 = vmand %vm1966, %vm2094
      %vm2223 = vmand %vm1967, %vm2095
      %vm2224 = vmand %vm1968, %vm2096
      %vm2225 = vmand %vm1969, %vm2097
      %vm2226 = vmand %vm1970, %vm2098
      %vm2227 = vmand %vm1971, %vm2099
      %vm2228 = vmand %vm1972, %vm2100
      %vm2229 = vmand %vm1973, %vm2101
      %vm2230 = vmand %vm1974, %vm2102
      %vm2231 = vmand %vm1975, %vm2103
      %vm2232 = vmand %vm1976, %vm2104
      %vm2233 = vmand %vm1977, %vm2105
      %vm2234 = vmand %vm1978, %vm2106
      %vm2235 = vmand %vm1979, %vm2107
      %vm2236 = vmand %vm1980, %vm2108
      %vm2237 = vmand %vm1981, %vm2109
      %vm2238 = vmand %vm1982, %vm2110
      %vm2239 = vmand %vm1983, %vm2111
      %vm2240 = vmand %vm1984, %vm2112
      %vm2241 = vmand %vm1985, %vm2113
      %vm2242 = vmand %vm1986, %vm2114
      %vm2243 = vmand %vm1987, %vm2115
      %vm2244 = vmand %vm1988, %vm2116
      %vm2245 = vmand %vm1989, %vm2117
      %vm2246 = vmand %vm1990, %vm2118
      %vm2247 = vmand %vm1991, %vm2119
      %vm2248 = vmand %vm1992, %vm2120
      %vm2249 = vmand %vm1993, %vm2121
      %vm2250 = vmand %vm1994, %vm2122
      %vm2251 = vmand %vm1995, %vm2123
      %vm2252 = vmand %vm1996, %vm2124
      %vm2253 = vmand %vm1997, %vm2125
      %vm2254 = vmand %vm1998, %vm2126
      %vm2255 = vmand %vm1999, %vm2127
      %vm2256 = vmand %vm2000, %vm2128
      %vm2257 = vmand %vm2001, %vm2129
      %vm2258 = vmand %vm2002, %vm2130
      %vm2259 = vmand %vm2003, %vm2131
      %vm2260 = vmand %vm2004, %vm2132
      %vm2261 = vmand %vm2005, %vm2133
      %vm2262 = vmand %vm2006, %vm2134
      %vm2263 = vmand %vm2007, %vm2135
      %vm2264 = vmand %vm2008, %vm2136
      %vm2265 = vmand %vm2009, %vm2137
      %vm2266 = vmand %vm2010, %vm2138
      %vm2267 = vmand %vm2011, %vm2139
      %vm2268 = vmand %vm2012, %vm2140
      %vm2269 = vmand %vm2013, %vm2141
      %vm2270 = vmand %vm2014, %vm2142
      %vm2271 = vmand %vm2015, %vm2143
      %vm2272 = vmand %vm2016, %vm2144
      %vm2273 = vmand %vm2017, %vm2145
      %vm2274 = vmand %vm2018, %vm2146
      %vm2275 = vmand %vm2019, %vm2147
      %vm2276 = vmand %vm2020, %vm2148
      %vm2277 = vmand %vm2021, %vm2149
      %vm2278 = vmand %vm2022, %vm2150
      %vm2279 = vmand %vm2023, %vm2151
      %vm2280 = vmand %vm2024, %vm2152
      %vm2281 = vmand %vm2025, %vm2153
      %vm2282 = vmand %vm2026, %vm2154
      %vm2283 = vmand %vm2027, %vm2155
      %vm2284 = vmand %vm2028, %vm2156
      %vm2285 = vmand %vm2029, %vm2157
      %vm2286 = vmand %vm2030, %vm2158
      %vm2287 = vmand %vm2031, %vm2159
      %vm2288 = vmand %vm2032, %vm2160
      %vm2289 = vmand %vm2033, %vm2161
      %vm2290 = vmand %vm2034, %vm2162
      %vm2291 = vmand %vm2035, %vm2163
      %vm2292 = vmand %vm2036, %vm2164
      %vm2293 = vmand %vm2037, %vm2165
      %vm2294 = vmand %vm2038, %vm2166
      %vm2295 = vmand %vm2039, %vm2167
      %vm2296 = vmand %vm2040, %vm2168
      %vm2297 = vmand %vm2041, %vm2169
      %vm2298 = vmand %vm2042, %vm2170
      %vm2299 = vmand %vm2043, %vm2171
      %vm2300 = vmand %vm2044, %vm2172
      %vm2301 = vmand %vm2045, %vm2173
      %vm2302 = vmand %vm2046, %vm2174
      %vm2303 = vmand %vm2047, %vm2175
      %vm2304 = vmand %vm2048, %vm2176
      %vm2305 = vmand %vm2049, %vm2177
      %vm2306 = vmand %vm2050, %vm2178
      %vm2307 = vmand %vm2051, %vm2179
      %vm2308 = vmand %vm2052, %vm2180
      %vm2309 = vmand %vm2053, %vm2181
      %vm2310 = vmand %vm2054, %vm2182
      %vm2311 = vmand %vm2055, %vm2183
      %vm2312 = vmand %vm2056, %vm2184
      %vm2313 = vmand %vm2057, %vm2185
      %vm2314 = vmand %vm2058, %vm2186
      %vm2315 = vmand %vm2059, %vm2187
      %vm2316 = vmand %vm2060, %vm2188
      %vm2317 = vmand %vm2061, %vm2189
      %vm2318 = vmand %vm2062, %vm2190
      %vm2319 = vmand %vm2063, %vm2191
      %vm2320 = vmand %vm2064, %vm2192
      %vm2321 = vmand %vm2065, %vm2193
      %vm2322 = vmand %vm2066, %vm2194
      %v2323 = vsel %vm2195, %v1653, 1.0
      %v2324 = vsel %vm2196, %v1654, 1.0
      %v2325 = vsel %vm2197, %v1655, 1.0
      %v2326 = vsel %vm2198, %v1656, 1.0
      %v2327 = vsel %vm2199, %v1657, 1.0
      %v2328 = vsel %vm2200, %v1658, 1.0
      %v2329 = vsel %vm2201, %v1659, 1.0
      %v2330 = vsel %vm2202, %v1660, 1.0
      %v2331 = vsel %vm2203, %v1661, 1.0
      %v2332 = vsel %vm2204, %v1662, 1.0
      %v2333 = vsel %vm2205, %v1663, 1.0
      %v2334 = vsel %vm2206, %v1664, 1.0
      %v2335 = vsel %vm2207, %v1665, 1.0
      %v2336 = vsel %vm2208, %v1666, 1.0
      %v2337 = vsel %vm2209, %v1667, 1.0
      %v2338 = vsel %vm2210, %v1668, 1.0
      %v2339 = vsel %vm2211, %v1669, 1.0
      %v2340 = vsel %vm2212, %v1670, 1.0
      %v2341 = vsel %vm2213, %v1671, 1.0
      %v2342 = vsel %vm2214, %v1672, 1.0
      %v2343 = vsel %vm2215, %v1673, 1.0
      %v2344 = vsel %vm2216, %v1674, 1.0
      %v2345 = vsel %vm2217, %v1675, 1.0
      %v2346 = vsel %vm2218, %v1676, 1.0
      %v2347 = vsel %vm2219, %v1677, 1.0
      %v2348 = vsel %vm2220, %v1678, 1.0
      %v2349 = vsel %vm2221, %v1679, 1.0
      %v2350 = vsel %vm2222, %v1680, 1.0
      %v2351 = vsel %vm2223, %v1681, 1.0
      %v2352 = vsel %vm2224, %v1682, 1.0
      %v2353 = vsel %vm2225, %v1683, 1.0
      %v2354 = vsel %vm2226, %v1684, 1.0
      %v2355 = vsel %vm2227, %v1685, 1.0
      %v2356 = vsel %vm2228, %v1686, 1.0
      %v2357 = vsel %vm2229, %v1687, 1.0
      %v2358 = vsel %vm2230, %v1688, 1.0
      %v2359 = vsel %vm2231, %v1689, 1.0
      %v2360 = vsel %vm2232, %v1690, 1.0
      %v2361 = vsel %vm2233, %v1691, 1.0
      %v2362 = vsel %vm2234, %v1692, 1.0
      %v2363 = vsel %vm2235, %v1693, 1.0
      %v2364 = vsel %vm2236, %v1694, 1.0
      %v2365 = vsel %vm2237, %v1695, 1.0
      %v2366 = vsel %vm2238, %v1696, 1.0
      %v2367 = vsel %vm2239, %v1697, 1.0
      %v2368 = vsel %vm2240, %v1698, 1.0
      %v2369 = vsel %vm2241, %v1699, 1.0
      %v2370 = vsel %vm2242, %v1700, 1.0
      %v2371 = vsel %vm2243, %v1701, 1.0
      %v2372 = vsel %vm2244, %v1702, 1.0
      %v2373 = vsel %vm2245, %v1703, 1.0
      %v2374 = vsel %vm2246, %v1704, 1.0
      %v2375 = vsel %vm2247, %v1705, 1.0
      %v2376 = vsel %vm2248, %v1706, 1.0
      %v2377 = vsel %vm2249, %v1707, 1.0
      %v2378 = vsel %vm2250, %v1708, 1.0
      %v2379 = vsel %vm2251, %v1709, 1.0
      %v2380 = vsel %vm2252, %v1710, 1.0
      %v2381 = vsel %vm2253, %v1711, 1.0
      %v2382 = vsel %vm2254, %v1712, 1.0
      %v2383 = vsel %vm2255, %v1713, 1.0
      %v2384 = vsel %vm2256, %v1714, 1.0
      %v2385 = vsel %vm2257, %v1715, 1.0
      %v2386 = vsel %vm2258, %v1716, 1.0
      %v2387 = vsel %vm2259, %v1717, 1.0
      %v2388 = vsel %vm2260, %v1718, 1.0
      %v2389 = vsel %vm2261, %v1719, 1.0
      %v2390 = vsel %vm2262, %v1720, 1.0
      %v2391 = vsel %vm2263, %v1721, 1.0
      %v2392 = vsel %vm2264, %v1722, 1.0
      %v2393 = vsel %vm2265, %v1723, 1.0
      %v2394 = vsel %vm2266, %v1724, 1.0
      %v2395 = vsel %vm2267, %v1725, 1.0
      %v2396 = vsel %vm2268, %v1726, 1.0
      %v2397 = vsel %vm2269, %v1727, 1.0
      %v2398 = vsel %vm2270, %v1728, 1.0
      %v2399 = vsel %vm2271, %v1729, 1.0
      %v2400 = vsel %vm2272, %v1730, 1.0
      %v2401 = vsel %vm2273, %v1731, 1.0
      %v2402 = vsel %vm2274, %v1732, 1.0
      %v2403 = vsel %vm2275, %v1733, 1.0
      %v2404 = vsel %vm2276, %v1734, 1.0
      %v2405 = vsel %vm2277, %v1735, 1.0
      %v2406 = vsel %vm2278, %v1736, 1.0
      %v2407 = vsel %vm2279, %v1737, 1.0
      %v2408 = vsel %vm2280, %v1738, 1.0
      %v2409 = vsel %vm2281, %v1739, 1.0
      %v2410 = vsel %vm2282, %v1740, 1.0
      %v2411 = vsel %vm2283, %v1741, 1.0
      %v2412 = vsel %vm2284, %v1742, 1.0
      %v2413 = vsel %vm2285, %v1743, 1.0
      %v2414 = vsel %vm2286, %v1744, 1.0
      %v2415 = vsel %vm2287, %v1745, 1.0
      %v2416 = vsel %vm2288, %v1746, 1.0
      %v2417 = vsel %vm2289, %v1747, 1.0
      %v2418 = vsel %vm2290, %v1748, 1.0
      %v2419 = vsel %vm2291, %v1749, 1.0
      %v2420 = vsel %vm2292, %v1750, 1.0
      %v2421 = vsel %vm2293, %v1751, 1.0
      %v2422 = vsel %vm2294, %v1752, 1.0
      %v2423 = vsel %vm2295, %v1753, 1.0
      %v2424 = vsel %vm2296, %v1754, 1.0
      %v2425 = vsel %vm2297, %v1755, 1.0
      %v2426 = vsel %vm2298, %v1756, 1.0
      %v2427 = vsel %vm2299, %v1757, 1.0
      %v2428 = vsel %vm2300, %v1758, 1.0
      %v2429 = vsel %vm2301, %v1759, 1.0
      %v2430 = vsel %vm2302, %v1760, 1.0
      %v2431 = vsel %vm2303, %v1761, 1.0
      %v2432 = vsel %vm2304, %v1762, 1.0
      %v2433 = vsel %vm2305, %v1763, 1.0
      %v2434 = vsel %vm2306, %v1764, 1.0
      %v2435 = vsel %vm2307, %v1765, 1.0
      %v2436 = vsel %vm2308, %v1766, 1.0
      %v2437 = vsel %vm2309, %v1767, 1.0
      %v2438 = vsel %vm2310, %v1768, 1.0
      %v2439 = vsel %vm2311, %v1769, 1.0
      %v2440 = vsel %vm2312, %v1770, 1.0
      %v2441 = vsel %vm2313, %v1771, 1.0
      %v2442 = vsel %vm2314, %v1772, 1.0
      %v2443 = vsel %vm2315, %v1773, 1.0
      %v2444 = vsel %vm2316, %v1774, 1.0
      %v2445 = vsel %vm2317, %v1775, 1.0
      %v2446 = vsel %vm2318, %v1776, 1.0
      %v2447 = vsel %vm2319, %v1777, 1.0
      %v2448 = vsel %vm2320, %v1778, 1.0
      %v2449 = vsel %vm2321, %v1779, 1.0
      %v2450 = vsel %vm2322, %v1780, 1.0
      %v2451 = vrsqrt.pop %v2323
      %v2452 = vrsqrt.pop %v2324
      %v2453 = vrsqrt.pop %v2325
      %v2454 = vrsqrt.pop %v2326
      %v2455 = vrsqrt.pop %v2327
      %v2456 = vrsqrt.pop %v2328
      %v2457 = vrsqrt.pop %v2329
      %v2458 = vrsqrt.pop %v2330
      %v2459 = vrsqrt.pop %v2331
      %v2460 = vrsqrt.pop %v2332
      %v2461 = vrsqrt.pop %v2333
      %v2462 = vrsqrt.pop %v2334
      %v2463 = vrsqrt.pop %v2335
      %v2464 = vrsqrt.pop %v2336
      %v2465 = vrsqrt.pop %v2337
      %v2466 = vrsqrt.pop %v2338
      %v2467 = vrsqrt.pop %v2339
      %v2468 = vrsqrt.pop %v2340
      %v2469 = vrsqrt.pop %v2341
      %v2470 = vrsqrt.pop %v2342
      %v2471 = vrsqrt.pop %v2343
      %v2472 = vrsqrt.pop %v2344
      %v2473 = vrsqrt.pop %v2345
      %v2474 = vrsqrt.pop %v2346
      %v2475 = vrsqrt.pop %v2347
      %v2476 = vrsqrt.pop %v2348
      %v2477 = vrsqrt.pop %v2349
      %v2478 = vrsqrt.pop %v2350
      %v2479 = vrsqrt.pop %v2351
      %v2480 = vrsqrt.pop %v2352
      %v2481 = vrsqrt.pop %v2353
      %v2482 = vrsqrt.pop %v2354
      %v2483 = vrsqrt.pop %v2355
      %v2484 = vrsqrt.pop %v2356
      %v2485 = vrsqrt.pop %v2357
      %v2486 = vrsqrt.pop %v2358
      %v2487 = vrsqrt.pop %v2359
      %v2488 = vrsqrt.pop %v2360
      %v2489 = vrsqrt.pop %v2361
      %v2490 = vrsqrt.pop %v2362
      %v2491 = vrsqrt.pop %v2363
      %v2492 = vrsqrt.pop %v2364
      %v2493 = vrsqrt.pop %v2365
      %v2494 = vrsqrt.pop %v2366
      %v2495 = vrsqrt.pop %v2367
      %v2496 = vrsqrt.pop %v2368
      %v2497 = vrsqrt.pop %v2369
      %v2498 = vrsqrt.pop %v2370
      %v2499 = vrsqrt.pop %v2371
      %v2500 = vrsqrt.pop %v2372
      %v2501 = vrsqrt.pop %v2373
      %v2502 = vrsqrt.pop %v2374
      %v2503 = vrsqrt.pop %v2375
      %v2504 = vrsqrt.pop %v2376
      %v2505 = vrsqrt.pop %v2377
      %v2506 = vrsqrt.pop %v2378
      %v2507 = vrsqrt.pop %v2379
      %v2508 = vrsqrt.pop %v2380
      %v2509 = vrsqrt.pop %v2381
      %v2510 = vrsqrt.pop %v2382
      %v2511 = vrsqrt.pop %v2383
      %v2512 = vrsqrt.pop %v2384
      %v2513 = vrsqrt.pop %v2385
      %v2514 = vrsqrt.pop %v2386
      %v2515 = vrsqrt.pop %v2387
      %v2516 = vrsqrt.pop %v2388
      %v2517 = vrsqrt.pop %v2389
      %v2518 = vrsqrt.pop %v2390
      %v2519 = vrsqrt.pop %v2391
      %v2520 = vrsqrt.pop %v2392
      %v2521 = vrsqrt.pop %v2393
      %v2522 = vrsqrt.pop %v2394
      %v2523 = vrsqrt.pop %v2395
      %v2524 = vrsqrt.pop %v2396
      %v2525 = vrsqrt.pop %v2397
      %v2526 = vrsqrt.pop %v2398
      %v2527 = vrsqrt.pop %v2399
      %v2528 = vrsqrt.pop %v2400
      %v2529 = vrsqrt.pop %v2401
      %v2530 = vrsqrt.pop %v2402
      %v2531 = vrsqrt.pop %v2403
      %v2532 = vrsqrt.pop %v2404
      %v2533 = vrsqrt.pop %v2405
      %v2534 = vrsqrt.pop %v2406
      %v2535 = vrsqrt.pop %v2407
      %v2536 = vrsqrt.pop %v2408
      %v2537 = vrsqrt.pop %v2409
      %v2538 = vrsqrt.pop %v2410
      %v2539 = vrsqrt.pop %v2411
      %v2540 = vrsqrt.pop %v2412
      %v2541 = vrsqrt.pop %v2413
      %v2542 = vrsqrt.pop %v2414
      %v2543 = vrsqrt.pop %v2415
      %v2544 = vrsqrt.pop %v2416
      %v2545 = vrsqrt.pop %v2417
      %v2546 = vrsqrt.pop %v2418
      %v2547 = vrsqrt.pop %v2419
      %v2548 = vrsqrt.pop %v2420
      %v2549 = vrsqrt.pop %v2421
      %v2550 = vrsqrt.pop %v2422
      %v2551 = vrsqrt.pop %v2423
      %v2552 = vrsqrt.pop %v2424
      %v2553 = vrsqrt.pop %v2425
      %v2554 = vrsqrt.pop %v2426
      %v2555 = vrsqrt.pop %v2427
      %v2556 = vrsqrt.pop %v2428
      %v2557 = vrsqrt.pop %v2429
      %v2558 = vrsqrt.pop %v2430
      %v2559 = vrsqrt.pop %v2431
      %v2560 = vrsqrt.pop %v2432
      %v2561 = vrsqrt.pop %v2433
      %v2562 = vrsqrt.pop %v2434
      %v2563 = vrsqrt.pop %v2435
      %v2564 = vrsqrt.pop %v2436
      %v2565 = vrsqrt.pop %v2437
      %v2566 = vrsqrt.pop %v2438
      %v2567 = vrsqrt.pop %v2439
      %v2568 = vrsqrt.pop %v2440
      %v2569 = vrsqrt.pop %v2441
      %v2570 = vrsqrt.pop %v2442
      %v2571 = vrsqrt.pop %v2443
      %v2572 = vrsqrt.pop %v2444
      %v2573 = vrsqrt.pop %v2445
      %v2574 = vrsqrt.pop %v2446
      %v2575 = vrsqrt.pop %v2447
      %v2576 = vrsqrt.pop %v2448
      %v2577 = vrsqrt.pop %v2449
      %v2578 = vrsqrt.pop %v2450
      %v2579 = vmul.f32 %v2323, %v2451
      %v2580 = vmul.f32 %v2324, %v2452
      %v2581 = vmul.f32 %v2325, %v2453
      %v2582 = vmul.f32 %v2326, %v2454
      %v2583 = vmul.f32 %v2327, %v2455
      %v2584 = vmul.f32 %v2328, %v2456
      %v2585 = vmul.f32 %v2329, %v2457
      %v2586 = vmul.f32 %v2330, %v2458
      %v2587 = vmul.f32 %v2331, %v2459
      %v2588 = vmul.f32 %v2332, %v2460
      %v2589 = vmul.f32 %v2333, %v2461
      %v2590 = vmul.f32 %v2334, %v2462
      %v2591 = vmul.f32 %v2335, %v2463
      %v2592 = vmul.f32 %v2336, %v2464
      %v2593 = vmul.f32 %v2337, %v2465
      %v2594 = vmul.f32 %v2338, %v2466
      %v2595 = vmul.f32 %v2339, %v2467
      %v2596 = vmul.f32 %v2340, %v2468
      %v2597 = vmul.f32 %v2341, %v2469
      %v2598 = vmul.f32 %v2342, %v2470
      %v2599 = vmul.f32 %v2343, %v2471
      %v2600 = vmul.f32 %v2344, %v2472
      %v2601 = vmul.f32 %v2345, %v2473
      %v2602 = vmul.f32 %v2346, %v2474
      %v2603 = vmul.f32 %v2347, %v2475
      %v2604 = vmul.f32 %v2348, %v2476
      %v2605 = vmul.f32 %v2349, %v2477
      %v2606 = vmul.f32 %v2350, %v2478
      %v2607 = vmul.f32 %v2351, %v2479
      %v2608 = vmul.f32 %v2352, %v2480
      %v2609 = vmul.f32 %v2353, %v2481
      %v2610 = vmul.f32 %v2354, %v2482
      %v2611 = vmul.f32 %v2355, %v2483
      %v2612 = vmul.f32 %v2356, %v2484
      %v2613 = vmul.f32 %v2357, %v2485
      %v2614 = vmul.f32 %v2358, %v2486
      %v2615 = vmul.f32 %v2359, %v2487
      %v2616 = vmul.f32 %v2360, %v2488
      %v2617 = vmul.f32 %v2361, %v2489
      %v2618 = vmul.f32 %v2362, %v2490
      %v2619 = vmul.f32 %v2363, %v2491
      %v2620 = vmul.f32 %v2364, %v2492
      %v2621 = vmul.f32 %v2365, %v2493
      %v2622 = vmul.f32 %v2366, %v2494
      %v2623 = vmul.f32 %v2367, %v2495
      %v2624 = vmul.f32 %v2368, %v2496
      %v2625 = vmul.f32 %v2369, %v2497
      %v2626 = vmul.f32 %v2370, %v2498
      %v2627 = vmul.f32 %v2371, %v2499
      %v2628 = vmul.f32 %v2372, %v2500
      %v2629 = vmul.f32 %v2373, %v2501
      %v2630 = vmul.f32 %v2374, %v2502
      %v2631 = vmul.f32 %v2375, %v2503
      %v2632 = vmul.f32 %v2376, %v2504
      %v2633 = vmul.f32 %v2377, %v2505
      %v2634 = vmul.f32 %v2378, %v2506
      %v2635 = vmul.f32 %v2379, %v2507
      %v2636 = vmul.f32 %v2380, %v2508
      %v2637 = vmul.f32 %v2381, %v2509
      %v2638 = vmul.f32 %v2382, %v2510
      %v2639 = vmul.f32 %v2383, %v2511
      %v2640 = vmul.f32 %v2384, %v2512
      %v2641 = vmul.f32 %v2385, %v2513
      %v2642 = vmul.f32 %v2386, %v2514
      %v2643 = vmul.f32 %v2387, %v2515
      %v2644 = vmul.f32 %v2388, %v2516
      %v2645 = vmul.f32 %v2389, %v2517
      %v2646 = vmul.f32 %v2390, %v2518
      %v2647 = vmul.f32 %v2391, %v2519
      %v2648 = vmul.f32 %v2392, %v2520
      %v2649 = vmul.f32 %v2393, %v2521
      %v2650 = vmul.f32 %v2394, %v2522
      %v2651 = vmul.f32 %v2395, %v2523
      %v2652 = vmul.f32 %v2396, %v2524
      %v2653 = vmul.f32 %v2397, %v2525
      %v2654 = vmul.f32 %v2398, %v2526
      %v2655 = vmul.f32 %v2399, %v2527
      %v2656 = vmul.f32 %v2400, %v2528
      %v2657 = vmul.f32 %v2401, %v2529
      %v2658 = vmul.f32 %v2402, %v2530
      %v2659 = vmul.f32 %v2403, %v2531
      %v2660 = vmul.f32 %v2404, %v2532
      %v2661 = vmul.f32 %v2405, %v2533
      %v2662 = vmul.f32 %v2406, %v2534
      %v2663 = vmul.f32 %v2407, %v2535
      %v2664 = vmul.f32 %v2408, %v2536
      %v2665 = vmul.f32 %v2409, %v2537
      %v2666 = vmul.f32 %v2410, %v2538
      %v2667 = vmul.f32 %v2411, %v2539
      %v2668 = vmul.f32 %v2412, %v2540
      %v2669 = vmul.f32 %v2413, %v2541
      %v2670 = vmul.f32 %v2414, %v2542
      %v2671 = vmul.f32 %v2415, %v2543
      %v2672 = vmul.f32 %v2416, %v2544
      %v2673 = vmul.f32 %v2417, %v2545
      %v2674 = vmul.f32 %v2418, %v2546
      %v2675 = vmul.f32 %v2419, %v2547
      %v2676 = vmul.f32 %v2420, %v2548
      %v2677 = vmul.f32 %v2421, %v2549
      %v2678 = vmul.f32 %v2422, %v2550
      %v2679 = vmul.f32 %v2423, %v2551
      %v2680 = vmul.f32 %v2424, %v2552
      %v2681 = vmul.f32 %v2425, %v2553
      %v2682 = vmul.f32 %v2426, %v2554
      %v2683 = vmul.f32 %v2427, %v2555
      %v2684 = vmul.f32 %v2428, %v2556
      %v2685 = vmul.f32 %v2429, %v2557
      %v2686 = vmul.f32 %v2430, %v2558
      %v2687 = vmul.f32 %v2431, %v2559
      %v2688 = vmul.f32 %v2432, %v2560
      %v2689 = vmul.f32 %v2433, %v2561
      %v2690 = vmul.f32 %v2434, %v2562
      %v2691 = vmul.f32 %v2435, %v2563
      %v2692 = vmul.f32 %v2436, %v2564
      %v2693 = vmul.f32 %v2437, %v2565
      %v2694 = vmul.f32 %v2438, %v2566
      %v2695 = vmul.f32 %v2439, %v2567
      %v2696 = vmul.f32 %v2440, %v2568
      %v2697 = vmul.f32 %v2441, %v2569
      %v2698 = vmul.f32 %v2442, %v2570
      %v2699 = vmul.f32 %v2443, %v2571
      %v2700 = vmul.f32 %v2444, %v2572
      %v2701 = vmul.f32 %v2445, %v2573
      %v2702 = vmul.f32 %v2446, %v2574
      %v2703 = vmul.f32 %v2447, %v2575
      %v2704 = vmul.f32 %v2448, %v2576
      %v2705 = vmul.f32 %v2449, %v2577
      %v2706 = vmul.f32 %v2450, %v2578
      %v2707 = vsub.f32 1.0, %v2579
      %v2708 = vsub.f32 1.0, %v2580
      %v2709 = vsub.f32 1.0, %v2581
      %v2710 = vsub.f32 1.0, %v2582
      %v2711 = vsub.f32 1.0, %v2583
      %v2712 = vsub.f32 1.0, %v2584
      %v2713 = vsub.f32 1.0, %v2585
      %v2714 = vsub.f32 1.0, %v2586
      %v2715 = vsub.f32 1.0, %v2587
      %v2716 = vsub.f32 1.0, %v2588
      %v2717 = vsub.f32 1.0, %v2589
      %v2718 = vsub.f32 1.0, %v2590
      %v2719 = vsub.f32 1.0, %v2591
      %v2720 = vsub.f32 1.0, %v2592
      %v2721 = vsub.f32 1.0, %v2593
      %v2722 = vsub.f32 1.0, %v2594
      %v2723 = vsub.f32 1.0, %v2595
      %v2724 = vsub.f32 1.0, %v2596
      %v2725 = vsub.f32 1.0, %v2597
      %v2726 = vsub.f32 1.0, %v2598
      %v2727 = vsub.f32 1.0, %v2599
      %v2728 = vsub.f32 1.0, %v2600
      %v2729 = vsub.f32 1.0, %v2601
      %v2730 = vsub.f32 1.0, %v2602
      %v2731 = vsub.f32 1.0, %v2603
      %v2732 = vsub.f32 1.0, %v2604
      %v2733 = vsub.f32 1.0, %v2605
      %v2734 = vsub.f32 1.0, %v2606
      %v2735 = vsub.f32 1.0, %v2607
      %v2736 = vsub.f32 1.0, %v2608
      %v2737 = vsub.f32 1.0, %v2609
      %v2738 = vsub.f32 1.0, %v2610
      %v2739 = vsub.f32 1.0, %v2611
      %v2740 = vsub.f32 1.0, %v2612
      %v2741 = vsub.f32 1.0, %v2613
      %v2742 = vsub.f32 1.0, %v2614
      %v2743 = vsub.f32 1.0, %v2615
      %v2744 = vsub.f32 1.0, %v2616
      %v2745 = vsub.f32 1.0, %v2617
      %v2746 = vsub.f32 1.0, %v2618
      %v2747 = vsub.f32 1.0, %v2619
      %v2748 = vsub.f32 1.0, %v2620
      %v2749 = vsub.f32 1.0, %v2621
      %v2750 = vsub.f32 1.0, %v2622
      %v2751 = vsub.f32 1.0, %v2623
      %v2752 = vsub.f32 1.0, %v2624
      %v2753 = vsub.f32 1.0, %v2625
      %v2754 = vsub.f32 1.0, %v2626
      %v2755 = vsub.f32 1.0, %v2627
      %v2756 = vsub.f32 1.0, %v2628
      %v2757 = vsub.f32 1.0, %v2629
      %v2758 = vsub.f32 1.0, %v2630
      %v2759 = vsub.f32 1.0, %v2631
      %v2760 = vsub.f32 1.0, %v2632
      %v2761 = vsub.f32 1.0, %v2633
      %v2762 = vsub.f32 1.0, %v2634
      %v2763 = vsub.f32 1.0, %v2635
      %v2764 = vsub.f32 1.0, %v2636
      %v2765 = vsub.f32 1.0, %v2637
      %v2766 = vsub.f32 1.0, %v2638
      %v2767 = vsub.f32 1.0, %v2639
      %v2768 = vsub.f32 1.0, %v2640
      %v2769 = vsub.f32 1.0, %v2641
      %v2770 = vsub.f32 1.0, %v2642
      %v2771 = vsub.f32 1.0, %v2643
      %v2772 = vsub.f32 1.0, %v2644
      %v2773 = vsub.f32 1.0, %v2645
      %v2774 = vsub.f32 1.0, %v2646
      %v2775 = vsub.f32 1.0, %v2647
      %v2776 = vsub.f32 1.0, %v2648
      %v2777 = vsub.f32 1.0, %v2649
      %v2778 = vsub.f32 1.0, %v2650
      %v2779 = vsub.f32 1.0, %v2651
      %v2780 = vsub.f32 1.0, %v2652
      %v2781 = vsub.f32 1.0, %v2653
      %v2782 = vsub.f32 1.0, %v2654
      %v2783 = vsub.f32 1.0, %v2655
      %v2784 = vsub.f32 1.0, %v2656
      %v2785 = vsub.f32 1.0, %v2657
      %v2786 = vsub.f32 1.0, %v2658
      %v2787 = vsub.f32 1.0, %v2659
      %v2788 = vsub.f32 1.0, %v2660
      %v2789 = vsub.f32 1.0, %v2661
      %v2790 = vsub.f32 1.0, %v2662
      %v2791 = vsub.f32 1.0, %v2663
      %v2792 = vsub.f32 1.0, %v2664
      %v2793 = vsub.f32 1.0, %v2665
      %v2794 = vsub.f32 1.0, %v2666
      %v2795 = vsub.f32 1.0, %v2667
      %v2796 = vsub.f32 1.0, %v2668
      %v2797 = vsub.f32 1.0, %v2669
      %v2798 = vsub.f32 1.0, %v2670
      %v2799 = vsub.f32 1.0, %v2671
      %v2800 = vsub.f32 1.0, %v2672
      %v2801 = vsub.f32 1.0, %v2673
      %v2802 = vsub.f32 1.0, %v2674
      %v2803 = vsub.f32 1.0, %v2675
      %v2804 = vsub.f32 1.0, %v2676
      %v2805 = vsub.f32 1.0, %v2677
      %v2806 = vsub.f32 1.0, %v2678
      %v2807 = vsub.f32 1.0, %v2679
      %v2808 = vsub.f32 1.0, %v2680
      %v2809 = vsub.f32 1.0, %v2681
      %v2810 = vsub.f32 1.0, %v2682
      %v2811 = vsub.f32 1.0, %v2683
      %v2812 = vsub.f32 1.0, %v2684
      %v2813 = vsub.f32 1.0, %v2685
      %v2814 = vsub.f32 1.0, %v2686
      %v2815 = vsub.f32 1.0, %v2687
      %v2816 = vsub.f32 1.0, %v2688
      %v2817 = vsub.f32 1.0, %v2689
      %v2818 = vsub.f32 1.0, %v2690
      %v2819 = vsub.f32 1.0, %v2691
      %v2820 = vsub.f32 1.0, %v2692
      %v2821 = vsub.f32 1.0, %v2693
      %v2822 = vsub.f32 1.0, %v2694
      %v2823 = vsub.f32 1.0, %v2695
      %v2824 = vsub.f32 1.0, %v2696
      %v2825 = vsub.f32 1.0, %v2697
      %v2826 = vsub.f32 1.0, %v2698
      %v2827 = vsub.f32 1.0, %v2699
      %v2828 = vsub.f32 1.0, %v2700
      %v2829 = vsub.f32 1.0, %v2701
      %v2830 = vsub.f32 1.0, %v2702
      %v2831 = vsub.f32 1.0, %v2703
      %v2832 = vsub.f32 1.0, %v2704
      %v2833 = vsub.f32 1.0, %v2705
      %v2834 = vsub.f32 1.0, %v2706
      %v2835 = vsel %vm2195, %v2707, 0.0
      %v2836 = vsel %vm2196, %v2708, 0.0
      %v2837 = vsel %vm2197, %v2709, 0.0
      %v2838 = vsel %vm2198, %v2710, 0.0
      %v2839 = vsel %vm2199, %v2711, 0.0
      %v2840 = vsel %vm2200, %v2712, 0.0
      %v2841 = vsel %vm2201, %v2713, 0.0
      %v2842 = vsel %vm2202, %v2714, 0.0
      %v2843 = vsel %vm2203, %v2715, 0.0
      %v2844 = vsel %vm2204, %v2716, 0.0
      %v2845 = vsel %vm2205, %v2717, 0.0
      %v2846 = vsel %vm2206, %v2718, 0.0
      %v2847 = vsel %vm2207, %v2719, 0.0
      %v2848 = vsel %vm2208, %v2720, 0.0
      %v2849 = vsel %vm2209, %v2721, 0.0
      %v2850 = vsel %vm2210, %v2722, 0.0
      %v2851 = vsel %vm2211, %v2723, 0.0
      %v2852 = vsel %vm2212, %v2724, 0.0
      %v2853 = vsel %vm2213, %v2725, 0.0
      %v2854 = vsel %vm2214, %v2726, 0.0
      %v2855 = vsel %vm2215, %v2727, 0.0
      %v2856 = vsel %vm2216, %v2728, 0.0
      %v2857 = vsel %vm2217, %v2729, 0.0
      %v2858 = vsel %vm2218, %v2730, 0.0
      %v2859 = vsel %vm2219, %v2731, 0.0
      %v2860 = vsel %vm2220, %v2732, 0.0
      %v2861 = vsel %vm2221, %v2733, 0.0
      %v2862 = vsel %vm2222, %v2734, 0.0
      %v2863 = vsel %vm2223, %v2735, 0.0
      %v2864 = vsel %vm2224, %v2736, 0.0
      %v2865 = vsel %vm2225, %v2737, 0.0
      %v2866 = vsel %vm2226, %v2738, 0.0
      %v2867 = vsel %vm2227, %v2739, 0.0
      %v2868 = vsel %vm2228, %v2740, 0.0
      %v2869 = vsel %vm2229, %v2741, 0.0
      %v2870 = vsel %vm2230, %v2742, 0.0
      %v2871 = vsel %vm2231, %v2743, 0.0
      %v2872 = vsel %vm2232, %v2744, 0.0
      %v2873 = vsel %vm2233, %v2745, 0.0
      %v2874 = vsel %vm2234, %v2746, 0.0
      %v2875 = vsel %vm2235, %v2747, 0.0
      %v2876 = vsel %vm2236, %v2748, 0.0
      %v2877 = vsel %vm2237, %v2749, 0.0
      %v2878 = vsel %vm2238, %v2750, 0.0
      %v2879 = vsel %vm2239, %v2751, 0.0
      %v2880 = vsel %vm2240, %v2752, 0.0
      %v2881 = vsel %vm2241, %v2753, 0.0
      %v2882 = vsel %vm2242, %v2754, 0.0
      %v2883 = vsel %vm2243, %v2755, 0.0
      %v2884 = vsel %vm2244, %v2756, 0.0
      %v2885 = vsel %vm2245, %v2757, 0.0
      %v2886 = vsel %vm2246, %v2758, 0.0
      %v2887 = vsel %vm2247, %v2759, 0.0
      %v2888 = vsel %vm2248, %v2760, 0.0
      %v2889 = vsel %vm2249, %v2761, 0.0
      %v2890 = vsel %vm2250, %v2762, 0.0
      %v2891 = vsel %vm2251, %v2763, 0.0
      %v2892 = vsel %vm2252, %v2764, 0.0
      %v2893 = vsel %vm2253, %v2765, 0.0
      %v2894 = vsel %vm2254, %v2766, 0.0
      %v2895 = vsel %vm2255, %v2767, 0.0
      %v2896 = vsel %vm2256, %v2768, 0.0
      %v2897 = vsel %vm2257, %v2769, 0.0
      %v2898 = vsel %vm2258, %v2770, 0.0
      %v2899 = vsel %vm2259, %v2771, 0.0
      %v2900 = vsel %vm2260, %v2772, 0.0
      %v2901 = vsel %vm2261, %v2773, 0.0
      %v2902 = vsel %vm2262, %v2774, 0.0
      %v2903 = vsel %vm2263, %v2775, 0.0
      %v2904 = vsel %vm2264, %v2776, 0.0
      %v2905 = vsel %vm2265, %v2777, 0.0
      %v2906 = vsel %vm2266, %v2778, 0.0
      %v2907 = vsel %vm2267, %v2779, 0.0
      %v2908 = vsel %vm2268, %v2780, 0.0
      %v2909 = vsel %vm2269, %v2781, 0.0
      %v2910 = vsel %vm2270, %v2782, 0.0
      %v2911 = vsel %vm2271, %v2783, 0.0
      %v2912 = vsel %vm2272, %v2784, 0.0
      %v2913 = vsel %vm2273, %v2785, 0.0
      %v2914 = vsel %vm2274, %v2786, 0.0
      %v2915 = vsel %vm2275, %v2787, 0.0
      %v2916 = vsel %vm2276, %v2788, 0.0
      %v2917 = vsel %vm2277, %v2789, 0.0
      %v2918 = vsel %vm2278, %v2790, 0.0
      %v2919 = vsel %vm2279, %v2791, 0.0
      %v2920 = vsel %vm2280, %v2792, 0.0
      %v2921 = vsel %vm2281, %v2793, 0.0
      %v2922 = vsel %vm2282, %v2794, 0.0
      %v2923 = vsel %vm2283, %v2795, 0.0
      %v2924 = vsel %vm2284, %v2796, 0.0
      %v2925 = vsel %vm2285, %v2797, 0.0
      %v2926 = vsel %vm2286, %v2798, 0.0
      %v2927 = vsel %vm2287, %v2799, 0.0
      %v2928 = vsel %vm2288, %v2800, 0.0
      %v2929 = vsel %vm2289, %v2801, 0.0
      %v2930 = vsel %vm2290, %v2802, 0.0
      %v2931 = vsel %vm2291, %v2803, 0.0
      %v2932 = vsel %vm2292, %v2804, 0.0
      %v2933 = vsel %vm2293, %v2805, 0.0
      %v2934 = vsel %vm2294, %v2806, 0.0
      %v2935 = vsel %vm2295, %v2807, 0.0
      %v2936 = vsel %vm2296, %v2808, 0.0
      %v2937 = vsel %vm2297, %v2809, 0.0
      %v2938 = vsel %vm2298, %v2810, 0.0
      %v2939 = vsel %vm2299, %v2811, 0.0
      %v2940 = vsel %vm2300, %v2812, 0.0
      %v2941 = vsel %vm2301, %v2813, 0.0
      %v2942 = vsel %vm2302, %v2814, 0.0
      %v2943 = vsel %vm2303, %v2815, 0.0
      %v2944 = vsel %vm2304, %v2816, 0.0
      %v2945 = vsel %vm2305, %v2817, 0.0
      %v2946 = vsel %vm2306, %v2818, 0.0
      %v2947 = vsel %vm2307, %v2819, 0.0
      %v2948 = vsel %vm2308, %v2820, 0.0
      %v2949 = vsel %vm2309, %v2821, 0.0
      %v2950 = vsel %vm2310, %v2822, 0.0
      %v2951 = vsel %vm2311, %v2823, 0.0
      %v2952 = vsel %vm2312, %v2824, 0.0
      %v2953 = vsel %vm2313, %v2825, 0.0
      %v2954 = vsel %vm2314, %v2826, 0.0
      %v2955 = vsel %vm2315, %v2827, 0.0
      %v2956 = vsel %vm2316, %v2828, 0.0
      %v2957 = vsel %vm2317, %v2829, 0.0
      %v2958 = vsel %vm2318, %v2830, 0.0
      %v2959 = vsel %vm2319, %v2831, 0.0
      %v2960 = vsel %vm2320, %v2832, 0.0
      %v2961 = vsel %vm2321, %v2833, 0.0
      %v2962 = vsel %vm2322, %v2834, 0.0
      %v2963 = vmul.f32 %v2835, %v2835
      %v2964 = vmul.f32 %v2836, %v2836
      %v2965 = vmul.f32 %v2837, %v2837
      %v2966 = vmul.f32 %v2838, %v2838
      %v2967 = vmul.f32 %v2839, %v2839
      %v2968 = vmul.f32 %v2840, %v2840
      %v2969 = vmul.f32 %v2841, %v2841
      %v2970 = vmul.f32 %v2842, %v2842
      %v2971 = vmul.f32 %v2843, %v2843
      %v2972 = vmul.f32 %v2844, %v2844
      %v2973 = vmul.f32 %v2845, %v2845
      %v2974 = vmul.f32 %v2846, %v2846
      %v2975 = vmul.f32 %v2847, %v2847
      %v2976 = vmul.f32 %v2848, %v2848
      %v2977 = vmul.f32 %v2849, %v2849
      %v2978 = vmul.f32 %v2850, %v2850
      %v2979 = vmul.f32 %v2851, %v2851
      %v2980 = vmul.f32 %v2852, %v2852
      %v2981 = vmul.f32 %v2853, %v2853
      %v2982 = vmul.f32 %v2854, %v2854
      %v2983 = vmul.f32 %v2855, %v2855
      %v2984 = vmul.f32 %v2856, %v2856
      %v2985 = vmul.f32 %v2857, %v2857
      %v2986 = vmul.f32 %v2858, %v2858
      %v2987 = vmul.f32 %v2859, %v2859
      %v2988 = vmul.f32 %v2860, %v2860
      %v2989 = vmul.f32 %v2861, %v2861
      %v2990 = vmul.f32 %v2862, %v2862
      %v2991 = vmul.f32 %v2863, %v2863
      %v2992 = vmul.f32 %v2864, %v2864
      %v2993 = vmul.f32 %v2865, %v2865
      %v2994 = vmul.f32 %v2866, %v2866
      %v2995 = vmul.f32 %v2867, %v2867
      %v2996 = vmul.f32 %v2868, %v2868
      %v2997 = vmul.f32 %v2869, %v2869
      %v2998 = vmul.f32 %v2870, %v2870
      %v2999 = vmul.f32 %v2871, %v2871
      %v3000 = vmul.f32 %v2872, %v2872
      %v3001 = vmul.f32 %v2873, %v2873
      %v3002 = vmul.f32 %v2874, %v2874
      %v3003 = vmul.f32 %v2875, %v2875
      %v3004 = vmul.f32 %v2876, %v2876
      %v3005 = vmul.f32 %v2877, %v2877
      %v3006 = vmul.f32 %v2878, %v2878
      %v3007 = vmul.f32 %v2879, %v2879
      %v3008 = vmul.f32 %v2880, %v2880
      %v3009 = vmul.f32 %v2881, %v2881
      %v3010 = vmul.f32 %v2882, %v2882
      %v3011 = vmul.f32 %v2883, %v2883
      %v3012 = vmul.f32 %v2884, %v2884
      %v3013 = vmul.f32 %v2885, %v2885
      %v3014 = vmul.f32 %v2886, %v2886
      %v3015 = vmul.f32 %v2887, %v2887
      %v3016 = vmul.f32 %v2888, %v2888
      %v3017 = vmul.f32 %v2889, %v2889
      %v3018 = vmul.f32 %v2890, %v2890
      %v3019 = vmul.f32 %v2891, %v2891
      %v3020 = vmul.f32 %v2892, %v2892
      %v3021 = vmul.f32 %v2893, %v2893
      %v3022 = vmul.f32 %v2894, %v2894
      %v3023 = vmul.f32 %v2895, %v2895
      %v3024 = vmul.f32 %v2896, %v2896
      %v3025 = vmul.f32 %v2897, %v2897
      %v3026 = vmul.f32 %v2898, %v2898
      %v3027 = vmul.f32 %v2899, %v2899
      %v3028 = vmul.f32 %v2900, %v2900
      %v3029 = vmul.f32 %v2901, %v2901
      %v3030 = vmul.f32 %v2902, %v2902
      %v3031 = vmul.f32 %v2903, %v2903
      %v3032 = vmul.f32 %v2904, %v2904
      %v3033 = vmul.f32 %v2905, %v2905
      %v3034 = vmul.f32 %v2906, %v2906
      %v3035 = vmul.f32 %v2907, %v2907
      %v3036 = vmul.f32 %v2908, %v2908
      %v3037 = vmul.f32 %v2909, %v2909
      %v3038 = vmul.f32 %v2910, %v2910
      %v3039 = vmul.f32 %v2911, %v2911
      %v3040 = vmul.f32 %v2912, %v2912
      %v3041 = vmul.f32 %v2913, %v2913
      %v3042 = vmul.f32 %v2914, %v2914
      %v3043 = vmul.f32 %v2915, %v2915
      %v3044 = vmul.f32 %v2916, %v2916
      %v3045 = vmul.f32 %v2917, %v2917
      %v3046 = vmul.f32 %v2918, %v2918
      %v3047 = vmul.f32 %v2919, %v2919
      %v3048 = vmul.f32 %v2920, %v2920
      %v3049 = vmul.f32 %v2921, %v2921
      %v3050 = vmul.f32 %v2922, %v2922
      %v3051 = vmul.f32 %v2923, %v2923
      %v3052 = vmul.f32 %v2924, %v2924
      %v3053 = vmul.f32 %v2925, %v2925
      %v3054 = vmul.f32 %v2926, %v2926
      %v3055 = vmul.f32 %v2927, %v2927
      %v3056 = vmul.f32 %v2928, %v2928
      %v3057 = vmul.f32 %v2929, %v2929
      %v3058 = vmul.f32 %v2930, %v2930
      %v3059 = vmul.f32 %v2931, %v2931
      %v3060 = vmul.f32 %v2932, %v2932
      %v3061 = vmul.f32 %v2933, %v2933
      %v3062 = vmul.f32 %v2934, %v2934
      %v3063 = vmul.f32 %v2935, %v2935
      %v3064 = vmul.f32 %v2936, %v2936
      %v3065 = vmul.f32 %v2937, %v2937
      %v3066 = vmul.f32 %v2938, %v2938
      %v3067 = vmul.f32 %v2939, %v2939
      %v3068 = vmul.f32 %v2940, %v2940
      %v3069 = vmul.f32 %v2941, %v2941
      %v3070 = vmul.f32 %v2942, %v2942
      %v3071 = vmul.f32 %v2943, %v2943
      %v3072 = vmul.f32 %v2944, %v2944
      %v3073 = vmul.f32 %v2945, %v2945
      %v3074 = vmul.f32 %v2946, %v2946
      %v3075 = vmul.f32 %v2947, %v2947
      %v3076 = vmul.f32 %v2948, %v2948
      %v3077 = vmul.f32 %v2949, %v2949
      %v3078 = vmul.f32 %v2950, %v2950
      %v3079 = vmul.f32 %v2951, %v2951
      %v3080 = vmul.f32 %v2952, %v2952
      %v3081 = vmul.f32 %v2953, %v2953
      %v3082 = vmul.f32 %v2954, %v2954
      %v3083 = vmul.f32 %v2955, %v2955
      %v3084 = vmul.f32 %v2956, %v2956
      %v3085 = vmul.f32 %v2957, %v2957
      %v3086 = vmul.f32 %v2958, %v2958
      %v3087 = vmul.f32 %v2959, %v2959
      %v3088 = vmul.f32 %v2960, %v2960
      %v3089 = vmul.f32 %v2961, %v2961
      %v3090 = vmul.f32 %v2962, %v2962
      %v3091 = vmul.f32 %v2963, 0.5
      %v3092 = vmul.f32 %v2964, 0.5
      %v3093 = vmul.f32 %v2965, 0.5
      %v3094 = vmul.f32 %v2966, 0.5
      %v3095 = vmul.f32 %v2967, 0.5
      %v3096 = vmul.f32 %v2968, 0.5
      %v3097 = vmul.f32 %v2969, 0.5
      %v3098 = vmul.f32 %v2970, 0.5
      %v3099 = vmul.f32 %v2971, 0.5
      %v3100 = vmul.f32 %v2972, 0.5
      %v3101 = vmul.f32 %v2973, 0.5
      %v3102 = vmul.f32 %v2974, 0.5
      %v3103 = vmul.f32 %v2975, 0.5
      %v3104 = vmul.f32 %v2976, 0.5
      %v3105 = vmul.f32 %v2977, 0.5
      %v3106 = vmul.f32 %v2978, 0.5
      %v3107 = vmul.f32 %v2979, 0.5
      %v3108 = vmul.f32 %v2980, 0.5
      %v3109 = vmul.f32 %v2981, 0.5
      %v3110 = vmul.f32 %v2982, 0.5
      %v3111 = vmul.f32 %v2983, 0.5
      %v3112 = vmul.f32 %v2984, 0.5
      %v3113 = vmul.f32 %v2985, 0.5
      %v3114 = vmul.f32 %v2986, 0.5
      %v3115 = vmul.f32 %v2987, 0.5
      %v3116 = vmul.f32 %v2988, 0.5
      %v3117 = vmul.f32 %v2989, 0.5
      %v3118 = vmul.f32 %v2990, 0.5
      %v3119 = vmul.f32 %v2991, 0.5
      %v3120 = vmul.f32 %v2992, 0.5
      %v3121 = vmul.f32 %v2993, 0.5
      %v3122 = vmul.f32 %v2994, 0.5
      %v3123 = vmul.f32 %v2995, 0.5
      %v3124 = vmul.f32 %v2996, 0.5
      %v3125 = vmul.f32 %v2997, 0.5
      %v3126 = vmul.f32 %v2998, 0.5
      %v3127 = vmul.f32 %v2999, 0.5
      %v3128 = vmul.f32 %v3000, 0.5
      %v3129 = vmul.f32 %v3001, 0.5
      %v3130 = vmul.f32 %v3002, 0.5
      %v3131 = vmul.f32 %v3003, 0.5
      %v3132 = vmul.f32 %v3004, 0.5
      %v3133 = vmul.f32 %v3005, 0.5
      %v3134 = vmul.f32 %v3006, 0.5
      %v3135 = vmul.f32 %v3007, 0.5
      %v3136 = vmul.f32 %v3008, 0.5
      %v3137 = vmul.f32 %v3009, 0.5
      %v3138 = vmul.f32 %v3010, 0.5
      %v3139 = vmul.f32 %v3011, 0.5
      %v3140 = vmul.f32 %v3012, 0.5
      %v3141 = vmul.f32 %v3013, 0.5
      %v3142 = vmul.f32 %v3014, 0.5
      %v3143 = vmul.f32 %v3015, 0.5
      %v3144 = vmul.f32 %v3016, 0.5
      %v3145 = vmul.f32 %v3017, 0.5
      %v3146 = vmul.f32 %v3018, 0.5
      %v3147 = vmul.f32 %v3019, 0.5
      %v3148 = vmul.f32 %v3020, 0.5
      %v3149 = vmul.f32 %v3021, 0.5
      %v3150 = vmul.f32 %v3022, 0.5
      %v3151 = vmul.f32 %v3023, 0.5
      %v3152 = vmul.f32 %v3024, 0.5
      %v3153 = vmul.f32 %v3025, 0.5
      %v3154 = vmul.f32 %v3026, 0.5
      %v3155 = vmul.f32 %v3027, 0.5
      %v3156 = vmul.f32 %v3028, 0.5
      %v3157 = vmul.f32 %v3029, 0.5
      %v3158 = vmul.f32 %v3030, 0.5
      %v3159 = vmul.f32 %v3031, 0.5
      %v3160 = vmul.f32 %v3032, 0.5
      %v3161 = vmul.f32 %v3033, 0.5
      %v3162 = vmul.f32 %v3034, 0.5
      %v3163 = vmul.f32 %v3035, 0.5
      %v3164 = vmul.f32 %v3036, 0.5
      %v3165 = vmul.f32 %v3037, 0.5
      %v3166 = vmul.f32 %v3038, 0.5
      %v3167 = vmul.f32 %v3039, 0.5
      %v3168 = vmul.f32 %v3040, 0.5
      %v3169 = vmul.f32 %v3041, 0.5
      %v3170 = vmul.f32 %v3042, 0.5
      %v3171 = vmul.f32 %v3043, 0.5
      %v3172 = vmul.f32 %v3044, 0.5
      %v3173 = vmul.f32 %v3045, 0.5
      %v3174 = vmul.f32 %v3046, 0.5
      %v3175 = vmul.f32 %v3047, 0.5
      %v3176 = vmul.f32 %v3048, 0.5
      %v3177 = vmul.f32 %v3049, 0.5
      %v3178 = vmul.f32 %v3050, 0.5
      %v3179 = vmul.f32 %v3051, 0.5
      %v3180 = vmul.f32 %v3052, 0.5
      %v3181 = vmul.f32 %v3053, 0.5
      %v3182 = vmul.f32 %v3054, 0.5
      %v3183 = vmul.f32 %v3055, 0.5
      %v3184 = vmul.f32 %v3056, 0.5
      %v3185 = vmul.f32 %v3057, 0.5
      %v3186 = vmul.f32 %v3058, 0.5
      %v3187 = vmul.f32 %v3059, 0.5
      %v3188 = vmul.f32 %v3060, 0.5
      %v3189 = vmul.f32 %v3061, 0.5
      %v3190 = vmul.f32 %v3062, 0.5
      %v3191 = vmul.f32 %v3063, 0.5
      %v3192 = vmul.f32 %v3064, 0.5
      %v3193 = vmul.f32 %v3065, 0.5
      %v3194 = vmul.f32 %v3066, 0.5
      %v3195 = vmul.f32 %v3067, 0.5
      %v3196 = vmul.f32 %v3068, 0.5
      %v3197 = vmul.f32 %v3069, 0.5
      %v3198 = vmul.f32 %v3070, 0.5
      %v3199 = vmul.f32 %v3071, 0.5
      %v3200 = vmul.f32 %v3072, 0.5
      %v3201 = vmul.f32 %v3073, 0.5
      %v3202 = vmul.f32 %v3074, 0.5
      %v3203 = vmul.f32 %v3075, 0.5
      %v3204 = vmul.f32 %v3076, 0.5
      %v3205 = vmul.f32 %v3077, 0.5
      %v3206 = vmul.f32 %v3078, 0.5
      %v3207 = vmul.f32 %v3079, 0.5
      %v3208 = vmul.f32 %v3080, 0.5
      %v3209 = vmul.f32 %v3081, 0.5
      %v3210 = vmul.f32 %v3082, 0.5
      %v3211 = vmul.f32 %v3083, 0.5
      %v3212 = vmul.f32 %v3084, 0.5
      %v3213 = vmul.f32 %v3085, 0.5
      %v3214 = vmul.f32 %v3086, 0.5
      %v3215 = vmul.f32 %v3087, 0.5
      %v3216 = vmul.f32 %v3088, 0.5
      %v3217 = vmul.f32 %v3089, 0.5
      %v3218 = vmul.f32 %v3090, 0.5
      %v3219 = vmul.f32 %v2835, -1.0
      %v3220 = vmul.f32 %v2836, -1.0
      %v3221 = vmul.f32 %v2837, -1.0
      %v3222 = vmul.f32 %v2838, -1.0
      %v3223 = vmul.f32 %v2839, -1.0
      %v3224 = vmul.f32 %v2840, -1.0
      %v3225 = vmul.f32 %v2841, -1.0
      %v3226 = vmul.f32 %v2842, -1.0
      %v3227 = vmul.f32 %v2843, -1.0
      %v3228 = vmul.f32 %v2844, -1.0
      %v3229 = vmul.f32 %v2845, -1.0
      %v3230 = vmul.f32 %v2846, -1.0
      %v3231 = vmul.f32 %v2847, -1.0
      %v3232 = vmul.f32 %v2848, -1.0
      %v3233 = vmul.f32 %v2849, -1.0
      %v3234 = vmul.f32 %v2850, -1.0
      %v3235 = vmul.f32 %v2851, -1.0
      %v3236 = vmul.f32 %v2852, -1.0
      %v3237 = vmul.f32 %v2853, -1.0
      %v3238 = vmul.f32 %v2854, -1.0
      %v3239 = vmul.f32 %v2855, -1.0
      %v3240 = vmul.f32 %v2856, -1.0
      %v3241 = vmul.f32 %v2857, -1.0
      %v3242 = vmul.f32 %v2858, -1.0
      %v3243 = vmul.f32 %v2859, -1.0
      %v3244 = vmul.f32 %v2860, -1.0
      %v3245 = vmul.f32 %v2861, -1.0
      %v3246 = vmul.f32 %v2862, -1.0
      %v3247 = vmul.f32 %v2863, -1.0
      %v3248 = vmul.f32 %v2864, -1.0
      %v3249 = vmul.f32 %v2865, -1.0
      %v3250 = vmul.f32 %v2866, -1.0
      %v3251 = vmul.f32 %v2867, -1.0
      %v3252 = vmul.f32 %v2868, -1.0
      %v3253 = vmul.f32 %v2869, -1.0
      %v3254 = vmul.f32 %v2870, -1.0
      %v3255 = vmul.f32 %v2871, -1.0
      %v3256 = vmul.f32 %v2872, -1.0
      %v3257 = vmul.f32 %v2873, -1.0
      %v3258 = vmul.f32 %v2874, -1.0
      %v3259 = vmul.f32 %v2875, -1.0
      %v3260 = vmul.f32 %v2876, -1.0
      %v3261 = vmul.f32 %v2877, -1.0
      %v3262 = vmul.f32 %v2878, -1.0
      %v3263 = vmul.f32 %v2879, -1.0
      %v3264 = vmul.f32 %v2880, -1.0
      %v3265 = vmul.f32 %v2881, -1.0
      %v3266 = vmul.f32 %v2882, -1.0
      %v3267 = vmul.f32 %v2883, -1.0
      %v3268 = vmul.f32 %v2884, -1.0
      %v3269 = vmul.f32 %v2885, -1.0
      %v3270 = vmul.f32 %v2886, -1.0
      %v3271 = vmul.f32 %v2887, -1.0
      %v3272 = vmul.f32 %v2888, -1.0
      %v3273 = vmul.f32 %v2889, -1.0
      %v3274 = vmul.f32 %v2890, -1.0
      %v3275 = vmul.f32 %v2891, -1.0
      %v3276 = vmul.f32 %v2892, -1.0
      %v3277 = vmul.f32 %v2893, -1.0
      %v3278 = vmul.f32 %v2894, -1.0
      %v3279 = vmul.f32 %v2895, -1.0
      %v3280 = vmul.f32 %v2896, -1.0
      %v3281 = vmul.f32 %v2897, -1.0
      %v3282 = vmul.f32 %v2898, -1.0
      %v3283 = vmul.f32 %v2899, -1.0
      %v3284 = vmul.f32 %v2900, -1.0
      %v3285 = vmul.f32 %v2901, -1.0
      %v3286 = vmul.f32 %v2902, -1.0
      %v3287 = vmul.f32 %v2903, -1.0
      %v3288 = vmul.f32 %v2904, -1.0
      %v3289 = vmul.f32 %v2905, -1.0
      %v3290 = vmul.f32 %v2906, -1.0
      %v3291 = vmul.f32 %v2907, -1.0
      %v3292 = vmul.f32 %v2908, -1.0
      %v3293 = vmul.f32 %v2909, -1.0
      %v3294 = vmul.f32 %v2910, -1.0
      %v3295 = vmul.f32 %v2911, -1.0
      %v3296 = vmul.f32 %v2912, -1.0
      %v3297 = vmul.f32 %v2913, -1.0
      %v3298 = vmul.f32 %v2914, -1.0
      %v3299 = vmul.f32 %v2915, -1.0
      %v3300 = vmul.f32 %v2916, -1.0
      %v3301 = vmul.f32 %v2917, -1.0
      %v3302 = vmul.f32 %v2918, -1.0
      %v3303 = vmul.f32 %v2919, -1.0
      %v3304 = vmul.f32 %v2920, -1.0
      %v3305 = vmul.f32 %v2921, -1.0
      %v3306 = vmul.f32 %v2922, -1.0
      %v3307 = vmul.f32 %v2923, -1.0
      %v3308 = vmul.f32 %v2924, -1.0
      %v3309 = vmul.f32 %v2925, -1.0
      %v3310 = vmul.f32 %v2926, -1.0
      %v3311 = vmul.f32 %v2927, -1.0
      %v3312 = vmul.f32 %v2928, -1.0
      %v3313 = vmul.f32 %v2929, -1.0
      %v3314 = vmul.f32 %v2930, -1.0
      %v3315 = vmul.f32 %v2931, -1.0
      %v3316 = vmul.f32 %v2932, -1.0
      %v3317 = vmul.f32 %v2933, -1.0
      %v3318 = vmul.f32 %v2934, -1.0
      %v3319 = vmul.f32 %v2935, -1.0
      %v3320 = vmul.f32 %v2936, -1.0
      %v3321 = vmul.f32 %v2937, -1.0
      %v3322 = vmul.f32 %v2938, -1.0
      %v3323 = vmul.f32 %v2939, -1.0
      %v3324 = vmul.f32 %v2940, -1.0
      %v3325 = vmul.f32 %v2941, -1.0
      %v3326 = vmul.f32 %v2942, -1.0
      %v3327 = vmul.f32 %v2943, -1.0
      %v3328 = vmul.f32 %v2944, -1.0
      %v3329 = vmul.f32 %v2945, -1.0
      %v3330 = vmul.f32 %v2946, -1.0
      %v3331 = vmul.f32 %v2947, -1.0
      %v3332 = vmul.f32 %v2948, -1.0
      %v3333 = vmul.f32 %v2949, -1.0
      %v3334 = vmul.f32 %v2950, -1.0
      %v3335 = vmul.f32 %v2951, -1.0
      %v3336 = vmul.f32 %v2952, -1.0
      %v3337 = vmul.f32 %v2953, -1.0
      %v3338 = vmul.f32 %v2954, -1.0
      %v3339 = vmul.f32 %v2955, -1.0
      %v3340 = vmul.f32 %v2956, -1.0
      %v3341 = vmul.f32 %v2957, -1.0
      %v3342 = vmul.f32 %v2958, -1.0
      %v3343 = vmul.f32 %v2959, -1.0
      %v3344 = vmul.f32 %v2960, -1.0
      %v3345 = vmul.f32 %v2961, -1.0
      %v3346 = vmul.f32 %v2962, -1.0
      %v3347 = vmul.f32 %v3219, %v2451
      %v3348 = vmul.f32 %v3220, %v2452
      %v3349 = vmul.f32 %v3221, %v2453
      %v3350 = vmul.f32 %v3222, %v2454
      %v3351 = vmul.f32 %v3223, %v2455
      %v3352 = vmul.f32 %v3224, %v2456
      %v3353 = vmul.f32 %v3225, %v2457
      %v3354 = vmul.f32 %v3226, %v2458
      %v3355 = vmul.f32 %v3227, %v2459
      %v3356 = vmul.f32 %v3228, %v2460
      %v3357 = vmul.f32 %v3229, %v2461
      %v3358 = vmul.f32 %v3230, %v2462
      %v3359 = vmul.f32 %v3231, %v2463
      %v3360 = vmul.f32 %v3232, %v2464
      %v3361 = vmul.f32 %v3233, %v2465
      %v3362 = vmul.f32 %v3234, %v2466
      %v3363 = vmul.f32 %v3235, %v2467
      %v3364 = vmul.f32 %v3236, %v2468
      %v3365 = vmul.f32 %v3237, %v2469
      %v3366 = vmul.f32 %v3238, %v2470
      %v3367 = vmul.f32 %v3239, %v2471
      %v3368 = vmul.f32 %v3240, %v2472
      %v3369 = vmul.f32 %v3241, %v2473
      %v3370 = vmul.f32 %v3242, %v2474
      %v3371 = vmul.f32 %v3243, %v2475
      %v3372 = vmul.f32 %v3244, %v2476
      %v3373 = vmul.f32 %v3245, %v2477
      %v3374 = vmul.f32 %v3246, %v2478
      %v3375 = vmul.f32 %v3247, %v2479
      %v3376 = vmul.f32 %v3248, %v2480
      %v3377 = vmul.f32 %v3249, %v2481
      %v3378 = vmul.f32 %v3250, %v2482
      %v3379 = vmul.f32 %v3251, %v2483
      %v3380 = vmul.f32 %v3252, %v2484
      %v3381 = vmul.f32 %v3253, %v2485
      %v3382 = vmul.f32 %v3254, %v2486
      %v3383 = vmul.f32 %v3255, %v2487
      %v3384 = vmul.f32 %v3256, %v2488
      %v3385 = vmul.f32 %v3257, %v2489
      %v3386 = vmul.f32 %v3258, %v2490
      %v3387 = vmul.f32 %v3259, %v2491
      %v3388 = vmul.f32 %v3260, %v2492
      %v3389 = vmul.f32 %v3261, %v2493
      %v3390 = vmul.f32 %v3262, %v2494
      %v3391 = vmul.f32 %v3263, %v2495
      %v3392 = vmul.f32 %v3264, %v2496
      %v3393 = vmul.f32 %v3265, %v2497
      %v3394 = vmul.f32 %v3266, %v2498
      %v3395 = vmul.f32 %v3267, %v2499
      %v3396 = vmul.f32 %v3268, %v2500
      %v3397 = vmul.f32 %v3269, %v2501
      %v3398 = vmul.f32 %v3270, %v2502
      %v3399 = vmul.f32 %v3271, %v2503
      %v3400 = vmul.f32 %v3272, %v2504
      %v3401 = vmul.f32 %v3273, %v2505
      %v3402 = vmul.f32 %v3274, %v2506
      %v3403 = vmul.f32 %v3275, %v2507
      %v3404 = vmul.f32 %v3276, %v2508
      %v3405 = vmul.f32 %v3277, %v2509
      %v3406 = vmul.f32 %v3278, %v2510
      %v3407 = vmul.f32 %v3279, %v2511
      %v3408 = vmul.f32 %v3280, %v2512
      %v3409 = vmul.f32 %v3281, %v2513
      %v3410 = vmul.f32 %v3282, %v2514
      %v3411 = vmul.f32 %v3283, %v2515
      %v3412 = vmul.f32 %v3284, %v2516
      %v3413 = vmul.f32 %v3285, %v2517
      %v3414 = vmul.f32 %v3286, %v2518
      %v3415 = vmul.f32 %v3287, %v2519
      %v3416 = vmul.f32 %v3288, %v2520
      %v3417 = vmul.f32 %v3289, %v2521
      %v3418 = vmul.f32 %v3290, %v2522
      %v3419 = vmul.f32 %v3291, %v2523
      %v3420 = vmul.f32 %v3292, %v2524
      %v3421 = vmul.f32 %v3293, %v2525
      %v3422 = vmul.f32 %v3294, %v2526
      %v3423 = vmul.f32 %v3295, %v2527
      %v3424 = vmul.f32 %v3296, %v2528
      %v3425 = vmul.f32 %v3297, %v2529
      %v3426 = vmul.f32 %v3298, %v2530
      %v3427 = vmul.f32 %v3299, %v2531
      %v3428 = vmul.f32 %v3300, %v2532
      %v3429 = vmul.f32 %v3301, %v2533
      %v3430 = vmul.f32 %v3302, %v2534
      %v3431 = vmul.f32 %v3303, %v2535
      %v3432 = vmul.f32 %v3304, %v2536
      %v3433 = vmul.f32 %v3305, %v2537
      %v3434 = vmul.f32 %v3306, %v2538
      %v3435 = vmul.f32 %v3307, %v2539
      %v3436 = vmul.f32 %v3308, %v2540
      %v3437 = vmul.f32 %v3309, %v2541
      %v3438 = vmul.f32 %v3310, %v2542
      %v3439 = vmul.f32 %v3311, %v2543
      %v3440 = vmul.f32 %v3312, %v2544
      %v3441 = vmul.f32 %v3313, %v2545
      %v3442 = vmul.f32 %v3314, %v2546
      %v3443 = vmul.f32 %v3315, %v2547
      %v3444 = vmul.f32 %v3316, %v2548
      %v3445 = vmul.f32 %v3317, %v2549
      %v3446 = vmul.f32 %v3318, %v2550
      %v3447 = vmul.f32 %v3319, %v2551
      %v3448 = vmul.f32 %v3320, %v2552
      %v3449 = vmul.f32 %v3321, %v2553
      %v3450 = vmul.f32 %v3322, %v2554
      %v3451 = vmul.f32 %v3323, %v2555
      %v3452 = vmul.f32 %v3324, %v2556
      %v3453 = vmul.f32 %v3325, %v2557
      %v3454 = vmul.f32 %v3326, %v2558
      %v3455 = vmul.f32 %v3327, %v2559
      %v3456 = vmul.f32 %v3328, %v2560
      %v3457 = vmul.f32 %v3329, %v2561
      %v3458 = vmul.f32 %v3330, %v2562
      %v3459 = vmul.f32 %v3331, %v2563
      %v3460 = vmul.f32 %v3332, %v2564
      %v3461 = vmul.f32 %v3333, %v2565
      %v3462 = vmul.f32 %v3334, %v2566
      %v3463 = vmul.f32 %v3335, %v2567
      %v3464 = vmul.f32 %v3336, %v2568
      %v3465 = vmul.f32 %v3337, %v2569
      %v3466 = vmul.f32 %v3338, %v2570
      %v3467 = vmul.f32 %v3339, %v2571
      %v3468 = vmul.f32 %v3340, %v2572
      %v3469 = vmul.f32 %v3341, %v2573
      %v3470 = vmul.f32 %v3342, %v2574
      %v3471 = vmul.f32 %v3343, %v2575
      %v3472 = vmul.f32 %v3344, %v2576
      %v3473 = vmul.f32 %v3345, %v2577
      %v3474 = vmul.f32 %v3346, %v2578
      %v3475 = vld [vmem:[#allocation2] sm:$0xff]
      %v3476 = vld [vmem:[#allocation2 + $0x8] sm:$0xff]
      %v3477 = vld [vmem:[#allocation2 + $0x10] sm:$0xff]
      %v3478 = vld [vmem:[#allocation2 + $0x18] sm:$0xff]
      %v3479 = vld [vmem:[#allocation2 + $0x20] sm:$0xff]
      %v3480 = vld [vmem:[#allocation2 + $0x28] sm:$0xff]
      %v3481 = vld [vmem:[#allocation2 + $0x30] sm:$0xff]
      %v3482 = vld [vmem:[#allocation2 + $0x38] sm:$0xff]
      %v3483 = vld [vmem:[#allocation2 + $0x40] sm:$0xff]
      %v3484 = vld [vmem:[#allocation2 + $0x48] sm:$0xff]
      %v3485 = vld [vmem:[#allocation2 + $0x50] sm:$0xff]
      %v3486 = vld [vmem:[#allocation2 + $0x58] sm:$0xff]
      %v3487 = vld [vmem:[#allocation2 + $0x60] sm:$0xff]
      %v3488 = vld [vmem:[#allocation2 + $0x68] sm:$0xff]
      %v3489 = vld [vmem:[#allocation2 + $0x70] sm:$0xff]
      %v3490 = vld [vmem:[#allocation2 + $0x78] sm:$0xff]
      %v3491 = vld [vmem:[%s257] sm:$0xff]
      %v3492 = vld [vmem:[%s257 + $0x8] sm:$0xff]
      %v3493 = vld [vmem:[%s257 + $0x10] sm:$0xff]
      %v3494 = vld [vmem:[%s257 + $0x18] sm:$0xff]
      %v3495 = vld [vmem:[%s257 + $0x20] sm:$0xff]
      %v3496 = vld [vmem:[%s257 + $0x28] sm:$0xff]
      %v3497 = vld [vmem:[%s257 + $0x30] sm:$0xff]
      %v3498 = vld [vmem:[%s257 + $0x38] sm:$0xff]
      %v3499 = vld [vmem:[%s257 + $0x40] sm:$0xff]
      %v3500 = vld [vmem:[%s257 + $0x48] sm:$0xff]
      %v3501 = vld [vmem:[%s257 + $0x50] sm:$0xff]
      %v3502 = vld [vmem:[%s257 + $0x58] sm:$0xff]
      %v3503 = vld [vmem:[%s257 + $0x60] sm:$0xff]
      %v3504 = vld [vmem:[%s257 + $0x68] sm:$0xff]
      %v3505 = vld [vmem:[%s257 + $0x70] sm:$0xff]
      %v3506 = vld [vmem:[%s257 + $0x78] sm:$0xff]
      %v3507 = vld [vmem:[%s257 + $0x80] sm:$0xff]
      %v3508 = vld [vmem:[%s257 + $0x88] sm:$0xff]
      %v3509 = vld [vmem:[%s257 + $0x90] sm:$0xff]
      %v3510 = vld [vmem:[%s257 + $0x98] sm:$0xff]
      %v3511 = vld [vmem:[%s257 + $0xa0] sm:$0xff]
      %v3512 = vld [vmem:[%s257 + $0xa8] sm:$0xff]
      %v3513 = vld [vmem:[%s257 + $0xb0] sm:$0xff]
      %v3514 = vld [vmem:[%s257 + $0xb8] sm:$0xff]
      %v3515 = vld [vmem:[%s257 + $0xc0] sm:$0xff]
      %v3516 = vld [vmem:[%s257 + $0xc8] sm:$0xff]
      %v3517 = vld [vmem:[%s257 + $0xd0] sm:$0xff]
      %v3518 = vld [vmem:[%s257 + $0xd8] sm:$0xff]
      %v3519 = vld [vmem:[%s257 + $0xe0] sm:$0xff]
      %v3520 = vld [vmem:[%s257 + $0xe8] sm:$0xff]
      %v3521 = vld [vmem:[%s257 + $0xf0] sm:$0xff]
      %v3522 = vld [vmem:[%s257 + $0xf8] sm:$0xff]
      %v3523 = vld [vmem:[%s257 + $0x100] sm:$0xff]
      %v3524 = vld [vmem:[%s257 + $0x108] sm:$0xff]
      %v3525 = vld [vmem:[%s257 + $0x110] sm:$0xff]
      %v3526 = vld [vmem:[%s257 + $0x118] sm:$0xff]
      %v3527 = vld [vmem:[%s257 + $0x120] sm:$0xff]
      %v3528 = vld [vmem:[%s257 + $0x128] sm:$0xff]
      %v3529 = vld [vmem:[%s257 + $0x130] sm:$0xff]
      %v3530 = vld [vmem:[%s257 + $0x138] sm:$0xff]
      %v3531 = vld [vmem:[%s257 + $0x140] sm:$0xff]
      %v3532 = vld [vmem:[%s257 + $0x148] sm:$0xff]
      %v3533 = vld [vmem:[%s257 + $0x150] sm:$0xff]
      %v3534 = vld [vmem:[%s257 + $0x158] sm:$0xff]
      %v3535 = vld [vmem:[%s257 + $0x160] sm:$0xff]
      %v3536 = vld [vmem:[%s257 + $0x168] sm:$0xff]
      %v3537 = vld [vmem:[%s257 + $0x170] sm:$0xff]
      %v3538 = vld [vmem:[%s257 + $0x178] sm:$0xff]
      %v3539 = vld [vmem:[%s257 + $0x180] sm:$0xff]
      %v3540 = vld [vmem:[%s257 + $0x188] sm:$0xff]
      %v3541 = vld [vmem:[%s257 + $0x190] sm:$0xff]
      %v3542 = vld [vmem:[%s257 + $0x198] sm:$0xff]
      %v3543 = vld [vmem:[%s257 + $0x1a0] sm:$0xff]
      %v3544 = vld [vmem:[%s257 + $0x1a8] sm:$0xff]
      %v3545 = vld [vmem:[%s257 + $0x1b0] sm:$0xff]
      %v3546 = vld [vmem:[%s257 + $0x1b8] sm:$0xff]
      %v3547 = vld [vmem:[%s257 + $0x1c0] sm:$0xff]
      %v3548 = vld [vmem:[%s257 + $0x1c8] sm:$0xff]
      %v3549 = vld [vmem:[%s257 + $0x1d0] sm:$0xff]
      %v3550 = vld [vmem:[%s257 + $0x1d8] sm:$0xff]
      %v3551 = vld [vmem:[%s257 + $0x1e0] sm:$0xff]
      %v3552 = vld [vmem:[%s257 + $0x1e8] sm:$0xff]
      %v3553 = vld [vmem:[%s257 + $0x1f0] sm:$0xff]
      %v3554 = vld [vmem:[%s257 + $0x1f8] sm:$0xff]
      %v3555 = vld [vmem:[%s257 + $0x200] sm:$0xff]
      %v3556 = vld [vmem:[%s257 + $0x208] sm:$0xff]
      %v3557 = vld [vmem:[%s257 + $0x210] sm:$0xff]
      %v3558 = vld [vmem:[%s257 + $0x218] sm:$0xff]
      %v3559 = vld [vmem:[%s257 + $0x220] sm:$0xff]
      %v3560 = vld [vmem:[%s257 + $0x228] sm:$0xff]
      %v3561 = vld [vmem:[%s257 + $0x230] sm:$0xff]
      %v3562 = vld [vmem:[%s257 + $0x238] sm:$0xff]
      %v3563 = vld [vmem:[%s257 + $0x240] sm:$0xff]
      %v3564 = vld [vmem:[%s257 + $0x248] sm:$0xff]
      %v3565 = vld [vmem:[%s257 + $0x250] sm:$0xff]
      %v3566 = vld [vmem:[%s257 + $0x258] sm:$0xff]
      %v3567 = vld [vmem:[%s257 + $0x260] sm:$0xff]
      %v3568 = vld [vmem:[%s257 + $0x268] sm:$0xff]
      %v3569 = vld [vmem:[%s257 + $0x270] sm:$0xff]
      %v3570 = vld [vmem:[%s257 + $0x278] sm:$0xff]
      %v3571 = vld [vmem:[%s257 + $0x280] sm:$0xff]
      %v3572 = vld [vmem:[%s257 + $0x288] sm:$0xff]
      %v3573 = vld [vmem:[%s257 + $0x290] sm:$0xff]
      %v3574 = vld [vmem:[%s257 + $0x298] sm:$0xff]
      %v3575 = vld [vmem:[%s257 + $0x2a0] sm:$0xff]
      %v3576 = vld [vmem:[%s257 + $0x2a8] sm:$0xff]
      %v3577 = vld [vmem:[%s257 + $0x2b0] sm:$0xff]
      %v3578 = vld [vmem:[%s257 + $0x2b8] sm:$0xff]
      %v3579 = vld [vmem:[%s257 + $0x2c0] sm:$0xff]
      %v3580 = vld [vmem:[%s257 + $0x2c8] sm:$0xff]
      %v3581 = vld [vmem:[%s257 + $0x2d0] sm:$0xff]
      %v3582 = vld [vmem:[%s257 + $0x2d8] sm:$0xff]
      %v3583 = vld [vmem:[%s257 + $0x2e0] sm:$0xff]
      %v3584 = vld [vmem:[%s257 + $0x2e8] sm:$0xff]
      %v3585 = vld [vmem:[%s257 + $0x2f0] sm:$0xff]
      %v3586 = vld [vmem:[%s257 + $0x2f8] sm:$0xff]
      %v3587 = vld [vmem:[%s257 + $0x300] sm:$0xff]
      %v3588 = vld [vmem:[%s257 + $0x308] sm:$0xff]
      %v3589 = vld [vmem:[%s257 + $0x310] sm:$0xff]
      %v3590 = vld [vmem:[%s257 + $0x318] sm:$0xff]
      %v3591 = vld [vmem:[%s257 + $0x320] sm:$0xff]
      %v3592 = vld [vmem:[%s257 + $0x328] sm:$0xff]
      %v3593 = vld [vmem:[%s257 + $0x330] sm:$0xff]
      %v3594 = vld [vmem:[%s257 + $0x338] sm:$0xff]
      %v3595 = vld [vmem:[%s257 + $0x340] sm:$0xff]
      %v3596 = vld [vmem:[%s257 + $0x348] sm:$0xff]
      %v3597 = vld [vmem:[%s257 + $0x350] sm:$0xff]
      %v3598 = vld [vmem:[%s257 + $0x358] sm:$0xff]
      %v3599 = vld [vmem:[%s257 + $0x360] sm:$0xff]
      %v3600 = vld [vmem:[%s257 + $0x368] sm:$0xff]
      %v3601 = vld [vmem:[%s257 + $0x370] sm:$0xff]
      %v3602 = vld [vmem:[%s257 + $0x378] sm:$0xff]
      %v3603 = vld [vmem:[%s257 + $0x380] sm:$0xff]
      %v3604 = vld [vmem:[%s257 + $0x388] sm:$0xff]
      %v3605 = vld [vmem:[%s257 + $0x390] sm:$0xff]
      %v3606 = vld [vmem:[%s257 + $0x398] sm:$0xff]
      %v3607 = vld [vmem:[%s257 + $0x3a0] sm:$0xff]
      %v3608 = vld [vmem:[%s257 + $0x3a8] sm:$0xff]
      %v3609 = vld [vmem:[%s257 + $0x3b0] sm:$0xff]
      %v3610 = vld [vmem:[%s257 + $0x3b8] sm:$0xff]
      %v3611 = vld [vmem:[%s257 + $0x3c0] sm:$0xff]
      %v3612 = vld [vmem:[%s257 + $0x3c8] sm:$0xff]
      %v3613 = vld [vmem:[%s257 + $0x3d0] sm:$0xff]
      %v3614 = vld [vmem:[%s257 + $0x3d8] sm:$0xff]
      %v3615 = vld [vmem:[%s257 + $0x3e0] sm:$0xff]
      %v3616 = vld [vmem:[%s257 + $0x3e8] sm:$0xff]
      %v3617 = vld [vmem:[%s257 + $0x3f0] sm:$0xff]
      %v3618 = vld [vmem:[%s257 + $0x3f8] sm:$0xff]
      %3619 = vmatprep.subr.mxu0 0.0
      %3620 = vmatpush1.msra.mxu0 %v3491
      %3621 = vmatprep.subr.mxu0 0.0
      %3622 = vmatpush1.msra.mxu0 %v3492
      %3623 = vmatprep.subr.mxu0 0.0
      %3624 = vmatpush1.msra.mxu0 %v3493
      %3625 = vmatprep.subr.mxu0 0.0
      %3626 = vmatpush1.msra.mxu0 %v3494
      %3627 = vmatprep.subr.mxu0 0.0
      %3628 = vmatpush1.msra.mxu0 %v3495
      %3629 = vmatprep.subr.mxu0 0.0
      %3630 = vmatpush1.msra.mxu0 %v3496
      %3631 = vmatprep.subr.mxu0 0.0
      %3632 = vmatpush1.msra.mxu0 %v3497
      %3633 = vmatprep.subr.mxu0 0.0
      %3634 = vmatpush1.msra.mxu0 %v3498
      %3635 = vmatprep.subr.mxu0 0.0
      %3636 = vmatpush1.msra.mxu0 %v3499
      %3637 = vmatprep.subr.mxu0 0.0
      %3638 = vmatpush1.msra.mxu0 %v3500
      %3639 = vmatprep.subr.mxu0 0.0
      %3640 = vmatpush1.msra.mxu0 %v3501
      %3641 = vmatprep.subr.mxu0 0.0
      %3642 = vmatpush1.msra.mxu0 %v3502
      %3643 = vmatprep.subr.mxu0 0.0
      %3644 = vmatpush1.msra.mxu0 %v3503
      %3645 = vmatprep.subr.mxu0 0.0
      %3646 = vmatpush1.msra.mxu0 %v3504
      %3647 = vmatprep.subr.mxu0 0.0
      %3648 = vmatpush1.msra.mxu0 %v3505
      %3649 = vmatprep.subr.mxu0 0.0
      %3650 = vmatpush1.msra.mxu0 %v3506
      %3651 = vmatprep.subr.mxu0 0.0
      %3652 = vmatpush1.msra.mxu0 %v3507
      %3653 = vmatprep.subr.mxu0 0.0
      %3654 = vmatpush1.msra.mxu0 %v3508
      %3655 = vmatprep.subr.mxu0 0.0
      %3656 = vmatpush1.msra.mxu0 %v3509
      %3657 = vmatprep.subr.mxu0 0.0
      %3658 = vmatpush1.msra.mxu0 %v3510
      %3659 = vmatprep.subr.mxu0 0.0
      %3660 = vmatpush1.msra.mxu0 %v3511
      %3661 = vmatprep.subr.mxu0 0.0
      %3662 = vmatpush1.msra.mxu0 %v3512
      %3663 = vmatprep.subr.mxu0 0.0
      %3664 = vmatpush1.msra.mxu0 %v3513
      %3665 = vmatprep.subr.mxu0 0.0
      %3666 = vmatpush1.msra.mxu0 %v3514
      %3667 = vmatprep.subr.mxu0 0.0
      %3668 = vmatpush1.msra.mxu0 %v3515
      %3669 = vmatprep.subr.mxu0 0.0
      %3670 = vmatpush1.msra.mxu0 %v3516
      %3671 = vmatprep.subr.mxu0 0.0
      %3672 = vmatpush1.msra.mxu0 %v3517
      %3673 = vmatprep.subr.mxu0 0.0
      %3674 = vmatpush1.msra.mxu0 %v3518
      %3675 = vmatprep.subr.mxu0 0.0
      %3676 = vmatpush1.msra.mxu0 %v3519
      %3677 = vmatprep.subr.mxu0 0.0
      %3678 = vmatpush1.msra.mxu0 %v3520
      %3679 = vmatprep.subr.mxu0 0.0
      %3680 = vmatpush1.msra.mxu0 %v3521
      %3681 = vmatprep.subr.mxu0 0.0
      %3682 = vmatpush1.msra.mxu0 %v3522
      %3683 = vmatprep.mubr.f32.mxu0 %v3348
      %3684 = vmatmul.mubr.f32.gmra.mrb[0].mxu0 %v3347
      %v3685 = vpop.f32.mrb[0].mxu0
      %v3686 = vadd.f32 0.0, %v3685
      %v3687 = vpop.f32.mrb[0].mxu0
      %3688 = vmatprep.mubr.f32.mxu0 %v3356
      %3689 = vmatmul.mubr.f32.gmra.mrb[0].mxu0 %v3355
      %v3690 = vpop.f32.mrb[0].mxu0
      %v3691 = vadd.f32 0.0, %v3690
      %v3692 = vpop.f32.mrb[0].mxu0
      %3693 = vmatprep.mubr.f32.mxu0 %v3364
      %3694 = vmatmul.mubr.f32.gmra.mrb[0].mxu0 %v3363
      %v3695 = vpop.f32.mrb[0].mxu0
      %v3696 = vadd.f32 0.0, %v3695
      %v3697 = vpop.f32.mrb[0].mxu0
      %3698 = vmatprep.mubr.f32.mxu0 %v3372
      %3699 = vmatmul.mubr.f32.gmra.mrb[0].mxu0 %v3371
      %v3700 = vpop.f32.mrb[0].mxu0
      %v3701 = vadd.f32 0.0, %v3700
      %v3702 = vpop.f32.mrb[0].mxu0
      %3703 = vmatprep.mubr.f32.mxu0 %v3380
      %3704 = vmatmul.mubr.f32.gmra.mrb[0].mxu0 %v3379
      %v3705 = vpop.f32.mrb[0].mxu0
      %v3706 = vadd.f32 0.0, %v3705
      %v3707 = vpop.f32.mrb[0].mxu0
      %3708 = vmatprep.mubr.f32.mxu0 %v3388
      %3709 = vmatmul.mubr.f32.gmra.mrb[0].mxu0 %v3387
      %v3710 = vpop.f32.mrb[0].mxu0
      %v3711 = vadd.f32 0.0, %v3710
      %v3712 = vpop.f32.mrb[0].mxu0
      %3713 = vmatprep.mubr.f32.mxu0 %v3396
      %3714 = vmatmul.mubr.f32.gmra.mrb[0].mxu0 %v3395
      %v3715 = vpop.f32.mrb[0].mxu0
      %v3716 = vadd.f32 0.0, %v3715
      %v3717 = vpop.f32.mrb[0].mxu0
      %3718 = vmatprep.mubr.f32.mxu0 %v3404
      %3719 = vmatmul.mubr.f32.gmra.mrb[0].mxu0 %v3403
      %v3720 = vpop.f32.mrb[0].mxu0
      %v3721 = vadd.f32 0.0, %v3720
      %v3722 = vpop.f32.mrb[0].mxu0
      %3723 = vmatprep.mubr.f32.mxu0 %v3412
      %3724 = vmatmul.mubr.f32.gmra.mrb[0].mxu0 %v3411
      %v3725 = vpop.f32.mrb[0].mxu0
      %v3726 = vadd.f32 0.0, %v3725
      %v3727 = vpop.f32.mrb[0].mxu0
      %3728 = vmatprep.mubr.f32.mxu0 %v3420
      %3729 = vmatmul.mubr.f32.gmra.mrb[0].mxu0 %v3419
      %v3730 = vpop.f32.mrb[0].mxu0
      %v3731 = vadd.f32 0.0, %v3730
      %v3732 = vpop.f32.mrb[0].mxu0
      %3733 = vmatprep.mubr.f32.mxu0 %v3428
      %3734 = vmatmul.mubr.f32.gmra.mrb[0].mxu0 %v3427
      %v3735 = vpop.f32.mrb[0].mxu0
      %v3736 = vadd.f32 0.0, %v3735
      %v3737 = vpop.f32.mrb[0].mxu0
      %3738 = vmatprep.mubr.f32.mxu0 %v3436
      %3739 = vmatmul.mubr.f32.gmra.mrb[0].mxu0 %v3435
      %v3740 = vpop.f32.mrb[0].mxu0
      %v3741 = vadd.f32 0.0, %v3740
      %v3742 = vpop.f32.mrb[0].mxu0
      %3743 = vmatprep.mubr.f32.mxu0 %v3444
      %3744 = vmatmul.mubr.f32.gmra.mrb[0].mxu0 %v3443
      %v3745 = vpop.f32.mrb[0].mxu0
      %v3746 = vadd.f32 0.0, %v3745
      %v3747 = vpop.f32.mrb[0].mxu0
      %3748 = vmatprep.mubr.f32.mxu0 %v3452
      %3749 = vmatmul.mubr.f32.gmra.mrb[0].mxu0 %v3451
      %v3750 = vpop.f32.mrb[0].mxu0
      %v3751 = vadd.f32 0.0, %v3750
      %v3752 = vpop.f32.mrb[0].mxu0
      %3753 = vmatprep.mubr.f32.mxu0 %v3460
      %3754 = vmatmul.mubr.f32.gmra.mrb[0].mxu0 %v3459
      %v3755 = vpop.f32.mrb[0].mxu0
      %v3756 = vadd.f32 0.0, %v3755
      %v3757 = vpop.f32.mrb[0].mxu0
      %3758 = vmatprep.mubr.f32.mxu0 %v3468
      %3759 = vmatmul.mubr.f32.gmra.mrb[0].mxu0 %v3467
      %v3760 = vpop.f32.mrb[0].mxu0
      %v3761 = vadd.f32 0.0, %v3760
      %v3762 = vpop.f32.mrb[0].mxu0
      %3763 = vdwg.mxu0
      %3764 = vmatprep.subr.mxu0 0.0
      %3765 = vmatpush1.msra.mxu0 %v3523
      %3766 = vmatprep.subr.mxu0 0.0
      %3767 = vmatpush1.msra.mxu0 %v3524
      %3768 = vmatprep.subr.mxu0 0.0
      %3769 = vmatpush1.msra.mxu0 %v3525
      %3770 = vmatprep.subr.mxu0 0.0
      %3771 = vmatpush1.msra.mxu0 %v3526
      %3772 = vmatprep.subr.mxu0 0.0
      %3773 = vmatpush1.msra.mxu0 %v3527
      %3774 = vmatprep.subr.mxu0 0.0
      %3775 = vmatpush1.msra.mxu0 %v3528
      %3776 = vmatprep.subr.mxu0 0.0
      %3777 = vmatpush1.msra.mxu0 %v3529
      %3778 = vmatprep.subr.mxu0 0.0
      %3779 = vmatpush1.msra.mxu0 %v3530
      %3780 = vmatprep.subr.mxu0 0.0
      %3781 = vmatpush1.msra.mxu0 %v3531
      %3782 = vmatprep.subr.mxu0 0.0
      %3783 = vmatpush1.msra.mxu0 %v3532
      %3784 = vmatprep.subr.mxu0 0.0
      %3785 = vmatpush1.msra.mxu0 %v3533
      %3786 = vmatprep.subr.mxu0 0.0
      %3787 = vmatpush1.msra.mxu0 %v3534
      %3788 = vmatprep.subr.mxu0 0.0
      %3789 = vmatpush1.msra.mxu0 %v3535
      %3790 = vmatprep.subr.mxu0 0.0
      %3791 = vmatpush1.msra.mxu0 %v3536
      %3792 = vmatprep.subr.mxu0 0.0
      %3793 = vmatpush1.msra.mxu0 %v3537
      %3794 = vmatprep.subr.mxu0 0.0
      %3795 = vmatpush1.msra.mxu0 %v3538
      %3796 = vmatprep.subr.mxu0 0.0
      %3797 = vmatpush1.msra.mxu0 %v3539
      %3798 = vmatprep.subr.mxu0 0.0
      %3799 = vmatpush1.msra.mxu0 %v3540
      %3800 = vmatprep.subr.mxu0 0.0
      %3801 = vmatpush1.msra.mxu0 %v3541
      %3802 = vmatprep.subr.mxu0 0.0
      %3803 = vmatpush1.msra.mxu0 %v3542
      %3804 = vmatprep.subr.mxu0 0.0
      %3805 = vmatpush1.msra.mxu0 %v3543
      %3806 = vmatprep.subr.mxu0 0.0
      %3807 = vmatpush1.msra.mxu0 %v3544
      %3808 = vmatprep.subr.mxu0 0.0
      %3809 = vmatpush1.msra.mxu0 %v3545
      %3810 = vmatprep.subr.mxu0 0.0
      %3811 = vmatpush1.msra.mxu0 %v3546
      %3812 = vmatprep.subr.mxu0 0.0
      %3813 = vmatpush1.msra.mxu0 %v3547
      %3814 = vmatprep.subr.mxu0 0.0
      %3815 = vmatpush1.msra.mxu0 %v3548
      %3816 = vmatprep.subr.mxu0 0.0
      %3817 = vmatpush1.msra.mxu0 %v3549
      %3818 = vmatprep.subr.mxu0 0.0
      %3819 = vmatpush1.msra.mxu0 %v3550
      %3820 = vmatprep.subr.mxu0 0.0
      %3821 = vmatpush1.msra.mxu0 %v3551
      %3822 = vmatprep.subr.mxu0 0.0
      %3823 = vmatpush1.msra.mxu0 %v3552
      %3824 = vmatprep.subr.mxu0 0.0
      %3825 = vmatpush1.msra.mxu0 %v3553
      %3826 = vmatprep.subr.mxu0 0.0
      %3827 = vmatpush1.msra.mxu0 %v3554
      %3828 = vmatprep.mubr.f32.mxu0 %v3350
      %3829 = vmatmul.mubr.f32.gmra.mrb[0].mxu0 %v3349
      %v3830 = vpop.f32.mrb[0].mxu0
      %v3831 = vadd.f32 %v3686, %v3830
      %v3832 = vpop.f32.mrb[0].mxu0
      %3833 = vmatprep.mubr.f32.mxu0 %v3358
      %3834 = vmatmul.mubr.f32.gmra.mrb[0].mxu0 %v3357
      %v3835 = vpop.f32.mrb[0].mxu0
      %v3836 = vadd.f32 %v3691, %v3835
      %v3837 = vpop.f32.mrb[0].mxu0
      %3838 = vmatprep.mubr.f32.mxu0 %v3366
      %3839 = vmatmul.mubr.f32.gmra.mrb[0].mxu0 %v3365
      %v3840 = vpop.f32.mrb[0].mxu0
      %v3841 = vadd.f32 %v3696, %v3840
      %v3842 = vpop.f32.mrb[0].mxu0
      %3843 = vmatprep.mubr.f32.mxu0 %v3374
      %3844 = vmatmul.mubr.f32.gmra.mrb[0].mxu0 %v3373
      %v3845 = vpop.f32.mrb[0].mxu0
      %v3846 = vadd.f32 %v3701, %v3845
      %v3847 = vpop.f32.mrb[0].mxu0
      %3848 = vmatprep.mubr.f32.mxu0 %v3382
      %3849 = vmatmul.mubr.f32.gmra.mrb[0].mxu0 %v3381
      %v3850 = vpop.f32.mrb[0].mxu0
      %v3851 = vadd.f32 %v3706, %v3850
      %v3852 = vpop.f32.mrb[0].mxu0
      %3853 = vmatprep.mubr.f32.mxu0 %v3390
      %3854 = vmatmul.mubr.f32.gmra.mrb[0].mxu0 %v3389
      %v3855 = vpop.f32.mrb[0].mxu0
      %v3856 = vadd.f32 %v3711, %v3855
      %v3857 = vpop.f32.mrb[0].mxu0
      %3858 = vmatprep.mubr.f32.mxu0 %v3398
      %3859 = vmatmul.mubr.f32.gmra.mrb[0].mxu0 %v3397
      %v3860 = vpop.f32.mrb[0].mxu0
      %v3861 = vadd.f32 %v3716, %v3860
      %v3862 = vpop.f32.mrb[0].mxu0
      %3863 = vmatprep.mubr.f32.mxu0 %v3406
      %3864 = vmatmul.mubr.f32.gmra.mrb[0].mxu0 %v3405
      %v3865 = vpop.f32.mrb[0].mxu0
      %v3866 = vadd.f32 %v3721, %v3865
      %v3867 = vpop.f32.mrb[0].mxu0
      %3868 = vmatprep.mubr.f32.mxu0 %v3414
      %3869 = vmatmul.mubr.f32.gmra.mrb[0].mxu0 %v3413
      %v3870 = vpop.f32.mrb[0].mxu0
      %v3871 = vadd.f32 %v3726, %v3870
      %v3872 = vpop.f32.mrb[0].mxu0
      %3873 = vmatprep.mubr.f32.mxu0 %v3422
      %3874 = vmatmul.mubr.f32.gmra.mrb[0].mxu0 %v3421
      %v3875 = vpop.f32.mrb[0].mxu0
      %v3876 = vadd.f32 %v3731, %v3875
      %v3877 = vpop.f32.mrb[0].mxu0
      %3878 = vmatprep.mubr.f32.mxu0 %v3430
      %3879 = vmatmul.mubr.f32.gmra.mrb[0].mxu0 %v3429
      %v3880 = vpop.f32.mrb[0].mxu0
      %v3881 = vadd.f32 %v3736, %v3880
      %v3882 = vpop.f32.mrb[0].mxu0
      %3883 = vmatprep.mubr.f32.mxu0 %v3438
      %3884 = vmatmul.mubr.f32.gmra.mrb[0].mxu0 %v3437
      %v3885 = vpop.f32.mrb[0].mxu0
      %v3886 = vadd.f32 %v3741, %v3885
      %v3887 = vpop.f32.mrb[0].mxu0
      %3888 = vmatprep.mubr.f32.mxu0 %v3446
      %3889 = vmatmul.mubr.f32.gmra.mrb[0].mxu0 %v3445
      %v3890 = vpop.f32.mrb[0].mxu0
      %v3891 = vadd.f32 %v3746, %v3890
      %v3892 = vpop.f32.mrb[0].mxu0
      %3893 = vmatprep.mubr.f32.mxu0 %v3454
      %3894 = vmatmul.mubr.f32.gmra.mrb[0].mxu0 %v3453
      %v3895 = vpop.f32.mrb[0].mxu0
      %v3896 = vadd.f32 %v3751, %v3895
      %v3897 = vpop.f32.mrb[0].mxu0
      %3898 = vmatprep.mubr.f32.mxu0 %v3462
      %3899 = vmatmul.mubr.f32.gmra.mrb[0].mxu0 %v3461
      %v3900 = vpop.f32.mrb[0].mxu0
      %v3901 = vadd.f32 %v3756, %v3900
      %v3902 = vpop.f32.mrb[0].mxu0
      %3903 = vmatprep.mubr.f32.mxu0 %v3470
      %3904 = vmatmul.mubr.f32.gmra.mrb[0].mxu0 %v3469
      %v3905 = vpop.f32.mrb[0].mxu0
      %v3906 = vadd.f32 %v3761, %v3905
      %v3907 = vpop.f32.mrb[0].mxu0
      %3908 = vdwg.mxu0
      %3909 = vmatprep.subr.mxu0 0.0
      %3910 = vmatpush1.msra.mxu0 %v3555
      %3911 = vmatprep.subr.mxu0 0.0
      %3912 = vmatpush1.msra.mxu0 %v3556
      %3913 = vmatprep.subr.mxu0 0.0
      %3914 = vmatpush1.msra.mxu0 %v3557
      %3915 = vmatprep.subr.mxu0 0.0
      %3916 = vmatpush1.msra.mxu0 %v3558
      %3917 = vmatprep.subr.mxu0 0.0
      %3918 = vmatpush1.msra.mxu0 %v3559
      %3919 = vmatprep.subr.mxu0 0.0
      %3920 = vmatpush1.msra.mxu0 %v3560
      %3921 = vmatprep.subr.mxu0 0.0
      %3922 = vmatpush1.msra.mxu0 %v3561
      %3923 = vmatprep.subr.mxu0 0.0
      %3924 = vmatpush1.msra.mxu0 %v3562
      %3925 = vmatprep.subr.mxu0 0.0
      %3926 = vmatpush1.msra.mxu0 %v3563
      %3927 = vmatprep.subr.mxu0 0.0
      %3928 = vmatpush1.msra.mxu0 %v3564
      %3929 = vmatprep.subr.mxu0 0.0
      %3930 = vmatpush1.msra.mxu0 %v3565
      %3931 = vmatprep.subr.mxu0 0.0
      %3932 = vmatpush1.msra.mxu0 %v3566
      %3933 = vmatprep.subr.mxu0 0.0
      %3934 = vmatpush1.msra.mxu0 %v3567
      %3935 = vmatprep.subr.mxu0 0.0
      %3936 = vmatpush1.msra.mxu0 %v3568
      %3937 = vmatprep.subr.mxu0 0.0
      %3938 = vmatpush1.msra.mxu0 %v3569
      %3939 = vmatprep.subr.mxu0 0.0
      %3940 = vmatpush1.msra.mxu0 %v3570
      %3941 = vmatprep.subr.mxu0 0.0
      %3942 = vmatpush1.msra.mxu0 %v3571
      %3943 = vmatprep.subr.mxu0 0.0
      %3944 = vmatpush1.msra.mxu0 %v3572
      %3945 = vmatprep.subr.mxu0 0.0
      %3946 = vmatpush1.msra.mxu0 %v3573
      %3947 = vmatprep.subr.mxu0 0.0
      %3948 = vmatpush1.msra.mxu0 %v3574
      %3949 = vmatprep.subr.mxu0 0.0
      %3950 = vmatpush1.msra.mxu0 %v3575
      %3951 = vmatprep.subr.mxu0 0.0
      %3952 = vmatpush1.msra.mxu0 %v3576
      %3953 = vmatprep.subr.mxu0 0.0
      %3954 = vmatpush1.msra.mxu0 %v3577
      %3955 = vmatprep.subr.mxu0 0.0
      %3956 = vmatpush1.msra.mxu0 %v3578
      %3957 = vmatprep.subr.mxu0 0.0
      %3958 = vmatpush1.msra.mxu0 %v3579
      %3959 = vmatprep.subr.mxu0 0.0
      %3960 = vmatpush1.msra.mxu0 %v3580
      %3961 = vmatprep.subr.mxu0 0.0
      %3962 = vmatpush1.msra.mxu0 %v3581
      %3963 = vmatprep.subr.mxu0 0.0
      %3964 = vmatpush1.msra.mxu0 %v3582
      %3965 = vmatprep.subr.mxu0 0.0
      %3966 = vmatpush1.msra.mxu0 %v3583
      %3967 = vmatprep.subr.mxu0 0.0
      %3968 = vmatpush1.msra.mxu0 %v3584
      %3969 = vmatprep.subr.mxu0 0.0
      %3970 = vmatpush1.msra.mxu0 %v3585
      %3971 = vmatprep.subr.mxu0 0.0
      %3972 = vmatpush1.msra.mxu0 %v3586
      %3973 = vmatprep.mubr.f32.mxu0 %v3352
      %3974 = vmatmul.mubr.f32.gmra.mrb[0].mxu0 %v3351
      %v3975 = vpop.f32.mrb[0].mxu0
      %v3976 = vadd.f32 %v3831, %v3975
      %v3977 = vpop.f32.mrb[0].mxu0
      %3978 = vmatprep.mubr.f32.mxu0 %v3360
      %3979 = vmatmul.mubr.f32.gmra.mrb[0].mxu0 %v3359
      %v3980 = vpop.f32.mrb[0].mxu0
      %v3981 = vadd.f32 %v3836, %v3980
      %v3982 = vpop.f32.mrb[0].mxu0
      %3983 = vmatprep.mubr.f32.mxu0 %v3368
      %3984 = vmatmul.mubr.f32.gmra.mrb[0].mxu0 %v3367
      %v3985 = vpop.f32.mrb[0].mxu0
      %v3986 = vadd.f32 %v3841, %v3985
      %v3987 = vpop.f32.mrb[0].mxu0
      %3988 = vmatprep.mubr.f32.mxu0 %v3376
      %3989 = vmatmul.mubr.f32.gmra.mrb[0].mxu0 %v3375
      %v3990 = vpop.f32.mrb[0].mxu0
      %v3991 = vadd.f32 %v3846, %v3990
      %v3992 = vpop.f32.mrb[0].mxu0
      %3993 = vmatprep.mubr.f32.mxu0 %v3384
      %3994 = vmatmul.mubr.f32.gmra.mrb[0].mxu0 %v3383
      %v3995 = vpop.f32.mrb[0].mxu0
      %v3996 = vadd.f32 %v3851, %v3995
      %v3997 = vpop.f32.mrb[0].mxu0
      %3998 = vmatprep.mubr.f32.mxu0 %v3392
      %3999 = vmatmul.mubr.f32.gmra.mrb[0].mxu0 %v3391
      %v4000 = vpop.f32.mrb[0].mxu0
      %v4001 = vadd.f32 %v3856, %v4000
      %v4002 = vpop.f32.mrb[0].mxu0
      %4003 = vmatprep.mubr.f32.mxu0 %v3400
      %4004 = vmatmul.mubr.f32.gmra.mrb[0].mxu0 %v3399
      %v4005 = vpop.f32.mrb[0].mxu0
      %v4006 = vadd.f32 %v3861, %v4005
      %v4007 = vpop.f32.mrb[0].mxu0
      %4008 = vmatprep.mubr.f32.mxu0 %v3408
      %4009 = vmatmul.mubr.f32.gmra.mrb[0].mxu0 %v3407
      %v4010 = vpop.f32.mrb[0].mxu0
      %v4011 = vadd.f32 %v3866, %v4010
      %v4012 = vpop.f32.mrb[0].mxu0
      %4013 = vmatprep.mubr.f32.mxu0 %v3416
      %4014 = vmatmul.mubr.f32.gmra.mrb[0].mxu0 %v3415
      %v4015 = vpop.f32.mrb[0].mxu0
      %v4016 = vadd.f32 %v3871, %v4015
      %v4017 = vpop.f32.mrb[0].mxu0
      %4018 = vmatprep.mubr.f32.mxu0 %v3424
      %4019 = vmatmul.mubr.f32.gmra.mrb[0].mxu0 %v3423
      %v4020 = vpop.f32.mrb[0].mxu0
      %v4021 = vadd.f32 %v3876, %v4020
      %v4022 = vpop.f32.mrb[0].mxu0
      %4023 = vmatprep.mubr.f32.mxu0 %v3432
      %4024 = vmatmul.mubr.f32.gmra.mrb[0].mxu0 %v3431
      %v4025 = vpop.f32.mrb[0].mxu0
      %v4026 = vadd.f32 %v3881, %v4025
      %v4027 = vpop.f32.mrb[0].mxu0
      %4028 = vmatprep.mubr.f32.mxu0 %v3440
      %4029 = vmatmul.mubr.f32.gmra.mrb[0].mxu0 %v3439
      %v4030 = vpop.f32.mrb[0].mxu0
      %v4031 = vadd.f32 %v3886, %v4030
      %v4032 = vpop.f32.mrb[0].mxu0
      %4033 = vmatprep.mubr.f32.mxu0 %v3448
      %4034 = vmatmul.mubr.f32.gmra.mrb[0].mxu0 %v3447
      %v4035 = vpop.f32.mrb[0].mxu0
      %v4036 = vadd.f32 %v3891, %v4035
      %v4037 = vpop.f32.mrb[0].mxu0
      %4038 = vmatprep.mubr.f32.mxu0 %v3456
      %4039 = vmatmul.mubr.f32.gmra.mrb[0].mxu0 %v3455
      %v4040 = vpop.f32.mrb[0].mxu0
      %v4041 = vadd.f32 %v3896, %v4040
      %v4042 = vpop.f32.mrb[0].mxu0
      %4043 = vmatprep.mubr.f32.mxu0 %v3464
      %4044 = vmatmul.mubr.f32.gmra.mrb[0].mxu0 %v3463
      %v4045 = vpop.f32.mrb[0].mxu0
      %v4046 = vadd.f32 %v3901, %v4045
      %v4047 = vpop.f32.mrb[0].mxu0
      %4048 = vmatprep.mubr.f32.mxu0 %v3472
      %4049 = vmatmul.mubr.f32.gmra.mrb[0].mxu0 %v3471
      %v4050 = vpop.f32.mrb[0].mxu0
      %v4051 = vadd.f32 %v3906, %v4050
      %v4052 = vpop.f32.mrb[0].mxu0
      %4053 = vdwg.mxu0
      %4054 = vmatprep.subr.mxu0 0.0
      %4055 = vmatpush1.msra.mxu0 %v3587
      %4056 = vmatprep.subr.mxu0 0.0
      %4057 = vmatpush1.msra.mxu0 %v3588
      %4058 = vmatprep.subr.mxu0 0.0
      %4059 = vmatpush1.msra.mxu0 %v3589
      %4060 = vmatprep.subr.mxu0 0.0
      %4061 = vmatpush1.msra.mxu0 %v3590
      %4062 = vmatprep.subr.mxu0 0.0
      %4063 = vmatpush1.msra.mxu0 %v3591
      %4064 = vmatprep.subr.mxu0 0.0
      %4065 = vmatpush1.msra.mxu0 %v3592
      %4066 = vmatprep.subr.mxu0 0.0
      %4067 = vmatpush1.msra.mxu0 %v3593
      %4068 = vmatprep.subr.mxu0 0.0
      %4069 = vmatpush1.msra.mxu0 %v3594
      %4070 = vmatprep.subr.mxu0 0.0
      %4071 = vmatpush1.msra.mxu0 %v3595
      %4072 = vmatprep.subr.mxu0 0.0
      %4073 = vmatpush1.msra.mxu0 %v3596
      %4074 = vmatprep.subr.mxu0 0.0
      %4075 = vmatpush1.msra.mxu0 %v3597
      %4076 = vmatprep.subr.mxu0 0.0
      %4077 = vmatpush1.msra.mxu0 %v3598
      %4078 = vmatprep.subr.mxu0 0.0
      %4079 = vmatpush1.msra.mxu0 %v3599
      %4080 = vmatprep.subr.mxu0 0.0
      %4081 = vmatpush1.msra.mxu0 %v3600
      %4082 = vmatprep.subr.mxu0 0.0
      %4083 = vmatpush1.msra.mxu0 %v3601
      %4084 = vmatprep.subr.mxu0 0.0
      %4085 = vmatpush1.msra.mxu0 %v3602
      %4086 = vmatprep.subr.mxu0 0.0
      %4087 = vmatpush1.msra.mxu0 %v3603
      %4088 = vmatprep.subr.mxu0 0.0
      %4089 = vmatpush1.msra.mxu0 %v3604
      %4090 = vmatprep.subr.mxu0 0.0
      %4091 = vmatpush1.msra.mxu0 %v3605
      %4092 = vmatprep.subr.mxu0 0.0
      %4093 = vmatpush1.msra.mxu0 %v3606
      %4094 = vmatprep.subr.mxu0 0.0
      %4095 = vmatpush1.msra.mxu0 %v3607
      %4096 = vmatprep.subr.mxu0 0.0
      %4097 = vmatpush1.msra.mxu0 %v3608
      %4098 = vmatprep.subr.mxu0 0.0
      %4099 = vmatpush1.msra.mxu0 %v3609
      %4100 = vmatprep.subr.mxu0 0.0
      %4101 = vmatpush1.msra.mxu0 %v3610
      %4102 = vmatprep.subr.mxu0 0.0
      %4103 = vmatpush1.msra.mxu0 %v3611
      %4104 = vmatprep.subr.mxu0 0.0
      %4105 = vmatpush1.msra.mxu0 %v3612
      %4106 = vmatprep.subr.mxu0 0.0
      %4107 = vmatpush1.msra.mxu0 %v3613
      %4108 = vmatprep.subr.mxu0 0.0
      %4109 = vmatpush1.msra.mxu0 %v3614
      %4110 = vmatprep.subr.mxu0 0.0
      %4111 = vmatpush1.msra.mxu0 %v3615
      %4112 = vmatprep.subr.mxu0 0.0
      %4113 = vmatpush1.msra.mxu0 %v3616
      %4114 = vmatprep.subr.mxu0 0.0
      %4115 = vmatpush1.msra.mxu0 %v3617
      %4116 = vmatprep.subr.mxu0 0.0
      %4117 = vmatpush1.msra.mxu0 %v3618
      %4118 = vmatprep.mubr.f32.mxu0 %v3354
      %4119 = vmatmul.mubr.f32.gmra.mrb[0].mxu0 %v3353
      %v4120 = vpop.f32.mrb[0].mxu0
      %v4121 = vadd.f32 %v3976, %v4120
      %v4122 = vpop.f32.mrb[0].mxu0
      %4123 = vmatprep.mubr.f32.mxu0 %v3362
      %4124 = vmatmul.mubr.f32.gmra.mrb[0].mxu0 %v3361
      %v4125 = vpop.f32.mrb[0].mxu0
      %v4126 = vadd.f32 %v3981, %v4125
      %v4127 = vpop.f32.mrb[0].mxu0
      %4128 = vmatprep.mubr.f32.mxu0 %v3370
      %4129 = vmatmul.mubr.f32.gmra.mrb[0].mxu0 %v3369
      %v4130 = vpop.f32.mrb[0].mxu0
      %v4131 = vadd.f32 %v3986, %v4130
      %v4132 = vpop.f32.mrb[0].mxu0
      %4133 = vmatprep.mubr.f32.mxu0 %v3378
      %4134 = vmatmul.mubr.f32.gmra.mrb[0].mxu0 %v3377
      %v4135 = vpop.f32.mrb[0].mxu0
      %v4136 = vadd.f32 %v3991, %v4135
      %v4137 = vpop.f32.mrb[0].mxu0
      %4138 = vmatprep.mubr.f32.mxu0 %v3386
      %4139 = vmatmul.mubr.f32.gmra.mrb[0].mxu0 %v3385
      %v4140 = vpop.f32.mrb[0].mxu0
      %v4141 = vadd.f32 %v3996, %v4140
      %v4142 = vpop.f32.mrb[0].mxu0
      %4143 = vmatprep.mubr.f32.mxu0 %v3394
      %4144 = vmatmul.mubr.f32.gmra.mrb[0].mxu0 %v3393
      %v4145 = vpop.f32.mrb[0].mxu0
      %v4146 = vadd.f32 %v4001, %v4145
      %v4147 = vpop.f32.mrb[0].mxu0
      %4148 = vmatprep.mubr.f32.mxu0 %v3402
      %4149 = vmatmul.mubr.f32.gmra.mrb[0].mxu0 %v3401
      %v4150 = vpop.f32.mrb[0].mxu0
      %v4151 = vadd.f32 %v4006, %v4150
      %v4152 = vpop.f32.mrb[0].mxu0
      %4153 = vmatprep.mubr.f32.mxu0 %v3410
      %4154 = vmatmul.mubr.f32.gmra.mrb[0].mxu0 %v3409
      %v4155 = vpop.f32.mrb[0].mxu0
      %v4156 = vadd.f32 %v4011, %v4155
      %v4157 = vpop.f32.mrb[0].mxu0
      %4158 = vmatprep.mubr.f32.mxu0 %v3418
      %4159 = vmatmul.mubr.f32.gmra.mrb[0].mxu0 %v3417
      %v4160 = vpop.f32.mrb[0].mxu0
      %v4161 = vadd.f32 %v4016, %v4160
      %v4162 = vpop.f32.mrb[0].mxu0
      %4163 = vmatprep.mubr.f32.mxu0 %v3426
      %4164 = vmatmul.mubr.f32.gmra.mrb[0].mxu0 %v3425
      %v4165 = vpop.f32.mrb[0].mxu0
      %v4166 = vadd.f32 %v4021, %v4165
      %v4167 = vpop.f32.mrb[0].mxu0
      %4168 = vmatprep.mubr.f32.mxu0 %v3434
      %4169 = vmatmul.mubr.f32.gmra.mrb[0].mxu0 %v3433
      %v4170 = vpop.f32.mrb[0].mxu0
      %v4171 = vadd.f32 %v4026, %v4170
      %v4172 = vpop.f32.mrb[0].mxu0
      %4173 = vmatprep.mubr.f32.mxu0 %v3442
      %4174 = vmatmul.mubr.f32.gmra.mrb[0].mxu0 %v3441
      %v4175 = vpop.f32.mrb[0].mxu0
      %v4176 = vadd.f32 %v4031, %v4175
      %v4177 = vpop.f32.mrb[0].mxu0
      %4178 = vmatprep.mubr.f32.mxu0 %v3450
      %4179 = vmatmul.mubr.f32.gmra.mrb[0].mxu0 %v3449
      %v4180 = vpop.f32.mrb[0].mxu0
      %v4181 = vadd.f32 %v4036, %v4180
      %v4182 = vpop.f32.mrb[0].mxu0
      %4183 = vmatprep.mubr.f32.mxu0 %v3458
      %4184 = vmatmul.mubr.f32.gmra.mrb[0].mxu0 %v3457
      %v4185 = vpop.f32.mrb[0].mxu0
      %v4186 = vadd.f32 %v4041, %v4185
      %v4187 = vpop.f32.mrb[0].mxu0
      %4188 = vmatprep.mubr.f32.mxu0 %v3466
      %4189 = vmatmul.mubr.f32.gmra.mrb[0].mxu0 %v3465
      %v4190 = vpop.f32.mrb[0].mxu0
      %v4191 = vadd.f32 %v4046, %v4190
      %v4192 = vpop.f32.mrb[0].mxu0
      %4193 = vmatprep.mubr.f32.mxu0 %v3474
      %4194 = vmatmul.mubr.f32.gmra.mrb[0].mxu0 %v3473
      %v4195 = vpop.f32.mrb[0].mxu0
      %v4196 = vadd.f32 %v4051, %v4195
      %v4197 = vpop.f32.mrb[0].mxu0
      %4198 = vdwg.mxu0
      %v4199 = vadd.f32 %v3475, %v4121
      %v4200 = vadd.f32 %v3476, %v4126
      %v4201 = vadd.f32 %v3477, %v4131
      %v4202 = vadd.f32 %v3478, %v4136
      %v4203 = vadd.f32 %v3479, %v4141
      %v4204 = vadd.f32 %v3480, %v4146
      %v4205 = vadd.f32 %v3481, %v4151
      %v4206 = vadd.f32 %v3482, %v4156
      %v4207 = vadd.f32 %v3483, %v4161
      %v4208 = vadd.f32 %v3484, %v4166
      %v4209 = vadd.f32 %v3485, %v4171
      %v4210 = vadd.f32 %v3486, %v4176
      %v4211 = vadd.f32 %v3487, %v4181
      %v4212 = vadd.f32 %v3488, %v4186
      %v4213 = vadd.f32 %v3489, %v4191
      %v4214 = vadd.f32 %v3490, %v4196
      %vm4215 = vcmask 31744
      %4216 = vst.msk [vmem:[#allocation2] sm:$0xff] %vm4215, %v4199
      %4217 = vst.msk [vmem:[#allocation2 + $0x8] sm:$0xff] %vm4215, %v4200
      %4218 = vst.msk [vmem:[#allocation2 + $0x10] sm:$0xff] %vm4215, %v4201
      %4219 = vst.msk [vmem:[#allocation2 + $0x18] sm:$0xff] %vm4215, %v4202
      %4220 = vst.msk [vmem:[#allocation2 + $0x20] sm:$0xff] %vm4215, %v4203
      %4221 = vst.msk [vmem:[#allocation2 + $0x28] sm:$0xff] %vm4215, %v4204
      %4222 = vst.msk [vmem:[#allocation2 + $0x30] sm:$0xff] %vm4215, %v4205
      %4223 = vst.msk [vmem:[#allocation2 + $0x38] sm:$0xff] %vm4215, %v4206
      %4224 = vst.msk [vmem:[#allocation2 + $0x40] sm:$0xff] %vm4215, %v4207
      %4225 = vst.msk [vmem:[#allocation2 + $0x48] sm:$0xff] %vm4215, %v4208
      %4226 = vst.msk [vmem:[#allocation2 + $0x50] sm:$0xff] %vm4215, %v4209
      %4227 = vst.msk [vmem:[#allocation2 + $0x58] sm:$0xff] %vm4215, %v4210
      %4228 = vst.msk [vmem:[#allocation2 + $0x60] sm:$0xff] %vm4215, %v4211
      %4229 = vst.msk [vmem:[#allocation2 + $0x68] sm:$0xff] %vm4215, %v4212
      %4230 = vst.msk [vmem:[#allocation2 + $0x70] sm:$0xff] %vm4215, %v4213
      %4231 = vst.msk [vmem:[#allocation2 + $0x78] sm:$0xff] %vm4215, %v4214
      %v4232 = vld [vmem:[#allocation3] sm:$0xff]
      %v4233 = vld [vmem:[#allocation3 + $0x8] sm:$0xff]
      %v4234 = vld [vmem:[#allocation3 + $0x10] sm:$0xff]
      %v4235 = vld [vmem:[#allocation3 + $0x18] sm:$0xff]
      %v4236 = vld [vmem:[#allocation3 + $0x20] sm:$0xff]
      %v4237 = vld [vmem:[#allocation3 + $0x28] sm:$0xff]
      %v4238 = vld [vmem:[#allocation3 + $0x30] sm:$0xff]
      %v4239 = vld [vmem:[#allocation3 + $0x38] sm:$0xff]
      %v4240 = vld [vmem:[#allocation3 + $0x40] sm:$0xff]
      %v4241 = vld [vmem:[#allocation3 + $0x48] sm:$0xff]
      %v4242 = vld [vmem:[#allocation3 + $0x50] sm:$0xff]
      %v4243 = vld [vmem:[#allocation3 + $0x58] sm:$0xff]
      %v4244 = vld [vmem:[#allocation3 + $0x60] sm:$0xff]
      %v4245 = vld [vmem:[#allocation3 + $0x68] sm:$0xff]
      %v4246 = vld [vmem:[#allocation3 + $0x70] sm:$0xff]
      %v4247 = vld [vmem:[#allocation3 + $0x78] sm:$0xff]
      %v4248 = vadd.f32 %v3091, %v3092
      %v4249 = vadd.f32 %v4248, %v3093
      %v4250 = vadd.f32 %v4249, %v3094
      %v4251 = vadd.f32 %v4250, %v3095
      %v4252 = vadd.f32 %v4251, %v3096
      %v4253 = vadd.f32 %v4252, %v3097
      %v4254 = vadd.f32 %v4253, %v3098
      %4255 = vadd.xlane.f32.xlu0 %v4254
      %v4256 = vpop.xlane.xlu0 %4255
      %v4257 = vadd.f32 %v3099, %v3100
      %v4258 = vadd.f32 %v4257, %v3101
      %v4259 = vadd.f32 %v4258, %v3102
      %v4260 = vadd.f32 %v4259, %v3103
      %v4261 = vadd.f32 %v4260, %v3104
      %v4262 = vadd.f32 %v4261, %v3105
      %v4263 = vadd.f32 %v4262, %v3106
      %4264 = vadd.xlane.f32.xlu0 %v4263
      %v4265 = vpop.xlane.xlu0 %4264
      %v4266 = vadd.f32 %v3107, %v3108
      %v4267 = vadd.f32 %v4266, %v3109
      %v4268 = vadd.f32 %v4267, %v3110
      %v4269 = vadd.f32 %v4268, %v3111
      %v4270 = vadd.f32 %v4269, %v3112
      %v4271 = vadd.f32 %v4270, %v3113
      %v4272 = vadd.f32 %v4271, %v3114
      %4273 = vadd.xlane.f32.xlu0 %v4272
      %v4274 = vpop.xlane.xlu0 %4273
      %v4275 = vadd.f32 %v3115, %v3116
      %v4276 = vadd.f32 %v4275, %v3117
      %v4277 = vadd.f32 %v4276, %v3118
      %v4278 = vadd.f32 %v4277, %v3119
      %v4279 = vadd.f32 %v4278, %v3120
      %v4280 = vadd.f32 %v4279, %v3121
      %v4281 = vadd.f32 %v4280, %v3122
      %4282 = vadd.xlane.f32.xlu0 %v4281
      %v4283 = vpop.xlane.xlu0 %4282
      %v4284 = vadd.f32 %v3123, %v3124
      %v4285 = vadd.f32 %v4284, %v3125
      %v4286 = vadd.f32 %v4285, %v3126
      %v4287 = vadd.f32 %v4286, %v3127
      %v4288 = vadd.f32 %v4287, %v3128
      %v4289 = vadd.f32 %v4288, %v3129
      %v4290 = vadd.f32 %v4289, %v3130
      %4291 = vadd.xlane.f32.xlu0 %v4290
      %v4292 = vpop.xlane.xlu0 %4291
      %v4293 = vadd.f32 %v3131, %v3132
      %v4294 = vadd.f32 %v4293, %v3133
      %v4295 = vadd.f32 %v4294, %v3134
      %v4296 = vadd.f32 %v4295, %v3135
      %v4297 = vadd.f32 %v4296, %v3136
      %v4298 = vadd.f32 %v4297, %v3137
      %v4299 = vadd.f32 %v4298, %v3138
      %4300 = vadd.xlane.f32.xlu0 %v4299
      %v4301 = vpop.xlane.xlu0 %4300
      %v4302 = vadd.f32 %v3139, %v3140
      %v4303 = vadd.f32 %v4302, %v3141
      %v4304 = vadd.f32 %v4303, %v3142
      %v4305 = vadd.f32 %v4304, %v3143
      %v4306 = vadd.f32 %v4305, %v3144
      %v4307 = vadd.f32 %v4306, %v3145
      %v4308 = vadd.f32 %v4307, %v3146
      %4309 = vadd.xlane.f32.xlu0 %v4308
      %v4310 = vpop.xlane.xlu0 %4309
      %v4311 = vadd.f32 %v3147, %v3148
      %v4312 = vadd.f32 %v4311, %v3149
      %v4313 = vadd.f32 %v4312, %v3150
      %v4314 = vadd.f32 %v4313, %v3151
      %v4315 = vadd.f32 %v4314, %v3152
      %v4316 = vadd.f32 %v4315, %v3153
      %v4317 = vadd.f32 %v4316, %v3154
      %4318 = vadd.xlane.f32.xlu0 %v4317
      %v4319 = vpop.xlane.xlu0 %4318
      %v4320 = vadd.f32 %v3155, %v3156
      %v4321 = vadd.f32 %v4320, %v3157
      %v4322 = vadd.f32 %v4321, %v3158
      %v4323 = vadd.f32 %v4322, %v3159
      %v4324 = vadd.f32 %v4323, %v3160
      %v4325 = vadd.f32 %v4324, %v3161
      %v4326 = vadd.f32 %v4325, %v3162
      %4327 = vadd.xlane.f32.xlu0 %v4326
      %v4328 = vpop.xlane.xlu0 %4327
      %v4329 = vadd.f32 %v3163, %v3164
      %v4330 = vadd.f32 %v4329, %v3165
      %v4331 = vadd.f32 %v4330, %v3166
      %v4332 = vadd.f32 %v4331, %v3167
      %v4333 = vadd.f32 %v4332, %v3168
      %v4334 = vadd.f32 %v4333, %v3169
      %v4335 = vadd.f32 %v4334, %v3170
      %4336 = vadd.xlane.f32.xlu0 %v4335
      %v4337 = vpop.xlane.xlu0 %4336
      %v4338 = vadd.f32 %v3171, %v3172
      %v4339 = vadd.f32 %v4338, %v3173
      %v4340 = vadd.f32 %v4339, %v3174
      %v4341 = vadd.f32 %v4340, %v3175
      %v4342 = vadd.f32 %v4341, %v3176
      %v4343 = vadd.f32 %v4342, %v3177
      %v4344 = vadd.f32 %v4343, %v3178
      %4345 = vadd.xlane.f32.xlu0 %v4344
      %v4346 = vpop.xlane.xlu0 %4345
      %v4347 = vadd.f32 %v3179, %v3180
      %v4348 = vadd.f32 %v4347, %v3181
      %v4349 = vadd.f32 %v4348, %v3182
      %v4350 = vadd.f32 %v4349, %v3183
      %v4351 = vadd.f32 %v4350, %v3184
      %v4352 = vadd.f32 %v4351, %v3185
      %v4353 = vadd.f32 %v4352, %v3186
      %4354 = vadd.xlane.f32.xlu0 %v4353
      %v4355 = vpop.xlane.xlu0 %4354
      %v4356 = vadd.f32 %v3187, %v3188
      %v4357 = vadd.f32 %v4356, %v3189
      %v4358 = vadd.f32 %v4357, %v3190
      %v4359 = vadd.f32 %v4358, %v3191
      %v4360 = vadd.f32 %v4359, %v3192
      %v4361 = vadd.f32 %v4360, %v3193
      %v4362 = vadd.f32 %v4361, %v3194
      %4363 = vadd.xlane.f32.xlu0 %v4362
      %v4364 = vpop.xlane.xlu0 %4363
      %v4365 = vadd.f32 %v3195, %v3196
      %v4366 = vadd.f32 %v4365, %v3197
      %v4367 = vadd.f32 %v4366, %v3198
      %v4368 = vadd.f32 %v4367, %v3199
      %v4369 = vadd.f32 %v4368, %v3200
      %v4370 = vadd.f32 %v4369, %v3201
      %v4371 = vadd.f32 %v4370, %v3202
      %4372 = vadd.xlane.f32.xlu0 %v4371
      %v4373 = vpop.xlane.xlu0 %4372
      %v4374 = vadd.f32 %v3203, %v3204
      %v4375 = vadd.f32 %v4374, %v3205
      %v4376 = vadd.f32 %v4375, %v3206
      %v4377 = vadd.f32 %v4376, %v3207
      %v4378 = vadd.f32 %v4377, %v3208
      %v4379 = vadd.f32 %v4378, %v3209
      %v4380 = vadd.f32 %v4379, %v3210
      %4381 = vadd.xlane.f32.xlu0 %v4380
      %v4382 = vpop.xlane.xlu0 %4381
      %v4383 = vadd.f32 %v3211, %v3212
      %v4384 = vadd.f32 %v4383, %v3213
      %v4385 = vadd.f32 %v4384, %v3214
      %v4386 = vadd.f32 %v4385, %v3215
      %v4387 = vadd.f32 %v4386, %v3216
      %v4388 = vadd.f32 %v4387, %v3217
      %v4389 = vadd.f32 %v4388, %v3218
      %4390 = vadd.xlane.f32.xlu0 %v4389
      %v4391 = vpop.xlane.xlu0 %4390
      %v4392 = vadd.f32 %v4232, %v4256
      %v4393 = vadd.f32 %v4233, %v4265
      %v4394 = vadd.f32 %v4234, %v4274
      %v4395 = vadd.f32 %v4235, %v4283
      %v4396 = vadd.f32 %v4236, %v4292
      %v4397 = vadd.f32 %v4237, %v4301
      %v4398 = vadd.f32 %v4238, %v4310
      %v4399 = vadd.f32 %v4239, %v4319
      %v4400 = vadd.f32 %v4240, %v4328
      %v4401 = vadd.f32 %v4241, %v4337
      %v4402 = vadd.f32 %v4242, %v4346
      %v4403 = vadd.f32 %v4243, %v4355
      %v4404 = vadd.f32 %v4244, %v4364
      %v4405 = vadd.f32 %v4245, %v4373
      %v4406 = vadd.f32 %v4246, %v4382
      %v4407 = vadd.f32 %v4247, %v4391
      %vm4408 = vcmask 7168
      %4409 = vst.msk [vmem:[#allocation3] sm:$0xff] %vm4408, %v4392
      %4410 = vst.msk [vmem:[#allocation3 + $0x8] sm:$0xff] %vm4408, %v4393
      %4411 = vst.msk [vmem:[#allocation3 + $0x10] sm:$0xff] %vm4408, %v4394
      %4412 = vst.msk [vmem:[#allocation3 + $0x18] sm:$0xff] %vm4408, %v4395
      %4413 = vst.msk [vmem:[#allocation3 + $0x20] sm:$0xff] %vm4408, %v4396
      %4414 = vst.msk [vmem:[#allocation3 + $0x28] sm:$0xff] %vm4408, %v4397
      %4415 = vst.msk [vmem:[#allocation3 + $0x30] sm:$0xff] %vm4408, %v4398
      %4416 = vst.msk [vmem:[#allocation3 + $0x38] sm:$0xff] %vm4408, %v4399
      %4417 = vst.msk [vmem:[#allocation3 + $0x40] sm:$0xff] %vm4408, %v4400
      %4418 = vst.msk [vmem:[#allocation3 + $0x48] sm:$0xff] %vm4408, %v4401
      %4419 = vst.msk [vmem:[#allocation3 + $0x50] sm:$0xff] %vm4408, %v4402
      %4420 = vst.msk [vmem:[#allocation3 + $0x58] sm:$0xff] %vm4408, %v4403
      %4421 = vst.msk [vmem:[#allocation3 + $0x60] sm:$0xff] %vm4408, %v4404
      %4422 = vst.msk [vmem:[#allocation3 + $0x68] sm:$0xff] %vm4408, %v4405
      %4423 = vst.msk [vmem:[#allocation3 + $0x70] sm:$0xff] %vm4408, %v4406
      %4424 = vst.msk [vmem:[#allocation3 + $0x78] sm:$0xff] %vm4408, %v4407
      // Predicated region
      $region37: #{tpu_custom_call.1} parent=31 // pred_check
        %p4425 = pneg %p271
      $region38: #{tpu_custom_call.1} parent=31 // pred_check_branch
        %4427 = sbr.rel (%p4425) target = $region40
      $region39: #{tpu_custom_call.1} parent=31 // pred_region
        %v4428 = vld [vmem:[#allocation2] sm:$0xff]
        %v4429 = vld [vmem:[#allocation2 + $0x8] sm:$0xff]
        %v4430 = vld [vmem:[#allocation2 + $0x10] sm:$0xff]
        %v4431 = vld [vmem:[#allocation2 + $0x18] sm:$0xff]
        %v4432 = vld [vmem:[#allocation2 + $0x20] sm:$0xff]
        %v4433 = vld [vmem:[#allocation2 + $0x28] sm:$0xff]
        %v4434 = vld [vmem:[#allocation2 + $0x30] sm:$0xff]
        %v4435 = vld [vmem:[#allocation2 + $0x38] sm:$0xff]
        %v4436 = vld [vmem:[#allocation2 + $0x40] sm:$0xff]
        %v4437 = vld [vmem:[#allocation2 + $0x48] sm:$0xff]
        %v4438 = vld [vmem:[#allocation2 + $0x50] sm:$0xff]
        %v4439 = vld [vmem:[#allocation2 + $0x58] sm:$0xff]
        %v4440 = vld [vmem:[#allocation2 + $0x60] sm:$0xff]
        %v4441 = vld [vmem:[#allocation2 + $0x68] sm:$0xff]
        %v4442 = vld [vmem:[#allocation2 + $0x70] sm:$0xff]
        %v4443 = vld [vmem:[#allocation2 + $0x78] sm:$0xff]
        %4445 = vset.pattern.permute.xlu0 3
        %4446 = vperm.xlu0 %4445, %v4428
        %v4447 = vpop.permute.xlu0 %4446
        %4450 = vset.pattern.permute.xlu0 3
        %4451 = vperm.xlu0 %4450, %v4429
        %v4452 = vpop.permute.xlu0 %4451
        %4455 = vset.pattern.permute.xlu0 3
        %4456 = vperm.xlu0 %4455, %v4430
        %v4457 = vpop.permute.xlu0 %4456
        %4460 = vset.pattern.permute.xlu0 3
        %4461 = vperm.xlu0 %4460, %v4431
        %v4462 = vpop.permute.xlu0 %4461
        %4465 = vset.pattern.permute.xlu0 3
        %4466 = vperm.xlu0 %4465, %v4432
        %v4467 = vpop.permute.xlu0 %4466
        %4470 = vset.pattern.permute.xlu0 3
        %4471 = vperm.xlu0 %4470, %v4433
        %v4472 = vpop.permute.xlu0 %4471
        %4475 = vset.pattern.permute.xlu0 3
        %4476 = vperm.xlu0 %4475, %v4434
        %v4477 = vpop.permute.xlu0 %4476
        %4480 = vset.pattern.permute.xlu0 3
        %4481 = vperm.xlu0 %4480, %v4435
        %v4482 = vpop.permute.xlu0 %4481
        %4485 = vset.pattern.permute.xlu0 3
        %4486 = vperm.xlu0 %4485, %v4436
        %v4487 = vpop.permute.xlu0 %4486
        %4490 = vset.pattern.permute.xlu0 3
        %4491 = vperm.xlu0 %4490, %v4437
        %v4492 = vpop.permute.xlu0 %4491
        %4495 = vset.pattern.permute.xlu0 3
        %4496 = vperm.xlu0 %4495, %v4438
        %v4497 = vpop.permute.xlu0 %4496
        %4500 = vset.pattern.permute.xlu0 3
        %4501 = vperm.xlu0 %4500, %v4439
        %v4502 = vpop.permute.xlu0 %4501
        %4505 = vset.pattern.permute.xlu0 3
        %4506 = vperm.xlu0 %4505, %v4440
        %v4507 = vpop.permute.xlu0 %4506
        %4510 = vset.pattern.permute.xlu0 3
        %4511 = vperm.xlu0 %4510, %v4441
        %v4512 = vpop.permute.xlu0 %4511
        %4515 = vset.pattern.permute.xlu0 3
        %4516 = vperm.xlu0 %4515, %v4442
        %v4517 = vpop.permute.xlu0 %4516
        %4520 = vset.pattern.permute.xlu0 3
        %4521 = vperm.xlu0 %4520, %v4443
        %v4522 = vpop.permute.xlu0 %4521
        %v4524 = vmul.f32 %v309, %v4447
        %v4525 = vmul.f32 %v310, %v4452
        %v4526 = vmul.f32 %v311, %v4457
        %v4527 = vmul.f32 %v312, %v4462
        %v4528 = vmul.f32 %v313, %v4467
        %v4529 = vmul.f32 %v314, %v4472
        %v4530 = vmul.f32 %v315, %v4477
        %v4531 = vmul.f32 %v316, %v4482
        %v4532 = vmul.f32 %v317, %v4487
        %v4533 = vmul.f32 %v318, %v4492
        %v4534 = vmul.f32 %v319, %v4497
        %v4535 = vmul.f32 %v320, %v4502
        %v4536 = vmul.f32 %v321, %v4507
        %v4537 = vmul.f32 %v322, %v4512
        %v4538 = vmul.f32 %v323, %v4517
        %v4539 = vmul.f32 %v324, %v4522
        %v4540 = vsub.f32 %v4524, %v4428
        %v4541 = vsub.f32 %v4525, %v4429
        %v4542 = vsub.f32 %v4526, %v4430
        %v4543 = vsub.f32 %v4527, %v4431
        %v4544 = vsub.f32 %v4528, %v4432
        %v4545 = vsub.f32 %v4529, %v4433
        %v4546 = vsub.f32 %v4530, %v4434
        %v4547 = vsub.f32 %v4531, %v4435
        %v4548 = vsub.f32 %v4532, %v4436
        %v4549 = vsub.f32 %v4533, %v4437
        %v4550 = vsub.f32 %v4534, %v4438
        %v4551 = vsub.f32 %v4535, %v4439
        %v4552 = vsub.f32 %v4536, %v4440
        %v4553 = vsub.f32 %v4537, %v4441
        %v4554 = vsub.f32 %v4538, %v4442
        %v4555 = vsub.f32 %v4539, %v4443
        %v4556 = vmul.f32 %v4540, -2.0
        %v4557 = vmul.f32 %v4541, -2.0
        %v4558 = vmul.f32 %v4542, -2.0
        %v4559 = vmul.f32 %v4543, -2.0
        %v4560 = vmul.f32 %v4544, -2.0
        %v4561 = vmul.f32 %v4545, -2.0
        %v4562 = vmul.f32 %v4546, -2.0
        %v4563 = vmul.f32 %v4547, -2.0
        %v4564 = vmul.f32 %v4548, -2.0
        %v4565 = vmul.f32 %v4549, -2.0
        %v4566 = vmul.f32 %v4550, -2.0
        %v4567 = vmul.f32 %v4551, -2.0
        %v4568 = vmul.f32 %v4552, -2.0
        %v4569 = vmul.f32 %v4553, -2.0
        %v4570 = vmul.f32 %v4554, -2.0
        %v4571 = vmul.f32 %v4555, -2.0
        %vm4572 = vcmask 23552
        %4573 = vst.msk [vmem:[%s263] sm:$0xff] %vm4572, %v4556
        %4574 = vst.msk [vmem:[%s263 + $0x8] sm:$0xff] %vm4572, %v4557
        %4575 = vst.msk [vmem:[%s263 + $0x10] sm:$0xff] %vm4572, %v4558
        %4576 = vst.msk [vmem:[%s263 + $0x18] sm:$0xff] %vm4572, %v4559
        %4577 = vst.msk [vmem:[%s263 + $0x20] sm:$0xff] %vm4572, %v4560
        %4578 = vst.msk [vmem:[%s263 + $0x28] sm:$0xff] %vm4572, %v4561
        %4579 = vst.msk [vmem:[%s263 + $0x30] sm:$0xff] %vm4572, %v4562
        %4580 = vst.msk [vmem:[%s263 + $0x38] sm:$0xff] %vm4572, %v4563
        %4581 = vst.msk [vmem:[%s263 + $0x40] sm:$0xff] %vm4572, %v4564
        %4582 = vst.msk [vmem:[%s263 + $0x48] sm:$0xff] %vm4572, %v4565
        %4583 = vst.msk [vmem:[%s263 + $0x50] sm:$0xff] %vm4572, %v4566
        %4584 = vst.msk [vmem:[%s263 + $0x58] sm:$0xff] %vm4572, %v4567
        %4585 = vst.msk [vmem:[%s263 + $0x60] sm:$0xff] %vm4572, %v4568
        %4586 = vst.msk [vmem:[%s263 + $0x68] sm:$0xff] %vm4572, %v4569
        %4587 = vst.msk [vmem:[%s263 + $0x70] sm:$0xff] %vm4572, %v4570
        %4588 = vst.msk [vmem:[%s263 + $0x78] sm:$0xff] %vm4572, %v4571
        %v4589 = vld [vmem:[#allocation3] sm:$0xff]
        %v4590 = vld [vmem:[#allocation3 + $0x8] sm:$0xff]
        %v4591 = vld [vmem:[#allocation3 + $0x10] sm:$0xff]
        %v4592 = vld [vmem:[#allocation3 + $0x18] sm:$0xff]
        %v4593 = vld [vmem:[#allocation3 + $0x20] sm:$0xff]
        %v4594 = vld [vmem:[#allocation3 + $0x28] sm:$0xff]
        %v4595 = vld [vmem:[#allocation3 + $0x30] sm:$0xff]
        %v4596 = vld [vmem:[#allocation3 + $0x38] sm:$0xff]
        %v4597 = vld [vmem:[#allocation3 + $0x40] sm:$0xff]
        %v4598 = vld [vmem:[#allocation3 + $0x48] sm:$0xff]
        %v4599 = vld [vmem:[#allocation3 + $0x50] sm:$0xff]
        %v4600 = vld [vmem:[#allocation3 + $0x58] sm:$0xff]
        %v4601 = vld [vmem:[#allocation3 + $0x60] sm:$0xff]
        %v4602 = vld [vmem:[#allocation3 + $0x68] sm:$0xff]
        %v4603 = vld [vmem:[#allocation3 + $0x70] sm:$0xff]
        %v4604 = vld [vmem:[#allocation3 + $0x78] sm:$0xff]
        %4605 = vst.msk [vmem:[%s269] sm:$0xff] %vm4408, %v4589
        %4606 = vst.msk [vmem:[%s269 + $0x8] sm:$0xff] %vm4408, %v4590
        %4607 = vst.msk [vmem:[%s269 + $0x10] sm:$0xff] %vm4408, %v4591
        %4608 = vst.msk [vmem:[%s269 + $0x18] sm:$0xff] %vm4408, %v4592
        %4609 = vst.msk [vmem:[%s269 + $0x20] sm:$0xff] %vm4408, %v4593
        %4610 = vst.msk [vmem:[%s269 + $0x28] sm:$0xff] %vm4408, %v4594
        %4611 = vst.msk [vmem:[%s269 + $0x30] sm:$0xff] %vm4408, %v4595
        %4612 = vst.msk [vmem:[%s269 + $0x38] sm:$0xff] %vm4408, %v4596
        %4613 = vst.msk [vmem:[%s269 + $0x40] sm:$0xff] %vm4408, %v4597
        %4614 = vst.msk [vmem:[%s269 + $0x48] sm:$0xff] %vm4408, %v4598
        %4615 = vst.msk [vmem:[%s269 + $0x50] sm:$0xff] %vm4408, %v4599
        %4616 = vst.msk [vmem:[%s269 + $0x58] sm:$0xff] %vm4408, %v4600
        %4617 = vst.msk [vmem:[%s269 + $0x60] sm:$0xff] %vm4408, %v4601
        %4618 = vst.msk [vmem:[%s269 + $0x68] sm:$0xff] %vm4408, %v4602
        %4619 = vst.msk [vmem:[%s269 + $0x70] sm:$0xff] %vm4408, %v4603
        %4620 = vst.msk [vmem:[%s269 + $0x78] sm:$0xff] %vm4408, %v4604
      $region40: #{tpu_custom_call.1} parent=31 // pred_fallthru
        _
      %s4621 = smul.u32 16, %s20
      %p4622 = scmp.lt.s32.totalorder %s4621, 127
      %s4623 = scalar_select %p4622, %s4621, 127
      %s4624 = smul.addr %s4623, 8
      %s4625 = scalar_lea.vmem %s3, %s4624
      %s4626 = smul.u32 16, %s20
      %p4627 = scmp.lt.s32.totalorder %s4626, 127
      %s4628 = scalar_select %p4627, %s4626, 127
      %s4629 = smul.addr %s4628, 8
      %s4630 = scalar_lea.vmem %s4, %s4629
      // Predicated region
      $region41: #{tpu_custom_call.1} parent=31 // pred_check
        %p4631 = pneg %p124
      $region42: #{tpu_custom_call.1} parent=31 // pred_check_branch
        %4633 = sbr.rel (%p4631) target = $region44
      $region43: #{tpu_custom_call.1} parent=31 // pred_region
        %s4634 = smul.u32 16, %s20
      $region44: #{tpu_custom_call.1} parent=31 // pred_fallthru
        _
      // Predicated region
      $region45: #{tpu_custom_call.1} parent=31 // pred_check
        %p4635 = pneg %p150
      $region46: #{tpu_custom_call.1} parent=31 // pred_check_branch
        %4637 = sbr.rel (%p4635) target = $region48
      $region47: #{tpu_custom_call.1} parent=31 // pred_region
        %s4638 = smul.u32 16, %s20
      $region48: #{tpu_custom_call.1} parent=31 // pred_fallthru
        _
    $region32: #{tpu_custom_call.1} parent=5 // pred_fallthru
      _
    %p4639 = scmp.le.s32.totalorder 2, %s11
    // Predicated region
    $region49: #{tpu_custom_call.1} parent=5 // pred_check
      %p4640 = pneg %p4639
    $region50: #{tpu_custom_call.1} parent=5 // pred_check_branch
      %4642 = sbr.rel (%p4640) target = $region52
    $region51: #{tpu_custom_call.1} parent=5 // pred_region
      %s4643 = ssub.s32 %s11, 2
      // Predicated region
      $region53: #{tpu_custom_call.1} parent=51 // pred_check
        %p4644 = pneg %p130
      $region54: #{tpu_custom_call.1} parent=51 // pred_check_branch
        %4646 = sbr.rel (%p4644) target = $region56
      $region55: #{tpu_custom_call.1} parent=51 // pred_region
        %s4647 = smul.u32 16, %s22
        %p4648 = scmp.lt.s32.totalorder %s4647, 127
        %s4649 = scalar_select %p4648, %s4647, 127
        %s4650 = smul.addr %s4649, 8
        %s4651 = scalar_lea.vmem %s3, %s4650
      $region56: #{tpu_custom_call.1} parent=51 // pred_fallthru
        _
      // Predicated region
      $region57: #{tpu_custom_call.1} parent=51 // pred_check
        %p4652 = pneg %p156
      $region58: #{tpu_custom_call.1} parent=51 // pred_check_branch
        %4654 = sbr.rel (%p4652) target = $region60
      $region59: #{tpu_custom_call.1} parent=51 // pred_region
        %s4655 = smul.u32 16, %s22
        %p4656 = scmp.lt.s32.totalorder %s4655, 127
        %s4657 = scalar_select %p4656, %s4655, 127
        %s4658 = smul.addr %s4657, 8
        %s4659 = scalar_lea.vmem %s4, %s4658
      $region60: #{tpu_custom_call.1} parent=51 // pred_fallthru
        _
    $region52: #{tpu_custom_call.1} parent=5 // pred_fallthru
      _
  $region6: #{tpu_custom_call.1} parent=0 // loop_footer
    %s15 = sadd.s32 1, %s11
  $region7: #{tpu_custom_call.1} parent=0 // loop_footer_branch
    %10 = sbr.rel target = $region3
  $region8: #{tpu_custom_call.1} parent=0 // loop_exit
    _

</llo_original>
